<compile_context>
chip_gen: v7x
topology: tpu7x:2x2x1
jax: 0.10.0
libtpu: 0.0.40
codegen_flags: <defaults>
</compile_context>

<pallas_src>
import functools

import jax
import jax.numpy as jnp
from jax import lax
from jax.experimental import pallas as pl
from jax.experimental.pallas import tpu as pltpu

EPS = 1e-5  # PyTorch InstanceNorm2d default eps (affine=False, no running stats)


# ----------------------------- kernel helpers ------------------------------

def _instance_norm_relu(z):
    """z: (C, S) f32. Per-channel InstanceNorm over flat spatial dim, then ReLU.

    Single reduction pass: sum and sum-of-squares together, var = E[x^2]-mean^2.
    """
    inv_n = 1.0 / z.shape[1]
    s1 = jnp.sum(z, axis=1, keepdims=True)
    s2 = jnp.sum(z * z, axis=1, keepdims=True)
    mean = s1 * inv_n
    var = jnp.maximum(s2 * inv_n - mean * mean, 0.0)
    return jnp.maximum((z - mean) * lax.rsqrt(var + EPS), 0.0)


def _depthwise3x3_flat(w9, y, h2, w2):
    """Depthwise 3x3 conv (stride 1, zero pad 1) on flat layout.

    w9: (C, 9) taps in (ky, kx) row-major order (bias folded out).
    y:  (C, S) f32 with S = h2 * w2 (row-major flattened H2 x W2).
    Shifts use pltpu.roll along lanes (XLU); zero padding is realized with
    iota-derived boundary masks; accumulation starts from real taps (no zeros).
    """
    _, s = y.shape
    lane = lax.broadcasted_iota(jnp.int32, (1, s), 1)
    col = lane % w2

    # column taps (dx = -1, +1): roll within the flat dim + within-row masks
    y_m1 = jnp.where(col >= 1, pltpu.roll(y, 1, axis=1), 0.0)            # y[s-1]
    y_p1 = jnp.where(col <= w2 - 2, pltpu.roll(y, s - 1, axis=1), 0.0)   # y[s+1]

    # combine the three column taps for each kernel row
    t0 = w9[:, 0:1] * y_m1 + w9[:, 1:2] * y + w9[:, 2:3] * y_p1   # ky=0 (dy=-1)
    t1 = w9[:, 3:4] * y_m1 + w9[:, 4:5] * y + w9[:, 5:6] * y_p1   # ky=1 (dy= 0)
    t2 = w9[:, 6:7] * y_m1 + w9[:, 7:8] * y + w9[:, 8:9] * y_p1   # ky=2 (dy=+1)

    # row taps (dy = -1, +1): roll by a full row + top/bottom masks
    top = jnp.where(lane >= w2, pltpu.roll(t0, w2, axis=1), 0.0)         # t0[s-w2]
    bot = jnp.where(lane < s - w2, pltpu.roll(t2, s - w2, axis=1), 0.0)  # t2[s+w2]
    return top + t1 + bot


# --------------------------------- kernel ----------------------------------

def up_kernel(x_ref, kt_ref,
              fw1_ref, fb1_ref,
              w2dw_ref, fw2_ref, fb2_ref,
              fw3_ref, fb3_ref,
              fws_ref, fbs_ref,
              o_ref, *, h2, w2):
    x = x_ref[0]                       # (Cin, H*W)  bf16, lane-dense
    kt = kt_ref[...]                   # (H*W, H2*W2) bf16 = kron(Ay, Ax)^T

    # Bilinear upsample (align_corners=True): one lane-dense MXU matmul.
    up = jnp.dot(x, kt, preferred_element_type=jnp.float32)      # (Cin, S2) f32
    up_bf = up.astype(jnp.bfloat16)

    # DSC1: (dw1x1 + pw1x1) folded -> IN -> ReLU
    y = jnp.dot(fw1_ref[...], up_bf,
                preferred_element_type=jnp.float32) + fb1_ref[...]
    y = _instance_norm_relu(y)                                    # (mid, S2)

    # DSC2: depthwise 3x3 (bias folded into fb2) -> pw 1x1 -> IN -> ReLU
    d = _depthwise3x3_flat(w2dw_ref[...], y, h2, w2)
    z = jnp.dot(fw2_ref[...], d.astype(jnp.bfloat16),
                preferred_element_type=jnp.float32) + fb2_ref[...]
    z = _instance_norm_relu(z)                                    # (mid, S2)

    # DSC3: (dw1x1 + pw1x1) folded -> IN -> ReLU
    u = jnp.dot(fw3_ref[...], z.astype(jnp.bfloat16),
                preferred_element_type=jnp.float32) + fb3_ref[...]
    u = _instance_norm_relu(u)                                    # (Cout, S2)

    # shortcut: (dw1x1 + pw1x1) folded -> IN -> ReLU
    s = jnp.dot(fws_ref[...], up_bf,
                preferred_element_type=jnp.float32) + fbs_ref[...]
    s = _instance_norm_relu(s)                                    # (Cout, S2)

    o_ref[0] = (u + s).astype(o_ref.dtype)


# --------------------------------- wrapper ----------------------------------

def make_interp_matrix(out_size, in_size, dtype=jnp.float32):
    """Row-stochastic A (out, in) s.t. A @ v == bilinear(align_corners) upsample."""
    if in_size == 1:
        return jnp.ones((out_size, 1), dtype)
    src = jnp.arange(out_size, dtype=jnp.float32) * (in_size - 1) / (out_size - 1)
    low = jnp.clip(jnp.floor(src).astype(jnp.int32), 0, in_size - 2)
    frac = src - low.astype(jnp.float32)
    rows = jnp.arange(out_size)
    a = jnp.zeros((out_size, in_size), jnp.float32)
    a = a.at[rows, low].add(1.0 - frac)
    a = a.at[rows, low + 1].add(frac)
    return a.astype(dtype)


def init_params(key, in_channels, out_channels):
    mid = in_channels // 4

    def nrm(k, shape, scale=0.5):
        return scale * jax.random.normal(k, shape, jnp.float32)

    ks = jax.random.split(key, 16)
    return dict(
        dw1_w=nrm(ks[0], (in_channels, 1, 1)),
        dw1_b=nrm(ks[1], (in_channels, 1, 1), 0.1),
        pw1_w=nrm(ks[2], (mid, in_channels)),
        pw1_b=nrm(ks[3], (mid, 1, 1), 0.1),
        dw2_w=nrm(ks[4], (mid, 3, 3)),
        dw2_b=nrm(ks[5], (mid, 1, 1), 0.1),
        pw2_w=nrm(ks[6], (mid, mid)),
        pw2_b=nrm(ks[7], (mid, 1, 1), 0.1),
        dw3_w=nrm(ks[8], (mid, 1, 1)),
        dw3_b=nrm(ks[9], (mid, 1, 1), 0.1),
        pw3_w=nrm(ks[10], (out_channels, mid)),
        pw3_b=nrm(ks[11], (out_channels, 1, 1), 0.1),
        dws_w=nrm(ks[12], (in_channels, 1, 1)),
        dws_b=nrm(ks[13], (in_channels, 1, 1), 0.1),
        pws_w=nrm(ks[14], (out_channels, in_channels)),
        pws_b=nrm(ks[15], (out_channels, 1, 1), 0.1),
    )


def _fold_dw_pw(dw_w, dw_b, pw_w, pw_b):
    """Fold 1x1-depthwise (per-channel a,b) followed by 1x1-pointwise (W,c):
       W @ (a*x + b) + c == (W * a^T) @ x + (W @ b + c)."""
    a = dw_w.reshape(-1)
    b = dw_b.reshape(-1)
    c = pw_b.reshape(-1)
    w_f = (pw_w * a[None, :]).astype(jnp.bfloat16)
    b_f = (pw_w @ b + c).reshape(-1, 1).astype(jnp.float32)
    return w_f, b_f


@functools.partial(jax.jit, static_argnames=("out_channels",))
def up_forward(x, params, out_channels):
    n, cin, h, w = x.shape
    mid = cin // 4
    h2, w2 = 2 * h, 2 * w
    hw, s2 = h * w, h2 * w2

    # Bilinear-upsample matrix, combined over both spatial axes:
    #   kT[p*w+q, i*w2+j] = Ay[i,p] * Ax[j,q]       (bf16 MXU operand)
    ay = make_interp_matrix(h2, h)
    ax = make_interp_matrix(w2, w)
    kt = jnp.einsum("ip,jq->pqij", ay, ax).reshape(hw, s2).astype(jnp.bfloat16)

    # Fold the three (1x1-dw + 1x1-pw) pairs; fold the 3x3-dw bias into pw2.
    fw1, fb1 = _fold_dw_pw(params["dw1_w"], params["dw1_b"],
                           params["pw1_w"], params["pw1_b"])
    fw3, fb3 = _fold_dw_pw(params["dw3_w"], params["dw3_b"],
                           params["pw3_w"], params["pw3_b"])
    fws, fbs = _fold_dw_pw(params["dws_w"], params["dws_b"],
                           params["pws_w"], params["pws_b"])
    w2dw = params["dw2_w"].reshape(mid, 9).astype(jnp.float32)
    fw2 = params["pw2_w"].astype(jnp.bfloat16)
    fb2 = (params["pw2_w"] @ params["dw2_b"].reshape(mid)
           + params["pw2_b"].reshape(mid)).reshape(mid, 1).astype(jnp.float32)

    # Lane-dense input layout: flatten spatial dims in the wrapper (free in XLA)
    # and feed the MXU with bf16.
    x_flat = x.reshape(n, cin, hw).astype(jnp.bfloat16)

    args = [x_flat, kt, fw1, fb1, w2dw, fw2, fb2, fw3, fb3, fws, fbs]

    def const_spec(a):
        return pl.BlockSpec(a.shape, lambda i, _nd=a.ndim: (0,) * _nd)

    in_specs = ([pl.BlockSpec((1, cin, hw), lambda i: (i, 0, 0))]
                + [const_spec(a) for a in args[1:]])
    # Lane-dense output: (N, Cout, H2*W2); reshaped to NCHW in the wrapper.
    out_spec = pl.BlockSpec((1, out_channels, s2), lambda i: (i, 0, 0))

    # Explicit VMEM budget (intermediates + double-buffered I/O + constants),
    # clamped well inside v7x's 64 MiB physical VMEM.
    interm = 4 * s2 * (cin + 3 * mid + 2 * out_channels) * 2
    blocks = 2 * (cin * hw * 2 + out_channels * s2 * x.dtype.itemsize)
    consts = hw * s2 * 2 + 16 * 1024
    vmem_limit = int(min(32 * 2 ** 20, max(8 * 2 ** 20, 4 * (interm + blocks + consts))))

    kernel = functools.partial(up_kernel, h2=h2, w2=w2)

    out_flat = pl.pallas_call(
        kernel,
        out_shape=jax.ShapeDtypeStruct((n, out_channels, s2), x.dtype),
        grid_spec=pltpu.PrefetchScalarGridSpec(
            num_scalar_prefetch=0,
            grid=(n,),                       # keep N even to feed both v7x TCs
            in_specs=in_specs,
            out_specs=out_spec,
        ),
        compiler_params=pltpu.CompilerParams(
            dimension_semantics=("parallel",),
            vmem_limit_bytes=vmem_limit,
        ),
    )(*args)
    return out_flat.reshape(n, out_channels, h2, w2)


# ------------------------- plain-JAX reference check ------------------------

def up_reference(x, params, out_channels):
    n, cin, h, w = x.shape
    h2, w2 = 2 * h, 2 * w
    ay = make_interp_matrix(h2, h)
    ax = make_interp_matrix(w2, w)
    up = jnp.einsum('ip,ncpq,jq->ncij', ay, x.astype(jnp.float32), ax)

    def inr(z):
        mean = jnp.mean(z, axis=(2, 3), keepdims=True)
        var = jnp.mean((z - mean) ** 2, axis=(2, 3), keepdims=True)
        return jnp.maximum((z - mean) * lax.rsqrt(var + EPS), 0.0)

    def pw(wt, b, y):
        return jnp.einsum('oc,nchw->nohw', wt, y) + b[None]

    p = params
    y = up * p["dw1_w"][None] + p["dw1_b"][None]
    y = inr(pw(p["pw1_w"], p["pw1_b"], y))
    yp = jnp.pad(y, ((0, 0), (0, 0), (1, 1), (1, 1)))
    acc = jnp.zeros_like(y)
    for ky in range(3):
        for kx in range(3):
            acc = acc + (p["dw2_w"][None, :, ky:ky + 1, kx:kx + 1]
                         * yp[:, :, ky:ky + h2, kx:kx + w2])
    z = inr(pw(p["pw2_w"], p["pw2_b"], acc + p["dw2_b"][None]))
    u = z * p["dw3_w"][None] + p["dw3_b"][None]
    u = inr(pw(p["pw3_w"], p["pw3_b"], u))
    s = up * p["dws_w"][None] + p["dws_b"][None]
    s = inr(pw(p["pws_w"], p["pws_b"], s))
    return (u + s).astype(x.dtype)


if __name__ == "__main__":
    key = jax.random.PRNGKey(0)
    kx, kp = jax.random.split(key)
    N, CIN, H, W = 2, 8, 16, 16     # in_channels=8 -> mid=2
    COUT = 4
    x = jax.random.normal(kx, (N, CIN, H, W), jnp.float32)
    params = init_params(kp, CIN, COUT)

    out = jax.block_until_ready(up_forward(x, params, COUT))
    assert out.shape == (N, COUT, 2 * H, 2 * W)
    assert bool(jnp.all(jnp.isfinite(out)))

    # Reference is pure f32; the kernel feeds the MXU bf16 inputs (f32 accumulate),
    # so compare with tolerances sized for bf16 while still catching structural
    # bugs (wrong rolls/masks/layout produce O(1) errors on many elements).
    ref = up_reference(x, params, COUT)
    err = jnp.abs(out - ref)
    rel = err / jnp.maximum(jnp.abs(ref), 1.0)
    assert float(jnp.mean(err)) < 6e-2, "mean error too large vs reference"
    assert float(jnp.max(rel)) < 3.5e-1, "max error too large vs reference"
    print("KERNEL_OK")
</pallas_src>

<mosaic_0001>
module attributes {stable_mosaic.version = 11 : i64} {
  func.func private @main(%arg0: i32) attributes {dimension_semantics = [#tpu.dimension_semantics<core_parallel>], iteration_bounds = array<i64: 2>, tpu.core_type = #tpu.core_type<sc_scalar_subcore>, window_params = []} {
    return
  }
}

module attributes {stable_mosaic.version = 11 : i64} {
  func.func private @main(%arg0: i32) attributes {dimension_semantics = [#tpu.dimension_semantics<core_parallel>], iteration_bounds = array<i64: 2>, tpu.core_type = #tpu.core_type<sc_scalar_subcore>, window_params = []} {
    return
  }
}

module attributes {stable_mosaic.version = 11 : i64} {
  func.func @up_kernel(%arg0: i32, %arg1: memref<1x8x256xbf16, #tpu.memory_space<vmem>>, %arg2: memref<256x1024xbf16, #tpu.memory_space<vmem>>, %arg3: memref<2x8xbf16, #tpu.memory_space<vmem>>, %arg4: memref<2x1xf32, #tpu.memory_space<vmem>>, %arg5: memref<2x9xf32, #tpu.memory_space<vmem>>, %arg6: memref<2x2xbf16, #tpu.memory_space<vmem>>, %arg7: memref<2x1xf32, #tpu.memory_space<vmem>>, %arg8: memref<4x2xbf16, #tpu.memory_space<vmem>>, %arg9: memref<4x1xf32, #tpu.memory_space<vmem>>, %arg10: memref<4x8xbf16, #tpu.memory_space<vmem>>, %arg11: memref<4x1xf32, #tpu.memory_space<vmem>>, %arg12: memref<1x4x1024xf32, #tpu.memory_space<vmem>>) attributes {dimension_semantics = [#tpu.dimension_semantics<parallel>], iteration_bounds = array<i64: 2>, scalar_prefetch = 0 : i64, scratch_operands = 0 : i64, tpu.core_type = #tpu.core_type<tc>, window_params = [{transform_indices = @transform_0, window_bounds = array<i64: 1, 8, 256>}, {pipeline_mode = #tpu.pipeline_mode<synchronous>, transform_indices = @transform_1, window_bounds = array<i64: 256, 1024>}, {pipeline_mode = #tpu.pipeline_mode<synchronous>, transform_indices = @transform_2, window_bounds = array<i64: 2, 8>}, {pipeline_mode = #tpu.pipeline_mode<synchronous>, transform_indices = @transform_3, window_bounds = array<i64: 2, 1>}, {pipeline_mode = #tpu.pipeline_mode<synchronous>, transform_indices = @transform_4, window_bounds = array<i64: 2, 9>}, {pipeline_mode = #tpu.pipeline_mode<synchronous>, transform_indices = @transform_5, window_bounds = array<i64: 2, 2>}, {pipeline_mode = #tpu.pipeline_mode<synchronous>, transform_indices = @transform_6, window_bounds = array<i64: 2, 1>}, {pipeline_mode = #tpu.pipeline_mode<synchronous>, transform_indices = @transform_7, window_bounds = array<i64: 4, 2>}, {pipeline_mode = #tpu.pipeline_mode<synchronous>, transform_indices = @transform_8, window_bounds = array<i64: 4, 1>}, {pipeline_mode = #tpu.pipeline_mode<synchronous>, transform_indices = @transform_9, window_bounds = array<i64: 4, 8>}, {pipeline_mode = #tpu.pipeline_mode<synchronous>, transform_indices = @transform_10, window_bounds = array<i64: 4, 1>}, {transform_indices = @transform_11, window_bounds = array<i64: 1, 4, 1024>}]} {
    %c0 = arith.constant 0 : index
    %c0_0 = arith.constant 0 : index
    %c0_1 = arith.constant 0 : index
    %0 = vector.load %arg1[%c0, %c0_0, %c0_1] : memref<1x8x256xbf16, #tpu.memory_space<vmem>>, vector<1x8x256xbf16>
    %1 = vector.shape_cast %0 : vector<1x8x256xbf16> to vector<8x256xbf16>
    %c0_2 = arith.constant 0 : index
    %c0_3 = arith.constant 0 : index
    %2 = vector.load %arg2[%c0_2, %c0_3] : memref<256x1024xbf16, #tpu.memory_space<vmem>>, vector<256x1024xbf16>
    %cst = arith.constant dense<0.000000e+00> : vector<8x1024xf32>
    %3 = tpu.matmul %1, %2, %cst {dimension_numbers = #tpu.dot_dimension_numbers<[1], [0], [0], [1], [0, 0, 1, 1], [], []>} : vector<8x256xbf16>, vector<256x1024xbf16>, vector<8x1024xf32> -> vector<8x1024xf32>
    %4 = arith.truncf %3 : vector<8x1024xf32> to vector<8x1024xbf16>
    %c0_4 = arith.constant 0 : index
    %c0_5 = arith.constant 0 : index
    %5 = vector.load %arg3[%c0_4, %c0_5] : memref<2x8xbf16, #tpu.memory_space<vmem>>, vector<2x8xbf16>
    %cst_6 = arith.constant dense<0.000000e+00> : vector<2x1024xf32>
    %6 = tpu.matmul %5, %4, %cst_6 {dimension_numbers = #tpu.dot_dimension_numbers<[1], [0], [0], [1], [0, 0, 1, 1], [], []>} : vector<2x8xbf16>, vector<8x1024xbf16>, vector<2x1024xf32> -> vector<2x1024xf32>
    %c0_7 = arith.constant 0 : index
    %c0_8 = arith.constant 0 : index
    %7 = vector.load %arg4[%c0_7, %c0_8] : memref<2x1xf32, #tpu.memory_space<vmem>>, vector<2x1xf32>
    %8 = vector.broadcast %7 : vector<2x1xf32> to vector<2x1024xf32>
    %9 = arith.addf %6, %8 : vector<2x1024xf32>
    %cst_9 = arith.constant dense<0.000000e+00> : vector<2xf32>
    %10 = vector.multi_reduction <add>, %9, %cst_9 [1] : vector<2x1024xf32> to vector<2xf32>
    %11 = vector.shape_cast %10 : vector<2xf32> to vector<2x1xf32>
    %12 = arith.mulf %9, %9 : vector<2x1024xf32>
    %cst_10 = arith.constant dense<0.000000e+00> : vector<2xf32>
    %13 = vector.multi_reduction <add>, %12, %cst_10 [1] : vector<2x1024xf32> to vector<2xf32>
    %14 = vector.shape_cast %13 : vector<2xf32> to vector<2x1xf32>
    %cst_11 = arith.constant 9.765625E-4 : f32
    %15 = vector.broadcast %cst_11 : f32 to vector<2x1xf32>
    %16 = arith.mulf %11, %15 : vector<2x1xf32>
    %cst_12 = arith.constant 9.765625E-4 : f32
    %17 = vector.broadcast %cst_12 : f32 to vector<2x1xf32>
    %18 = arith.mulf %14, %17 : vector<2x1xf32>
    %19 = arith.mulf %16, %16 : vector<2x1xf32>
    %20 = arith.subf %18, %19 : vector<2x1xf32>
    %cst_13 = arith.constant 0.000000e+00 : f32
    %21 = vector.broadcast %cst_13 : f32 to vector<2x1xf32>
    %22 = arith.maximumf %20, %21 : vector<2x1xf32>
    %23 = vector.broadcast %16 : vector<2x1xf32> to vector<2x1024xf32>
    %24 = arith.subf %9, %23 : vector<2x1024xf32>
    %cst_14 = arith.constant 9.99999974E-6 : f32
    %25 = vector.broadcast %cst_14 : f32 to vector<2x1xf32>
    %26 = arith.addf %22, %25 : vector<2x1xf32>
    %27 = math.rsqrt %26 : vector<2x1xf32>
    %28 = vector.broadcast %27 : vector<2x1xf32> to vector<2x1024xf32>
    %29 = arith.mulf %24, %28 : vector<2x1024xf32>
    %cst_15 = arith.constant 0.000000e+00 : f32
    %30 = vector.broadcast %cst_15 : f32 to vector<2x1024xf32>
    %31 = arith.maximumf %29, %30 : vector<2x1024xf32>
    %c0_16 = arith.constant 0 : index
    %c0_17 = arith.constant 0 : index
    %32 = vector.load %arg5[%c0_16, %c0_17] : memref<2x9xf32, #tpu.memory_space<vmem>>, vector<2x9xf32>
    %33 = tpu.iota {dimensions = array<i32: 1>} : vector<1x1024xi32>
    %c32_i32 = arith.constant 32 : i32
    %c0_i32 = arith.constant 0 : i32
    %34 = arith.cmpi eq, %c32_i32, %c0_i32 : i32
    %c1_i32 = arith.constant 1 : i32
    %35 = arith.select %34, %c1_i32, %c32_i32 : i32
    %36 = vector.broadcast %35 : i32 to vector<1x1024xi32>
    %37 = arith.remsi %33, %36 : vector<1x1024xi32>
    %c0_i32_18 = arith.constant 0 : i32
    %38 = vector.broadcast %c0_i32_18 : i32 to vector<1x1024xi32>
    %39 = arith.cmpi ne, %37, %38 : vector<1x1024xi32>
    %c0_i32_19 = arith.constant 0 : i32
    %40 = vector.broadcast %c0_i32_19 : i32 to vector<1x1024xi32>
    %41 = arith.cmpi slt, %37, %40 : vector<1x1024xi32>
    %c0_i32_20 = arith.constant 0 : i32
    %42 = arith.cmpi slt, %35, %c0_i32_20 : i32
    %43 = vector.broadcast %42 : i1 to vector<1x1024xi1>
    %44 = vector.broadcast %43 : vector<1x1024xi1> to vector<1x1024xi1>
    %45 = arith.xori %41, %44 : vector<1x1024xi1>
    %46 = arith.andi %45, %39 : vector<1x1024xi1>
    %47 = vector.broadcast %35 : i32 to vector<1x1024xi32>
    %48 = arith.addi %37, %47 : vector<1x1024xi32>
    %49 = arith.select %46, %48, %37 : vector<1x1024xi1>, vector<1x1024xi32>
    %c1_i32_21 = arith.constant 1 : i32
    %50 = vector.broadcast %c1_i32_21 : i32 to vector<1x1024xi32>
    %51 = arith.cmpi sge, %49, %50 : vector<1x1024xi32>
    %c1_i32_22 = arith.constant 1 : i32
    %52 = tpu.dynamic_rotate %31 by %c1_i32_22 dim 1 : vector<2x1024xf32>, i32 -> vector<2x1024xf32>
    %cst_23 = arith.constant 0.000000e+00 : f32
    %53 = vector.shape_cast %51 : vector<1x1024xi1> to vector<1x1024xi1>
    %54 = vector.broadcast %53 : vector<1x1024xi1> to vector<2x1024xi1>
    %55 = vector.broadcast %cst_23 : f32 to vector<2x1024xf32>
    %56 = arith.select %54, %52, %55 : vector<2x1024xi1>, vector<2x1024xf32>
    %c30_i32 = arith.constant 30 : i32
    %57 = vector.broadcast %c30_i32 : i32 to vector<1x1024xi32>
    %58 = arith.cmpi sle, %49, %57 : vector<1x1024xi32>
    %c1023_i32 = arith.constant 1023 : i32
    %59 = tpu.dynamic_rotate %31 by %c1023_i32 dim 1 : vector<2x1024xf32>, i32 -> vector<2x1024xf32>
    %cst_24 = arith.constant 0.000000e+00 : f32
    %60 = vector.shape_cast %58 : vector<1x1024xi1> to vector<1x1024xi1>
    %61 = vector.broadcast %60 : vector<1x1024xi1> to vector<2x1024xi1>
    %62 = vector.broadcast %cst_24 : f32 to vector<2x1024xf32>
    %63 = arith.select %61, %59, %62 : vector<2x1024xi1>, vector<2x1024xf32>
    %64 = vector.extract_strided_slice %32 {offsets = [0, 0], sizes = [2, 1], strides = [1, 1]} : vector<2x9xf32> to vector<2x1xf32>
    %65 = vector.broadcast %64 : vector<2x1xf32> to vector<2x1024xf32>
    %66 = arith.mulf %65, %56 : vector<2x1024xf32>
    %67 = vector.extract_strided_slice %32 {offsets = [0, 1], sizes = [2, 1], strides = [1, 1]} : vector<2x9xf32> to vector<2x1xf32>
    %68 = vector.broadcast %67 : vector<2x1xf32> to vector<2x1024xf32>
    %69 = arith.mulf %68, %31 : vector<2x1024xf32>
    %70 = arith.addf %66, %69 : vector<2x1024xf32>
    %71 = vector.extract_strided_slice %32 {offsets = [0, 2], sizes = [2, 1], strides = [1, 1]} : vector<2x9xf32> to vector<2x1xf32>
    %72 = vector.broadcast %71 : vector<2x1xf32> to vector<2x1024xf32>
    %73 = arith.mulf %72, %63 : vector<2x1024xf32>
    %74 = arith.addf %70, %73 : vector<2x1024xf32>
    %75 = vector.extract_strided_slice %32 {offsets = [0, 3], sizes = [2, 1], strides = [1, 1]} : vector<2x9xf32> to vector<2x1xf32>
    %76 = vector.broadcast %75 : vector<2x1xf32> to vector<2x1024xf32>
    %77 = arith.mulf %76, %56 : vector<2x1024xf32>
    %78 = vector.extract_strided_slice %32 {offsets = [0, 4], sizes = [2, 1], strides = [1, 1]} : vector<2x9xf32> to vector<2x1xf32>
    %79 = vector.broadcast %78 : vector<2x1xf32> to vector<2x1024xf32>
    %80 = arith.mulf %79, %31 : vector<2x1024xf32>
    %81 = arith.addf %77, %80 : vector<2x1024xf32>
    %82 = vector.extract_strided_slice %32 {offsets = [0, 5], sizes = [2, 1], strides = [1, 1]} : vector<2x9xf32> to vector<2x1xf32>
    %83 = vector.broadcast %82 : vector<2x1xf32> to vector<2x1024xf32>
    %84 = arith.mulf %83, %63 : vector<2x1024xf32>
    %85 = arith.addf %81, %84 : vector<2x1024xf32>
    %86 = vector.extract_strided_slice %32 {offsets = [0, 6], sizes = [2, 1], strides = [1, 1]} : vector<2x9xf32> to vector<2x1xf32>
    %87 = vector.broadcast %86 : vector<2x1xf32> to vector<2x1024xf32>
    %88 = arith.mulf %87, %56 : vector<2x1024xf32>
    %89 = vector.extract_strided_slice %32 {offsets = [0, 7], sizes = [2, 1], strides = [1, 1]} : vector<2x9xf32> to vector<2x1xf32>
    %90 = vector.broadcast %89 : vector<2x1xf32> to vector<2x1024xf32>
    %91 = arith.mulf %90, %31 : vector<2x1024xf32>
    %92 = arith.addf %88, %91 : vector<2x1024xf32>
    %93 = vector.extract_strided_slice %32 {offsets = [0, 8], sizes = [2, 1], strides = [1, 1]} : vector<2x9xf32> to vector<2x1xf32>
    %94 = vector.broadcast %93 : vector<2x1xf32> to vector<2x1024xf32>
    %95 = arith.mulf %94, %63 : vector<2x1024xf32>
    %96 = arith.addf %92, %95 : vector<2x1024xf32>
    %c32_i32_25 = arith.constant 32 : i32
    %97 = vector.broadcast %c32_i32_25 : i32 to vector<1x1024xi32>
    %98 = arith.cmpi sge, %33, %97 : vector<1x1024xi32>
    %c32_i32_26 = arith.constant 32 : i32
    %99 = tpu.dynamic_rotate %74 by %c32_i32_26 dim 1 : vector<2x1024xf32>, i32 -> vector<2x1024xf32>
    %cst_27 = arith.constant 0.000000e+00 : f32
    %100 = vector.shape_cast %98 : vector<1x1024xi1> to vector<1x1024xi1>
    %101 = vector.broadcast %100 : vector<1x1024xi1> to vector<2x1024xi1>
    %102 = vector.broadcast %cst_27 : f32 to vector<2x1024xf32>
    %103 = arith.select %101, %99, %102 : vector<2x1024xi1>, vector<2x1024xf32>
    %c992_i32 = arith.constant 992 : i32
    %104 = vector.broadcast %c992_i32 : i32 to vector<1x1024xi32>
    %105 = arith.cmpi slt, %33, %104 : vector<1x1024xi32>
    %c992_i32_28 = arith.constant 992 : i32
    %106 = tpu.dynamic_rotate %96 by %c992_i32_28 dim 1 : vector<2x1024xf32>, i32 -> vector<2x1024xf32>
    %cst_29 = arith.constant 0.000000e+00 : f32
    %107 = vector.shape_cast %105 : vector<1x1024xi1> to vector<1x1024xi1>
    %108 = vector.broadcast %107 : vector<1x1024xi1> to vector<2x1024xi1>
    %109 = vector.broadcast %cst_29 : f32 to vector<2x1024xf32>
    %110 = arith.select %108, %106, %109 : vector<2x1024xi1>, vector<2x1024xf32>
    %111 = arith.addf %103, %85 : vector<2x1024xf32>
    %112 = arith.addf %111, %110 : vector<2x1024xf32>
    %c0_30 = arith.constant 0 : index
    %c0_31 = arith.constant 0 : index
    %113 = vector.load %arg6[%c0_30, %c0_31] : memref<2x2xbf16, #tpu.memory_space<vmem>>, vector<2x2xbf16>
    %114 = arith.truncf %112 : vector<2x1024xf32> to vector<2x1024xbf16>
    %cst_32 = arith.constant dense<0.000000e+00> : vector<2x1024xf32>
    %115 = tpu.matmul %113, %114, %cst_32 {dimension_numbers = #tpu.dot_dimension_numbers<[1], [0], [0], [1], [0, 0, 1, 1], [], []>} : vector<2x2xbf16>, vector<2x1024xbf16>, vector<2x1024xf32> -> vector<2x1024xf32>
    %c0_33 = arith.constant 0 : index
    %c0_34 = arith.constant 0 : index
    %116 = vector.load %arg7[%c0_33, %c0_34] : memref<2x1xf32, #tpu.memory_space<vmem>>, vector<2x1xf32>
    %117 = vector.broadcast %116 : vector<2x1xf32> to vector<2x1024xf32>
    %118 = arith.addf %115, %117 : vector<2x1024xf32>
    %cst_35 = arith.constant dense<0.000000e+00> : vector<2xf32>
    %119 = vector.multi_reduction <add>, %118, %cst_35 [1] : vector<2x1024xf32> to vector<2xf32>
    %120 = vector.shape_cast %119 : vector<2xf32> to vector<2x1xf32>
    %121 = arith.mulf %118, %118 : vector<2x1024xf32>
    %cst_36 = arith.constant dense<0.000000e+00> : vector<2xf32>
    %122 = vector.multi_reduction <add>, %121, %cst_36 [1] : vector<2x1024xf32> to vector<2xf32>
    %123 = vector.shape_cast %122 : vector<2xf32> to vector<2x1xf32>
    %cst_37 = arith.constant 9.765625E-4 : f32
    %124 = vector.broadcast %cst_37 : f32 to vector<2x1xf32>
    %125 = arith.mulf %120, %124 : vector<2x1xf32>
    %cst_38 = arith.constant 9.765625E-4 : f32
    %126 = vector.broadcast %cst_38 : f32 to vector<2x1xf32>
    %127 = arith.mulf %123, %126 : vector<2x1xf32>
    %128 = arith.mulf %125, %125 : vector<2x1xf32>
    %129 = arith.subf %127, %128 : vector<2x1xf32>
    %cst_39 = arith.constant 0.000000e+00 : f32
    %130 = vector.broadcast %cst_39 : f32 to vector<2x1xf32>
    %131 = arith.maximumf %129, %130 : vector<2x1xf32>
    %132 = vector.broadcast %125 : vector<2x1xf32> to vector<2x1024xf32>
    %133 = arith.subf %118, %132 : vector<2x1024xf32>
    %cst_40 = arith.constant 9.99999974E-6 : f32
    %134 = vector.broadcast %cst_40 : f32 to vector<2x1xf32>
    %135 = arith.addf %131, %134 : vector<2x1xf32>
    %136 = math.rsqrt %135 : vector<2x1xf32>
    %137 = vector.broadcast %136 : vector<2x1xf32> to vector<2x1024xf32>
    %138 = arith.mulf %133, %137 : vector<2x1024xf32>
    %cst_41 = arith.constant 0.000000e+00 : f32
    %139 = vector.broadcast %cst_41 : f32 to vector<2x1024xf32>
    %140 = arith.maximumf %138, %139 : vector<2x1024xf32>
    %c0_42 = arith.constant 0 : index
    %c0_43 = arith.constant 0 : index
    %141 = vector.load %arg8[%c0_42, %c0_43] : memref<4x2xbf16, #tpu.memory_space<vmem>>, vector<4x2xbf16>
    %142 = arith.truncf %140 : vector<2x1024xf32> to vector<2x1024xbf16>
    %cst_44 = arith.constant dense<0.000000e+00> : vector<4x1024xf32>
    %143 = tpu.matmul %141, %142, %cst_44 {dimension_numbers = #tpu.dot_dimension_numbers<[1], [0], [0], [1], [0, 0, 1, 1], [], []>} : vector<4x2xbf16>, vector<2x1024xbf16>, vector<4x1024xf32> -> vector<4x1024xf32>
    %c0_45 = arith.constant 0 : index
    %c0_46 = arith.constant 0 : index
    %144 = vector.load %arg9[%c0_45, %c0_46] : memref<4x1xf32, #tpu.memory_space<vmem>>, vector<4x1xf32>
    %145 = vector.broadcast %144 : vector<4x1xf32> to vector<4x1024xf32>
    %146 = arith.addf %143, %145 : vector<4x1024xf32>
    %cst_47 = arith.constant dense<0.000000e+00> : vector<4xf32>
    %147 = vector.multi_reduction <add>, %146, %cst_47 [1] : vector<4x1024xf32> to vector<4xf32>
    %148 = vector.shape_cast %147 : vector<4xf32> to vector<4x1xf32>
    %149 = arith.mulf %146, %146 : vector<4x1024xf32>
    %cst_48 = arith.constant dense<0.000000e+00> : vector<4xf32>
    %150 = vector.multi_reduction <add>, %149, %cst_48 [1] : vector<4x1024xf32> to vector<4xf32>
    %151 = vector.shape_cast %150 : vector<4xf32> to vector<4x1xf32>
    %cst_49 = arith.constant 9.765625E-4 : f32
    %152 = vector.broadcast %cst_49 : f32 to vector<4x1xf32>
    %153 = arith.mulf %148, %152 : vector<4x1xf32>
    %cst_50 = arith.constant 9.765625E-4 : f32
    %154 = vector.broadcast %cst_50 : f32 to vector<4x1xf32>
    %155 = arith.mulf %151, %154 : vector<4x1xf32>
    %156 = arith.mulf %153, %153 : vector<4x1xf32>
    %157 = arith.subf %155, %156 : vector<4x1xf32>
    %cst_51 = arith.constant 0.000000e+00 : f32
    %158 = vector.broadcast %cst_51 : f32 to vector<4x1xf32>
    %159 = arith.maximumf %157, %158 : vector<4x1xf32>
    %160 = vector.broadcast %153 : vector<4x1xf32> to vector<4x1024xf32>
    %161 = arith.subf %146, %160 : vector<4x1024xf32>
    %cst_52 = arith.constant 9.99999974E-6 : f32
    %162 = vector.broadcast %cst_52 : f32 to vector<4x1xf32>
    %163 = arith.addf %159, %162 : vector<4x1xf32>
    %164 = math.rsqrt %163 : vector<4x1xf32>
    %165 = vector.broadcast %164 : vector<4x1xf32> to vector<4x1024xf32>
    %166 = arith.mulf %161, %165 : vector<4x1024xf32>
    %cst_53 = arith.constant 0.000000e+00 : f32
    %167 = vector.broadcast %cst_53 : f32 to vector<4x1024xf32>
    %168 = arith.maximumf %166, %167 : vector<4x1024xf32>
    %c0_54 = arith.constant 0 : index
    %c0_55 = arith.constant 0 : index
    %169 = vector.load %arg10[%c0_54, %c0_55] : memref<4x8xbf16, #tpu.memory_space<vmem>>, vector<4x8xbf16>
    %cst_56 = arith.constant dense<0.000000e+00> : vector<4x1024xf32>
    %170 = tpu.matmul %169, %4, %cst_56 {dimension_numbers = #tpu.dot_dimension_numbers<[1], [0], [0], [1], [0, 0, 1, 1], [], []>} : vector<4x8xbf16>, vector<8x1024xbf16>, vector<4x1024xf32> -> vector<4x1024xf32>
    %c0_57 = arith.constant 0 : index
    %c0_58 = arith.constant 0 : index
    %171 = vector.load %arg11[%c0_57, %c0_58] : memref<4x1xf32, #tpu.memory_space<vmem>>, vector<4x1xf32>
    %172 = vector.broadcast %171 : vector<4x1xf32> to vector<4x1024xf32>
    %173 = arith.addf %170, %172 : vector<4x1024xf32>
    %cst_59 = arith.constant dense<0.000000e+00> : vector<4xf32>
    %174 = vector.multi_reduction <add>, %173, %cst_59 [1] : vector<4x1024xf32> to vector<4xf32>
    %175 = vector.shape_cast %174 : vector<4xf32> to vector<4x1xf32>
    %176 = arith.mulf %173, %173 : vector<4x1024xf32>
    %cst_60 = arith.constant dense<0.000000e+00> : vector<4xf32>
    %177 = vector.multi_reduction <add>, %176, %cst_60 [1] : vector<4x1024xf32> to vector<4xf32>
    %178 = vector.shape_cast %177 : vector<4xf32> to vector<4x1xf32>
    %cst_61 = arith.constant 9.765625E-4 : f32
    %179 = vector.broadcast %cst_61 : f32 to vector<4x1xf32>
    %180 = arith.mulf %175, %179 : vector<4x1xf32>
    %cst_62 = arith.constant 9.765625E-4 : f32
    %181 = vector.broadcast %cst_62 : f32 to vector<4x1xf32>
    %182 = arith.mulf %178, %181 : vector<4x1xf32>
    %183 = arith.mulf %180, %180 : vector<4x1xf32>
    %184 = arith.subf %182, %183 : vector<4x1xf32>
    %cst_63 = arith.constant 0.000000e+00 : f32
    %185 = vector.broadcast %cst_63 : f32 to vector<4x1xf32>
    %186 = arith.maximumf %184, %185 : vector<4x1xf32>
    %187 = vector.broadcast %180 : vector<4x1xf32> to vector<4x1024xf32>
    %188 = arith.subf %173, %187 : vector<4x1024xf32>
    %cst_64 = arith.constant 9.99999974E-6 : f32
    %189 = vector.broadcast %cst_64 : f32 to vector<4x1xf32>
    %190 = arith.addf %186, %189 : vector<4x1xf32>
    %191 = math.rsqrt %190 : vector<4x1xf32>
    %192 = vector.broadcast %191 : vector<4x1xf32> to vector<4x1024xf32>
    %193 = arith.mulf %188, %192 : vector<4x1024xf32>
    %cst_65 = arith.constant 0.000000e+00 : f32
    %194 = vector.broadcast %cst_65 : f32 to vector<4x1024xf32>
    %195 = arith.maximumf %193, %194 : vector<4x1024xf32>
    %196 = arith.addf %168, %195 : vector<4x1024xf32>
    %c0_66 = arith.constant 0 : index
    %c0_67 = arith.constant 0 : index
    %c0_68 = arith.constant 0 : index
    %197 = vector.load %arg12[%c0_66, %c0_67, %c0_68] : memref<1x4x1024xf32, #tpu.memory_space<vmem>>, vector<1x4x1024xf32>
    %198 = vector.shape_cast %197 : vector<1x4x1024xf32> to vector<4x1024xf32>
    %199 = vector.shape_cast %196 : vector<4x1024xf32> to vector<1x4x1024xf32>
    tpu.vector_store %arg12[%c0_66, %c0_67, %c0_68], %199 {strides = array<i32>} : memref<1x4x1024xf32, #tpu.memory_space<vmem>>, vector<1x4x1024xf32>,
    return
  }
  func.func @transform_0(%arg0: i32) -> (i32, i32, i32) {
    %c0_i32 = arith.constant 0 : i32
    %c0_i32_0 = arith.constant 0 : i32
    %c0_i32_1 = arith.constant 0 : i32
    return %arg0, %c0_i32, %c0_i32_0 : i32, i32, i32
  }
  func.func @transform_1(%arg0: i32) -> (i32, i32) {
    %c0_i32 = arith.constant 0 : i32
    %c0_i32_0 = arith.constant 0 : i32
    %c0_i32_1 = arith.constant 0 : i32
    return %c0_i32, %c0_i32_0 : i32, i32
  }
  func.func @transform_2(%arg0: i32) -> (i32, i32) {
    %c0_i32 = arith.constant 0 : i32
    %c0_i32_0 = arith.constant 0 : i32
    %c0_i32_1 = arith.constant 0 : i32
    return %c0_i32, %c0_i32_0 : i32, i32
  }
  func.func @transform_3(%arg0: i32) -> (i32, i32) {
    %c0_i32 = arith.constant 0 : i32
    %c0_i32_0 = arith.constant 0 : i32
    %c0_i32_1 = arith.constant 0 : i32
    return %c0_i32, %c0_i32_0 : i32, i32
  }
  func.func @transform_4(%arg0: i32) -> (i32, i32) {
    %c0_i32 = arith.constant 0 : i32
    %c0_i32_0 = arith.constant 0 : i32
    %c0_i32_1 = arith.constant 0 : i32
    return %c0_i32, %c0_i32_0 : i32, i32
  }
  func.func @transform_5(%arg0: i32) -> (i32, i32) {
    %c0_i32 = arith.constant 0 : i32
    %c0_i32_0 = arith.constant 0 : i32
    %c0_i32_1 = arith.constant 0 : i32
    return %c0_i32, %c0_i32_0 : i32, i32
  }
  func.func @transform_6(%arg0: i32) -> (i32, i32) {
    %c0_i32 = arith.constant 0 : i32
    %c0_i32_0 = arith.constant 0 : i32
    %c0_i32_1 = arith.constant 0 : i32
    return %c0_i32, %c0_i32_0 : i32, i32
  }
  func.func @transform_7(%arg0: i32) -> (i32, i32) {
    %c0_i32 = arith.constant 0 : i32
    %c0_i32_0 = arith.constant 0 : i32
    %c0_i32_1 = arith.constant 0 : i32
    return %c0_i32, %c0_i32_0 : i32, i32
  }
  func.func @transform_8(%arg0: i32) -> (i32, i32) {
    %c0_i32 = arith.constant 0 : i32
    %c0_i32_0 = arith.constant 0 : i32
    %c0_i32_1 = arith.constant 0 : i32
    return %c0_i32, %c0_i32_0 : i32, i32
  }
  func.func @transform_9(%arg0: i32) -> (i32, i32) {
    %c0_i32 = arith.constant 0 : i32
    %c0_i32_0 = arith.constant 0 : i32
    %c0_i32_1 = arith.constant 0 : i32
    return %c0_i32, %c0_i32_0 : i32, i32
  }
  func.func @transform_10(%arg0: i32) -> (i32, i32) {
    %c0_i32 = arith.constant 0 : i32
    %c0_i32_0 = arith.constant 0 : i32
    %c0_i32_1 = arith.constant 0 : i32
    return %c0_i32, %c0_i32_0 : i32, i32
  }
  func.func @transform_11(%arg0: i32) -> (i32, i32, i32) {
    %c0_i32 = arith.constant 0 : i32
    %c0_i32_0 = arith.constant 0 : i32
    %c0_i32_1 = arith.constant 0 : i32
    return %arg0, %c0_i32, %c0_i32_0 : i32, i32, i32
  }
}

</mosaic_0001>

<llo_original>
// kernel: up_forward.1
$region0: #{up_forward.1}
  #allocation0 [shape = 'u32[]', space=smem, size = 0x4, offset = 0x4, fixed_abs, tag = 'smem constant byte address 0x4 - core index']
  #allocation1 [shape = 'u32[144,128]{1,0:T(1,128)}', space=vmem, size = 0x12000, scoped, tag = 'internal scratch']
  %s0 = inlined_call_operand.vmem [shape: bf16[2,8,256], index: 0, kind: input, shape index: {}]
  %s1 = inlined_call_operand.vmem [shape: bf16[256,1024], index: 1, kind: input, shape index: {}]
  %s2 = inlined_call_operand.vmem [shape: bf16[2,8], index: 2, kind: input, shape index: {}]
  %s3 = inlined_call_operand.vmem [shape: f32[2,1], index: 3, kind: input, shape index: {}]
  %s4 = inlined_call_operand.vmem [shape: f32[2,9], index: 4, kind: input, shape index: {}]
  %s5 = inlined_call_operand.vmem [shape: bf16[2,2], index: 5, kind: input, shape index: {}]
  %s6 = inlined_call_operand.vmem [shape: f32[2,1], index: 6, kind: input, shape index: {}]
  %s7 = inlined_call_operand.vmem [shape: bf16[4,2], index: 7, kind: input, shape index: {}]
  %s8 = inlined_call_operand.vmem [shape: f32[4,1], index: 8, kind: input, shape index: {}]
  %s9 = inlined_call_operand.vmem [shape: bf16[4,8], index: 9, kind: input, shape index: {}]
  %s10 = inlined_call_operand.vmem [shape: f32[4,1], index: 10, kind: input, shape index: {}]
  %s11 = inlined_call_operand.vmem [shape: f32[2,4,1024], index: 11, kind: output, shape index: {}]
  %s12 = sld [smem:[#allocation0]]
  $region77: #{up_forward.1} parent=0
    _
  %s14 = ssub.s32 1, %s12
  %s15 = scalar_select 0, %s14, %s12
  loop: start=0, step=1, limit=4
  $region2: #{up_forward.1} parent=0 // loop_pre_header
    _
  $region3: #{up_forward.1} parent=0 // loop_header
    %s17 = sphi 0, %s21
    %p18 = scmp.ge.s32.totalorder %s17, 4
    %s27 = sphi 0, %s29
    %s30 = sphi 0, %s27
    %s31 = sphi 0, %s30
    %s47 = sphi 0, %s31
    %s51 = sphi 0, %s51
    %s53 = sphi 0, %s51
    %s54 = sphi 0, %s53
    %s68 = sphi 0, %s54
    %s72 = sphi 0, %s72
    %s74 = sphi 0, %s72
    %s75 = sphi 0, %s74
    %s89 = sphi 0, %s75
    %s93 = sphi 0, %s93
    %s95 = sphi 0, %s93
    %s96 = sphi 0, %s95
    %s110 = sphi 0, %s96
    %s114 = sphi 0, %s114
    %s116 = sphi 0, %s114
    %s117 = sphi 0, %s116
    %s131 = sphi 0, %s117
    %s135 = sphi 0, %s135
    %s137 = sphi 0, %s135
    %s138 = sphi 0, %s137
    %s152 = sphi 0, %s138
    %s156 = sphi 0, %s156
    %s158 = sphi 0, %s156
    %s159 = sphi 0, %s158
    %s173 = sphi 0, %s159
    %s177 = sphi 0, %s177
    %s179 = sphi 0, %s177
    %s180 = sphi 0, %s179
    %s194 = sphi 0, %s180
    %s198 = sphi 0, %s198
    %s200 = sphi 0, %s198
    %s201 = sphi 0, %s200
    %s215 = sphi 0, %s201
    %s219 = sphi 0, %s219
    %s221 = sphi 0, %s219
    %s222 = sphi 0, %s221
    %s236 = sphi 0, %s222
    %s240 = sphi 0, %s240
    %s242 = sphi 0, %s240
    %s243 = sphi 0, %s242
    %s257 = sphi 0, %s243
    %s263 = sphi 0, %s265
    %s266 = sphi 0, %s263
    %s267 = sphi 0, %s266
    %s283 = sphi 0, %s267
  $region4: #{up_forward.1} parent=0 // loop_header_branch
    %20 = sbr.rel (%p18) target = $region8
  $region5: #{up_forward.1} parent=0 // loop_body
    %s22 = ssub.s32 %s17, 1
    %s23 = ssub.s32 %s17, 2
    %s24 = sadd.s32 %s17, 1
    %s25 = ssub.s32 %s17, %s24
    %p26 = scmp.eq.s32.totalorder %s25, 0
    %s28 = sadd.s32 %s27, 1
    %s29 = scalar_select %p26, %s27, %s28
    %p32 = pneg %p26
    %p33 = scmp.eq.s32.totalorder %s17, 1
    %p34 = por %p32, %p33
    %p35 = scmp.ne.s32.totalorder %s27, %s30
    %p36 = scmp.eq.s32.totalorder %s17, 0
    %p37 = por %p35, %p36
    %p38 = scmp.ne.s32.totalorder %s27, %s30
    %p39 = scmp.eq.s32.totalorder %s22, 1
    %p40 = por %p38, %p39
    %p41 = scmp.ne.s32.totalorder %s30, %s31
    %p42 = scmp.eq.s32.totalorder %s22, 0
    %p43 = por %p41, %p42
    %p44 = scmp.ne.s32.totalorder %s30, %s31
    %p45 = scmp.eq.s32.totalorder %s23, 1
    %p46 = por %p44, %p45
    %p48 = scmp.ne.s32.totalorder %s31, %s47
    %p49 = scmp.eq.s32.totalorder %s23, 0
    %p50 = por %p48, %p49
    %s52 = sadd.s32 %s51, 1
    %p55 = scmp.eq.s32.totalorder %s17, 1
    %p56 = scmp.ne.s32.totalorder %s51, %s53
    %p57 = scmp.eq.s32.totalorder %s17, 0
    %p58 = por %p56, %p57
    %p59 = scmp.ne.s32.totalorder %s51, %s53
    %p60 = scmp.eq.s32.totalorder %s22, 1
    %p61 = por %p59, %p60
    %p62 = scmp.ne.s32.totalorder %s53, %s54
    %p63 = scmp.eq.s32.totalorder %s22, 0
    %p64 = por %p62, %p63
    %p65 = scmp.ne.s32.totalorder %s53, %s54
    %p66 = scmp.eq.s32.totalorder %s23, 1
    %p67 = por %p65, %p66
    %p69 = scmp.ne.s32.totalorder %s54, %s68
    %p70 = scmp.eq.s32.totalorder %s23, 0
    %p71 = por %p69, %p70
    %s73 = sadd.s32 %s72, 1
    %p76 = scmp.eq.s32.totalorder %s17, 1
    %p77 = scmp.ne.s32.totalorder %s72, %s74
    %p78 = scmp.eq.s32.totalorder %s17, 0
    %p79 = por %p77, %p78
    %p80 = scmp.ne.s32.totalorder %s72, %s74
    %p81 = scmp.eq.s32.totalorder %s22, 1
    %p82 = por %p80, %p81
    %p83 = scmp.ne.s32.totalorder %s74, %s75
    %p84 = scmp.eq.s32.totalorder %s22, 0
    %p85 = por %p83, %p84
    %p86 = scmp.ne.s32.totalorder %s74, %s75
    %p87 = scmp.eq.s32.totalorder %s23, 1
    %p88 = por %p86, %p87
    %p90 = scmp.ne.s32.totalorder %s75, %s89
    %p91 = scmp.eq.s32.totalorder %s23, 0
    %p92 = por %p90, %p91
    %s94 = sadd.s32 %s93, 1
    %p97 = scmp.eq.s32.totalorder %s17, 1
    %p98 = scmp.ne.s32.totalorder %s93, %s95
    %p99 = scmp.eq.s32.totalorder %s17, 0
    %p100 = por %p98, %p99
    %p101 = scmp.ne.s32.totalorder %s93, %s95
    %p102 = scmp.eq.s32.totalorder %s22, 1
    %p103 = por %p101, %p102
    %p104 = scmp.ne.s32.totalorder %s95, %s96
    %p105 = scmp.eq.s32.totalorder %s22, 0
    %p106 = por %p104, %p105
    %p107 = scmp.ne.s32.totalorder %s95, %s96
    %p108 = scmp.eq.s32.totalorder %s23, 1
    %p109 = por %p107, %p108
    %p111 = scmp.ne.s32.totalorder %s96, %s110
    %p112 = scmp.eq.s32.totalorder %s23, 0
    %p113 = por %p111, %p112
    %s115 = sadd.s32 %s114, 1
    %p118 = scmp.eq.s32.totalorder %s17, 1
    %p119 = scmp.ne.s32.totalorder %s114, %s116
    %p120 = scmp.eq.s32.totalorder %s17, 0
    %p121 = por %p119, %p120
    %p122 = scmp.ne.s32.totalorder %s114, %s116
    %p123 = scmp.eq.s32.totalorder %s22, 1
    %p124 = por %p122, %p123
    %p125 = scmp.ne.s32.totalorder %s116, %s117
    %p126 = scmp.eq.s32.totalorder %s22, 0
    %p127 = por %p125, %p126
    %p128 = scmp.ne.s32.totalorder %s116, %s117
    %p129 = scmp.eq.s32.totalorder %s23, 1
    %p130 = por %p128, %p129
    %p132 = scmp.ne.s32.totalorder %s117, %s131
    %p133 = scmp.eq.s32.totalorder %s23, 0
    %p134 = por %p132, %p133
    %s136 = sadd.s32 %s135, 1
    %p139 = scmp.eq.s32.totalorder %s17, 1
    %p140 = scmp.ne.s32.totalorder %s135, %s137
    %p141 = scmp.eq.s32.totalorder %s17, 0
    %p142 = por %p140, %p141
    %p143 = scmp.ne.s32.totalorder %s135, %s137
    %p144 = scmp.eq.s32.totalorder %s22, 1
    %p145 = por %p143, %p144
    %p146 = scmp.ne.s32.totalorder %s137, %s138
    %p147 = scmp.eq.s32.totalorder %s22, 0
    %p148 = por %p146, %p147
    %p149 = scmp.ne.s32.totalorder %s137, %s138
    %p150 = scmp.eq.s32.totalorder %s23, 1
    %p151 = por %p149, %p150
    %p153 = scmp.ne.s32.totalorder %s138, %s152
    %p154 = scmp.eq.s32.totalorder %s23, 0
    %p155 = por %p153, %p154
    %s157 = sadd.s32 %s156, 1
    %p160 = scmp.eq.s32.totalorder %s17, 1
    %p161 = scmp.ne.s32.totalorder %s156, %s158
    %p162 = scmp.eq.s32.totalorder %s17, 0
    %p163 = por %p161, %p162
    %p164 = scmp.ne.s32.totalorder %s156, %s158
    %p165 = scmp.eq.s32.totalorder %s22, 1
    %p166 = por %p164, %p165
    %p167 = scmp.ne.s32.totalorder %s158, %s159
    %p168 = scmp.eq.s32.totalorder %s22, 0
    %p169 = por %p167, %p168
    %p170 = scmp.ne.s32.totalorder %s158, %s159
    %p171 = scmp.eq.s32.totalorder %s23, 1
    %p172 = por %p170, %p171
    %p174 = scmp.ne.s32.totalorder %s159, %s173
    %p175 = scmp.eq.s32.totalorder %s23, 0
    %p176 = por %p174, %p175
    %s178 = sadd.s32 %s177, 1
    %p181 = scmp.eq.s32.totalorder %s17, 1
    %p182 = scmp.ne.s32.totalorder %s177, %s179
    %p183 = scmp.eq.s32.totalorder %s17, 0
    %p184 = por %p182, %p183
    %p185 = scmp.ne.s32.totalorder %s177, %s179
    %p186 = scmp.eq.s32.totalorder %s22, 1
    %p187 = por %p185, %p186
    %p188 = scmp.ne.s32.totalorder %s179, %s180
    %p189 = scmp.eq.s32.totalorder %s22, 0
    %p190 = por %p188, %p189
    %p191 = scmp.ne.s32.totalorder %s179, %s180
    %p192 = scmp.eq.s32.totalorder %s23, 1
    %p193 = por %p191, %p192
    %p195 = scmp.ne.s32.totalorder %s180, %s194
    %p196 = scmp.eq.s32.totalorder %s23, 0
    %p197 = por %p195, %p196
    %s199 = sadd.s32 %s198, 1
    %p202 = scmp.eq.s32.totalorder %s17, 1
    %p203 = scmp.ne.s32.totalorder %s198, %s200
    %p204 = scmp.eq.s32.totalorder %s17, 0
    %p205 = por %p203, %p204
    %p206 = scmp.ne.s32.totalorder %s198, %s200
    %p207 = scmp.eq.s32.totalorder %s22, 1
    %p208 = por %p206, %p207
    %p209 = scmp.ne.s32.totalorder %s200, %s201
    %p210 = scmp.eq.s32.totalorder %s22, 0
    %p211 = por %p209, %p210
    %p212 = scmp.ne.s32.totalorder %s200, %s201
    %p213 = scmp.eq.s32.totalorder %s23, 1
    %p214 = por %p212, %p213
    %p216 = scmp.ne.s32.totalorder %s201, %s215
    %p217 = scmp.eq.s32.totalorder %s23, 0
    %p218 = por %p216, %p217
    %s220 = sadd.s32 %s219, 1
    %p223 = scmp.eq.s32.totalorder %s17, 1
    %p224 = scmp.ne.s32.totalorder %s219, %s221
    %p225 = scmp.eq.s32.totalorder %s17, 0
    %p226 = por %p224, %p225
    %p227 = scmp.ne.s32.totalorder %s219, %s221
    %p228 = scmp.eq.s32.totalorder %s22, 1
    %p229 = por %p227, %p228
    %p230 = scmp.ne.s32.totalorder %s221, %s222
    %p231 = scmp.eq.s32.totalorder %s22, 0
    %p232 = por %p230, %p231
    %p233 = scmp.ne.s32.totalorder %s221, %s222
    %p234 = scmp.eq.s32.totalorder %s23, 1
    %p235 = por %p233, %p234
    %p237 = scmp.ne.s32.totalorder %s222, %s236
    %p238 = scmp.eq.s32.totalorder %s23, 0
    %p239 = por %p237, %p238
    %s241 = sadd.s32 %s240, 1
    %p244 = scmp.eq.s32.totalorder %s17, 1
    %p245 = scmp.ne.s32.totalorder %s240, %s242
    %p246 = scmp.eq.s32.totalorder %s17, 0
    %p247 = por %p245, %p246
    %p248 = scmp.ne.s32.totalorder %s240, %s242
    %p249 = scmp.eq.s32.totalorder %s22, 1
    %p250 = por %p248, %p249
    %p251 = scmp.ne.s32.totalorder %s242, %s243
    %p252 = scmp.eq.s32.totalorder %s22, 0
    %p253 = por %p251, %p252
    %p254 = scmp.ne.s32.totalorder %s242, %s243
    %p255 = scmp.eq.s32.totalorder %s23, 1
    %p256 = por %p254, %p255
    %p258 = scmp.ne.s32.totalorder %s243, %s257
    %p259 = scmp.eq.s32.totalorder %s23, 0
    %p260 = por %p258, %p259
    %s261 = ssub.s32 %s17, %s24
    %p262 = scmp.eq.s32.totalorder %s261, 0
    %s264 = sadd.s32 %s263, 1
    %s265 = scalar_select %p262, %s263, %s264
    %p268 = pneg %p262
    %p269 = scmp.eq.s32.totalorder %s17, 1
    %p270 = por %p268, %p269
    %p271 = scmp.ne.s32.totalorder %s263, %s266
    %p272 = scmp.eq.s32.totalorder %s17, 0
    %p273 = por %p271, %p272
    %p274 = scmp.ne.s32.totalorder %s263, %s266
    %p275 = scmp.eq.s32.totalorder %s22, 1
    %p276 = por %p274, %p275
    %p277 = scmp.ne.s32.totalorder %s266, %s267
    %p278 = scmp.eq.s32.totalorder %s22, 0
    %p279 = por %p277, %p278
    %p280 = scmp.ne.s32.totalorder %s266, %s267
    %p281 = scmp.eq.s32.totalorder %s23, 1
    %p282 = por %p280, %p281
    %p284 = scmp.ne.s32.totalorder %s267, %s283
    %p285 = scmp.eq.s32.totalorder %s23, 0
    %p286 = por %p284, %p285
    %p287 = scmp.le.s32.totalorder 1, %s17
    %p288 = scmp.lt.s32.totalorder %s17, 3
    %p289 = pnand %p287, %p288
    %p290 = pneg %p289
    // Predicated region
    $region9: #{up_forward.1} parent=5 // pred_check
      _
    $region10: #{up_forward.1} parent=5 // pred_check_branch
      %292 = sbr.rel (%p289) target = $region12
    $region11: #{up_forward.1} parent=5 // pred_region
      %s293 = ssub.s32 %s17, 1
      // Predicated region
      $region13: #{up_forward.1} parent=11 // pred_check
        %p294 = pneg %p64
      $region14: #{up_forward.1} parent=11 // pred_check_branch
        %296 = sbr.rel (%p294) target = $region16
      $region15: #{up_forward.1} parent=11 // pred_region
        _
      $region16: #{up_forward.1} parent=11 // pred_fallthru
        _
      // Predicated region
      $region17: #{up_forward.1} parent=11 // pred_check
        %p297 = pneg %p85
      $region18: #{up_forward.1} parent=11 // pred_check_branch
        %299 = sbr.rel (%p297) target = $region20
      $region19: #{up_forward.1} parent=11 // pred_region
        _
      $region20: #{up_forward.1} parent=11 // pred_fallthru
        _
      // Predicated region
      $region21: #{up_forward.1} parent=11 // pred_check
        %p300 = pneg %p106
      $region22: #{up_forward.1} parent=11 // pred_check_branch
        %302 = sbr.rel (%p300) target = $region24
      $region23: #{up_forward.1} parent=11 // pred_region
        _
      $region24: #{up_forward.1} parent=11 // pred_fallthru
        _
      // Predicated region
      $region25: #{up_forward.1} parent=11 // pred_check
        %p303 = pneg %p127
      $region26: #{up_forward.1} parent=11 // pred_check_branch
        %305 = sbr.rel (%p303) target = $region28
      $region27: #{up_forward.1} parent=11 // pred_region
        _
      $region28: #{up_forward.1} parent=11 // pred_fallthru
        _
      // Predicated region
      $region29: #{up_forward.1} parent=11 // pred_check
        %p306 = pneg %p148
      $region30: #{up_forward.1} parent=11 // pred_check_branch
        %308 = sbr.rel (%p306) target = $region32
      $region31: #{up_forward.1} parent=11 // pred_region
        _
      $region32: #{up_forward.1} parent=11 // pred_fallthru
        _
      // Predicated region
      $region33: #{up_forward.1} parent=11 // pred_check
        %p309 = pneg %p169
      $region34: #{up_forward.1} parent=11 // pred_check_branch
        %311 = sbr.rel (%p309) target = $region36
      $region35: #{up_forward.1} parent=11 // pred_region
        _
      $region36: #{up_forward.1} parent=11 // pred_fallthru
        _
      // Predicated region
      $region37: #{up_forward.1} parent=11 // pred_check
        %p312 = pneg %p190
      $region38: #{up_forward.1} parent=11 // pred_check_branch
        %314 = sbr.rel (%p312) target = $region40
      $region39: #{up_forward.1} parent=11 // pred_region
        _
      $region40: #{up_forward.1} parent=11 // pred_fallthru
        _
      // Predicated region
      $region41: #{up_forward.1} parent=11 // pred_check
        %p315 = pneg %p211
      $region42: #{up_forward.1} parent=11 // pred_check_branch
        %317 = sbr.rel (%p315) target = $region44
      $region43: #{up_forward.1} parent=11 // pred_region
        _
      $region44: #{up_forward.1} parent=11 // pred_fallthru
        _
      // Predicated region
      $region45: #{up_forward.1} parent=11 // pred_check
        %p318 = pneg %p232
      $region46: #{up_forward.1} parent=11 // pred_check_branch
        %320 = sbr.rel (%p318) target = $region48
      $region47: #{up_forward.1} parent=11 // pred_region
        _
      $region48: #{up_forward.1} parent=11 // pred_fallthru
        _
      // Predicated region
      $region49: #{up_forward.1} parent=11 // pred_check
        %p321 = pneg %p253
      $region50: #{up_forward.1} parent=11 // pred_check_branch
        %323 = sbr.rel (%p321) target = $region52
      $region51: #{up_forward.1} parent=11 // pred_region
        _
      $region52: #{up_forward.1} parent=11 // pred_fallthru
        _
    $region12: #{up_forward.1} parent=5 // pred_fallthru
      _
    %p324 = scmp.lt.s32.totalorder %s17, 2
    // Predicated region
    $region53: #{up_forward.1} parent=5 // pred_check
      %p325 = pneg %p324
    $region54: #{up_forward.1} parent=5 // pred_check_branch
      %327 = sbr.rel (%p325) target = $region56
    $region55: #{up_forward.1} parent=5 // pred_region
      // Predicated region
      $region57: #{up_forward.1} parent=55 // pred_check
        %p328 = pneg %p37
      $region58: #{up_forward.1} parent=55 // pred_check_branch
        %330 = sbr.rel (%p328) target = $region60
      $region59: #{up_forward.1} parent=55 // pred_region
        %p331 = scmp.lt.s32.totalorder %s17, 1
        %s332 = scalar_select %p331, %s17, 1
        %s333 = smul.addr %s332, 2
        %s334 = smul.addr %s333, 4
        %s335 = scalar_lea.vmem %s0, %s334
      $region60: #{up_forward.1} parent=55 // pred_fallthru
        _
    $region56: #{up_forward.1} parent=5 // pred_fallthru
      _
    %p336 = scmp.le.s32.totalorder 1, %s17
    %p337 = scmp.lt.s32.totalorder %s17, 3
    %p338 = pnand %p336, %p337
    %p339 = pneg %p338
    // Predicated region
    $region61: #{up_forward.1} parent=5 // pred_check
      _
    $region62: #{up_forward.1} parent=5 // pred_check_branch
      %341 = sbr.rel (%p338) target = $region64
    $region63: #{up_forward.1} parent=5 // pred_region
      %s342 = ssub.s32 %s17, 1
      %p343 = scmp.lt.s32.totalorder %s22, 1
      %s344 = scalar_select %p343, %s22, 1
      %s345 = smul.addr %s344, 2
      %s346 = smul.addr %s345, 4
      %s347 = scalar_lea.vmem %s0, %s346
      %p348 = pneg %p43
      %p349 = pneg %p40
      %p350 = pneg %p64
      %p351 = pneg %p61
      %p352 = pneg %p85
      %p353 = pneg %p82
      %p354 = pneg %p106
      %p355 = pneg %p103
      %p356 = pneg %p127
      %p357 = pneg %p124
      %p358 = pneg %p148
      %p359 = pneg %p145
      %p360 = pneg %p169
      %p361 = pneg %p166
      %p362 = pneg %p190
      %p363 = pneg %p187
      %p364 = pneg %p211
      %p365 = pneg %p208
      %p366 = pneg %p232
      %p367 = pneg %p229
      %p368 = pneg %p253
      %p369 = pneg %p250
      %p370 = pneg %p279
      %p371 = pneg %p276
      %p372 = scmp.lt.s32.totalorder %s22, 1
      %s373 = scalar_select %p372, %s22, 1
      %s374 = smul.addr %s373, 8
      %s375 = smul.addr %s374, 4
      %s376 = scalar_lea.vmem %s11, %s375
      %p377 = scmp.lt.s32.totalorder %s22, 1
      %s378 = scalar_select %p377, %s22, 1
      %s379 = smul.addr %s378, 2
      %s380 = smul.addr %s379, 4
      %s381 = scalar_lea.vmem %s0, %s380
      %p382 = scmp.lt.s32.totalorder %s22, 1
      %s383 = scalar_select %p382, %s22, 1
      %s384 = smul.addr %s383, 8
      %s385 = smul.addr %s384, 4
      %s386 = scalar_lea.vmem %s11, %s385
      %v388 = vld [vmem:[%s381] sm:$0xff]
      %v389 = vld [vmem:[%s1] sm:$0xff]
      %v390 = vld [vmem:[%s1 + $0x8] sm:$0xff]
      %v391 = vld [vmem:[%s1 + $0x10] sm:$0xff]
      %v392 = vld [vmem:[%s1 + $0x18] sm:$0xff]
      %v393 = vld [vmem:[%s1 + $0x20] sm:$0xff]
      %v394 = vld [vmem:[%s1 + $0x28] sm:$0xff]
      %v395 = vld [vmem:[%s1 + $0x30] sm:$0xff]
      %v396 = vld [vmem:[%s1 + $0x38] sm:$0xff]
      %v397 = vld [vmem:[%s1 + $0x40] sm:$0xff]
      %v398 = vld [vmem:[%s1 + $0x48] sm:$0xff]
      %v399 = vld [vmem:[%s1 + $0x50] sm:$0xff]
      %v400 = vld [vmem:[%s1 + $0x58] sm:$0xff]
      %v401 = vld [vmem:[%s1 + $0x60] sm:$0xff]
      %v402 = vld [vmem:[%s1 + $0x68] sm:$0xff]
      %v403 = vld [vmem:[%s1 + $0x70] sm:$0xff]
      %v404 = vld [vmem:[%s1 + $0x78] sm:$0xff]
      %v405 = vld [vmem:[%s1 + $0x80] sm:$0xff]
      %v406 = vld [vmem:[%s1 + $0x88] sm:$0xff]
      %v407 = vld [vmem:[%s1 + $0x90] sm:$0xff]
      %v408 = vld [vmem:[%s1 + $0x98] sm:$0xff]
      %v409 = vld [vmem:[%s1 + $0xa0] sm:$0xff]
      %v410 = vld [vmem:[%s1 + $0xa8] sm:$0xff]
      %v411 = vld [vmem:[%s1 + $0xb0] sm:$0xff]
      %v412 = vld [vmem:[%s1 + $0xb8] sm:$0xff]
      %v413 = vld [vmem:[%s1 + $0xc0] sm:$0xff]
      %v414 = vld [vmem:[%s1 + $0xc8] sm:$0xff]
      %v415 = vld [vmem:[%s1 + $0xd0] sm:$0xff]
      %v416 = vld [vmem:[%s1 + $0xd8] sm:$0xff]
      %v417 = vld [vmem:[%s1 + $0xe0] sm:$0xff]
      %v418 = vld [vmem:[%s1 + $0xe8] sm:$0xff]
      %v419 = vld [vmem:[%s1 + $0xf0] sm:$0xff]
      %v420 = vld [vmem:[%s1 + $0xf8] sm:$0xff]
      %v421 = vld [vmem:[%s1 + $0x100] sm:$0xff]
      %v422 = vld [vmem:[%s1 + $0x108] sm:$0xff]
      %v423 = vld [vmem:[%s1 + $0x110] sm:$0xff]
      %v424 = vld [vmem:[%s1 + $0x118] sm:$0xff]
      %v425 = vld [vmem:[%s1 + $0x120] sm:$0xff]
      %v426 = vld [vmem:[%s1 + $0x128] sm:$0xff]
      %v427 = vld [vmem:[%s1 + $0x130] sm:$0xff]
      %v428 = vld [vmem:[%s1 + $0x138] sm:$0xff]
      %v429 = vld [vmem:[%s1 + $0x140] sm:$0xff]
      %v430 = vld [vmem:[%s1 + $0x148] sm:$0xff]
      %v431 = vld [vmem:[%s1 + $0x150] sm:$0xff]
      %v432 = vld [vmem:[%s1 + $0x158] sm:$0xff]
      %v433 = vld [vmem:[%s1 + $0x160] sm:$0xff]
      %v434 = vld [vmem:[%s1 + $0x168] sm:$0xff]
      %v435 = vld [vmem:[%s1 + $0x170] sm:$0xff]
      %v436 = vld [vmem:[%s1 + $0x178] sm:$0xff]
      %v437 = vld [vmem:[%s1 + $0x180] sm:$0xff]
      %v438 = vld [vmem:[%s1 + $0x188] sm:$0xff]
      %v439 = vld [vmem:[%s1 + $0x190] sm:$0xff]
      %v440 = vld [vmem:[%s1 + $0x198] sm:$0xff]
      %v441 = vld [vmem:[%s1 + $0x1a0] sm:$0xff]
      %v442 = vld [vmem:[%s1 + $0x1a8] sm:$0xff]
      %v443 = vld [vmem:[%s1 + $0x1b0] sm:$0xff]
      %v444 = vld [vmem:[%s1 + $0x1b8] sm:$0xff]
      %v445 = vld [vmem:[%s1 + $0x1c0] sm:$0xff]
      %v446 = vld [vmem:[%s1 + $0x1c8] sm:$0xff]
      %v447 = vld [vmem:[%s1 + $0x1d0] sm:$0xff]
      %v448 = vld [vmem:[%s1 + $0x1d8] sm:$0xff]
      %v449 = vld [vmem:[%s1 + $0x1e0] sm:$0xff]
      %v450 = vld [vmem:[%s1 + $0x1e8] sm:$0xff]
      %v451 = vld [vmem:[%s1 + $0x1f0] sm:$0xff]
      %v452 = vld [vmem:[%s1 + $0x1f8] sm:$0xff]
      %v453 = vld [vmem:[%s1 + $0x200] sm:$0xff]
      %v454 = vld [vmem:[%s1 + $0x208] sm:$0xff]
      %v455 = vld [vmem:[%s1 + $0x210] sm:$0xff]
      %v456 = vld [vmem:[%s1 + $0x218] sm:$0xff]
      %v457 = vld [vmem:[%s1 + $0x220] sm:$0xff]
      %v458 = vld [vmem:[%s1 + $0x228] sm:$0xff]
      %v459 = vld [vmem:[%s1 + $0x230] sm:$0xff]
      %v460 = vld [vmem:[%s1 + $0x238] sm:$0xff]
      %v461 = vld [vmem:[%s1 + $0x240] sm:$0xff]
      %v462 = vld [vmem:[%s1 + $0x248] sm:$0xff]
      %v463 = vld [vmem:[%s1 + $0x250] sm:$0xff]
      %v464 = vld [vmem:[%s1 + $0x258] sm:$0xff]
      %v465 = vld [vmem:[%s1 + $0x260] sm:$0xff]
      %v466 = vld [vmem:[%s1 + $0x268] sm:$0xff]
      %v467 = vld [vmem:[%s1 + $0x270] sm:$0xff]
      %v468 = vld [vmem:[%s1 + $0x278] sm:$0xff]
      %v469 = vld [vmem:[%s1 + $0x280] sm:$0xff]
      %v470 = vld [vmem:[%s1 + $0x288] sm:$0xff]
      %v471 = vld [vmem:[%s1 + $0x290] sm:$0xff]
      %v472 = vld [vmem:[%s1 + $0x298] sm:$0xff]
      %v473 = vld [vmem:[%s1 + $0x2a0] sm:$0xff]
      %v474 = vld [vmem:[%s1 + $0x2a8] sm:$0xff]
      %v475 = vld [vmem:[%s1 + $0x2b0] sm:$0xff]
      %v476 = vld [vmem:[%s1 + $0x2b8] sm:$0xff]
      %v477 = vld [vmem:[%s1 + $0x2c0] sm:$0xff]
      %v478 = vld [vmem:[%s1 + $0x2c8] sm:$0xff]
      %v479 = vld [vmem:[%s1 + $0x2d0] sm:$0xff]
      %v480 = vld [vmem:[%s1 + $0x2d8] sm:$0xff]
      %v481 = vld [vmem:[%s1 + $0x2e0] sm:$0xff]
      %v482 = vld [vmem:[%s1 + $0x2e8] sm:$0xff]
      %v483 = vld [vmem:[%s1 + $0x2f0] sm:$0xff]
      %v484 = vld [vmem:[%s1 + $0x2f8] sm:$0xff]
      %v485 = vld [vmem:[%s1 + $0x300] sm:$0xff]
      %v486 = vld [vmem:[%s1 + $0x308] sm:$0xff]
      %v487 = vld [vmem:[%s1 + $0x310] sm:$0xff]
      %v488 = vld [vmem:[%s1 + $0x318] sm:$0xff]
      %v489 = vld [vmem:[%s1 + $0x320] sm:$0xff]
      %v490 = vld [vmem:[%s1 + $0x328] sm:$0xff]
      %v491 = vld [vmem:[%s1 + $0x330] sm:$0xff]
      %v492 = vld [vmem:[%s1 + $0x338] sm:$0xff]
      %v493 = vld [vmem:[%s1 + $0x340] sm:$0xff]
      %v494 = vld [vmem:[%s1 + $0x348] sm:$0xff]
      %v495 = vld [vmem:[%s1 + $0x350] sm:$0xff]
      %v496 = vld [vmem:[%s1 + $0x358] sm:$0xff]
      %v497 = vld [vmem:[%s1 + $0x360] sm:$0xff]
      %v498 = vld [vmem:[%s1 + $0x368] sm:$0xff]
      %v499 = vld [vmem:[%s1 + $0x370] sm:$0xff]
      %v500 = vld [vmem:[%s1 + $0x378] sm:$0xff]
      %v501 = vld [vmem:[%s1 + $0x380] sm:$0xff]
      %v502 = vld [vmem:[%s1 + $0x388] sm:$0xff]
      %v503 = vld [vmem:[%s1 + $0x390] sm:$0xff]
      %v504 = vld [vmem:[%s1 + $0x398] sm:$0xff]
      %v505 = vld [vmem:[%s1 + $0x3a0] sm:$0xff]
      %v506 = vld [vmem:[%s1 + $0x3a8] sm:$0xff]
      %v507 = vld [vmem:[%s1 + $0x3b0] sm:$0xff]
      %v508 = vld [vmem:[%s1 + $0x3b8] sm:$0xff]
      %v509 = vld [vmem:[%s1 + $0x3c0] sm:$0xff]
      %v510 = vld [vmem:[%s1 + $0x3c8] sm:$0xff]
      %v511 = vld [vmem:[%s1 + $0x3d0] sm:$0xff]
      %v512 = vld [vmem:[%s1 + $0x3d8] sm:$0xff]
      %v513 = vld [vmem:[%s1 + $0x3e0] sm:$0xff]
      %v514 = vld [vmem:[%s1 + $0x3e8] sm:$0xff]
      %v515 = vld [vmem:[%s1 + $0x3f0] sm:$0xff]
      %v516 = vld [vmem:[%s1 + $0x3f8] sm:$0xff]
      %v518 = vunpack.c.l.b16 %v388
      %v519 = vunpack.c.h.b16 %v388
      %v520 = vpack.c.b16 %v518, %v518
      %v521 = vpack.c.b16 %v519, %v519
      %v652 = vunpack.c.l.b16 %v389
      %v653 = vunpack.c.h.b16 %v389
      %v654 = vunpack.c.l.b16 %v390
      %v655 = vunpack.c.h.b16 %v390
      %v656 = vunpack.c.l.b16 %v391
      %v657 = vunpack.c.h.b16 %v391
      %v658 = vunpack.c.l.b16 %v392
      %v659 = vunpack.c.h.b16 %v392
      %v660 = vunpack.c.l.b16 %v393
      %v661 = vunpack.c.h.b16 %v393
      %v662 = vunpack.c.l.b16 %v394
      %v663 = vunpack.c.h.b16 %v394
      %v664 = vunpack.c.l.b16 %v395
      %v665 = vunpack.c.h.b16 %v395
      %v666 = vunpack.c.l.b16 %v396
      %v667 = vunpack.c.h.b16 %v396
      %v668 = vunpack.c.l.b16 %v397
      %v669 = vunpack.c.h.b16 %v397
      %v670 = vunpack.c.l.b16 %v398
      %v671 = vunpack.c.h.b16 %v398
      %v672 = vunpack.c.l.b16 %v399
      %v673 = vunpack.c.h.b16 %v399
      %v674 = vunpack.c.l.b16 %v400
      %v675 = vunpack.c.h.b16 %v400
      %v676 = vunpack.c.l.b16 %v401
      %v677 = vunpack.c.h.b16 %v401
      %v678 = vunpack.c.l.b16 %v402
      %v679 = vunpack.c.h.b16 %v402
      %v680 = vunpack.c.l.b16 %v403
      %v681 = vunpack.c.h.b16 %v403
      %v682 = vunpack.c.l.b16 %v404
      %v683 = vunpack.c.h.b16 %v404
      %v684 = vunpack.c.l.b16 %v405
      %v685 = vunpack.c.h.b16 %v405
      %v686 = vunpack.c.l.b16 %v406
      %v687 = vunpack.c.h.b16 %v406
      %v688 = vunpack.c.l.b16 %v407
      %v689 = vunpack.c.h.b16 %v407
      %v690 = vunpack.c.l.b16 %v408
      %v691 = vunpack.c.h.b16 %v408
      %v692 = vunpack.c.l.b16 %v409
      %v693 = vunpack.c.h.b16 %v409
      %v694 = vunpack.c.l.b16 %v410
      %v695 = vunpack.c.h.b16 %v410
      %v696 = vunpack.c.l.b16 %v411
      %v697 = vunpack.c.h.b16 %v411
      %v698 = vunpack.c.l.b16 %v412
      %v699 = vunpack.c.h.b16 %v412
      %v700 = vunpack.c.l.b16 %v413
      %v701 = vunpack.c.h.b16 %v413
      %v702 = vunpack.c.l.b16 %v414
      %v703 = vunpack.c.h.b16 %v414
      %v704 = vunpack.c.l.b16 %v415
      %v705 = vunpack.c.h.b16 %v415
      %v706 = vunpack.c.l.b16 %v416
      %v707 = vunpack.c.h.b16 %v416
      %v708 = vunpack.c.l.b16 %v417
      %v709 = vunpack.c.h.b16 %v417
      %v710 = vunpack.c.l.b16 %v418
      %v711 = vunpack.c.h.b16 %v418
      %v712 = vunpack.c.l.b16 %v419
      %v713 = vunpack.c.h.b16 %v419
      %v714 = vunpack.c.l.b16 %v420
      %v715 = vunpack.c.h.b16 %v420
      %v716 = vunpack.c.l.b16 %v421
      %v717 = vunpack.c.h.b16 %v421
      %v718 = vunpack.c.l.b16 %v422
      %v719 = vunpack.c.h.b16 %v422
      %v720 = vunpack.c.l.b16 %v423
      %v721 = vunpack.c.h.b16 %v423
      %v722 = vunpack.c.l.b16 %v424
      %v723 = vunpack.c.h.b16 %v424
      %v724 = vunpack.c.l.b16 %v425
      %v725 = vunpack.c.h.b16 %v425
      %v726 = vunpack.c.l.b16 %v426
      %v727 = vunpack.c.h.b16 %v426
      %v728 = vunpack.c.l.b16 %v427
      %v729 = vunpack.c.h.b16 %v427
      %v730 = vunpack.c.l.b16 %v428
      %v731 = vunpack.c.h.b16 %v428
      %v732 = vunpack.c.l.b16 %v429
      %v733 = vunpack.c.h.b16 %v429
      %v734 = vunpack.c.l.b16 %v430
      %v735 = vunpack.c.h.b16 %v430
      %v736 = vunpack.c.l.b16 %v431
      %v737 = vunpack.c.h.b16 %v431
      %v738 = vunpack.c.l.b16 %v432
      %v739 = vunpack.c.h.b16 %v432
      %v740 = vunpack.c.l.b16 %v433
      %v741 = vunpack.c.h.b16 %v433
      %v742 = vunpack.c.l.b16 %v434
      %v743 = vunpack.c.h.b16 %v434
      %v744 = vunpack.c.l.b16 %v435
      %v745 = vunpack.c.h.b16 %v435
      %v746 = vunpack.c.l.b16 %v436
      %v747 = vunpack.c.h.b16 %v436
      %v748 = vunpack.c.l.b16 %v437
      %v749 = vunpack.c.h.b16 %v437
      %v750 = vunpack.c.l.b16 %v438
      %v751 = vunpack.c.h.b16 %v438
      %v752 = vunpack.c.l.b16 %v439
      %v753 = vunpack.c.h.b16 %v439
      %v754 = vunpack.c.l.b16 %v440
      %v755 = vunpack.c.h.b16 %v440
      %v756 = vunpack.c.l.b16 %v441
      %v757 = vunpack.c.h.b16 %v441
      %v758 = vunpack.c.l.b16 %v442
      %v759 = vunpack.c.h.b16 %v442
      %v760 = vunpack.c.l.b16 %v443
      %v761 = vunpack.c.h.b16 %v443
      %v762 = vunpack.c.l.b16 %v444
      %v763 = vunpack.c.h.b16 %v444
      %v764 = vunpack.c.l.b16 %v445
      %v765 = vunpack.c.h.b16 %v445
      %v766 = vunpack.c.l.b16 %v446
      %v767 = vunpack.c.h.b16 %v446
      %v768 = vunpack.c.l.b16 %v447
      %v769 = vunpack.c.h.b16 %v447
      %v770 = vunpack.c.l.b16 %v448
      %v771 = vunpack.c.h.b16 %v448
      %v772 = vunpack.c.l.b16 %v449
      %v773 = vunpack.c.h.b16 %v449
      %v774 = vunpack.c.l.b16 %v450
      %v775 = vunpack.c.h.b16 %v450
      %v776 = vunpack.c.l.b16 %v451
      %v777 = vunpack.c.h.b16 %v451
      %v778 = vunpack.c.l.b16 %v452
      %v779 = vunpack.c.h.b16 %v452
      %v780 = vunpack.c.l.b16 %v453
      %v781 = vunpack.c.h.b16 %v453
      %v782 = vunpack.c.l.b16 %v454
      %v783 = vunpack.c.h.b16 %v454
      %v784 = vunpack.c.l.b16 %v455
      %v785 = vunpack.c.h.b16 %v455
      %v786 = vunpack.c.l.b16 %v456
      %v787 = vunpack.c.h.b16 %v456
      %v788 = vunpack.c.l.b16 %v457
      %v789 = vunpack.c.h.b16 %v457
      %v790 = vunpack.c.l.b16 %v458
      %v791 = vunpack.c.h.b16 %v458
      %v792 = vunpack.c.l.b16 %v459
      %v793 = vunpack.c.h.b16 %v459
      %v794 = vunpack.c.l.b16 %v460
      %v795 = vunpack.c.h.b16 %v460
      %v796 = vunpack.c.l.b16 %v461
      %v797 = vunpack.c.h.b16 %v461
      %v798 = vunpack.c.l.b16 %v462
      %v799 = vunpack.c.h.b16 %v462
      %v800 = vunpack.c.l.b16 %v463
      %v801 = vunpack.c.h.b16 %v463
      %v802 = vunpack.c.l.b16 %v464
      %v803 = vunpack.c.h.b16 %v464
      %v804 = vunpack.c.l.b16 %v465
      %v805 = vunpack.c.h.b16 %v465
      %v806 = vunpack.c.l.b16 %v466
      %v807 = vunpack.c.h.b16 %v466
      %v808 = vunpack.c.l.b16 %v467
      %v809 = vunpack.c.h.b16 %v467
      %v810 = vunpack.c.l.b16 %v468
      %v811 = vunpack.c.h.b16 %v468
      %v812 = vunpack.c.l.b16 %v469
      %v813 = vunpack.c.h.b16 %v469
      %v814 = vunpack.c.l.b16 %v470
      %v815 = vunpack.c.h.b16 %v470
      %v816 = vunpack.c.l.b16 %v471
      %v817 = vunpack.c.h.b16 %v471
      %v818 = vunpack.c.l.b16 %v472
      %v819 = vunpack.c.h.b16 %v472
      %v820 = vunpack.c.l.b16 %v473
      %v821 = vunpack.c.h.b16 %v473
      %v822 = vunpack.c.l.b16 %v474
      %v823 = vunpack.c.h.b16 %v474
      %v824 = vunpack.c.l.b16 %v475
      %v825 = vunpack.c.h.b16 %v475
      %v826 = vunpack.c.l.b16 %v476
      %v827 = vunpack.c.h.b16 %v476
      %v828 = vunpack.c.l.b16 %v477
      %v829 = vunpack.c.h.b16 %v477
      %v830 = vunpack.c.l.b16 %v478
      %v831 = vunpack.c.h.b16 %v478
      %v832 = vunpack.c.l.b16 %v479
      %v833 = vunpack.c.h.b16 %v479
      %v834 = vunpack.c.l.b16 %v480
      %v835 = vunpack.c.h.b16 %v480
      %v836 = vunpack.c.l.b16 %v481
      %v837 = vunpack.c.h.b16 %v481
      %v838 = vunpack.c.l.b16 %v482
      %v839 = vunpack.c.h.b16 %v482
      %v840 = vunpack.c.l.b16 %v483
      %v841 = vunpack.c.h.b16 %v483
      %v842 = vunpack.c.l.b16 %v484
      %v843 = vunpack.c.h.b16 %v484
      %v844 = vunpack.c.l.b16 %v485
      %v845 = vunpack.c.h.b16 %v485
      %v846 = vunpack.c.l.b16 %v486
      %v847 = vunpack.c.h.b16 %v486
      %v848 = vunpack.c.l.b16 %v487
      %v849 = vunpack.c.h.b16 %v487
      %v850 = vunpack.c.l.b16 %v488
      %v851 = vunpack.c.h.b16 %v488
      %v852 = vunpack.c.l.b16 %v489
      %v853 = vunpack.c.h.b16 %v489
      %v854 = vunpack.c.l.b16 %v490
      %v855 = vunpack.c.h.b16 %v490
      %v856 = vunpack.c.l.b16 %v491
      %v857 = vunpack.c.h.b16 %v491
      %v858 = vunpack.c.l.b16 %v492
      %v859 = vunpack.c.h.b16 %v492
      %v860 = vunpack.c.l.b16 %v493
      %v861 = vunpack.c.h.b16 %v493
      %v862 = vunpack.c.l.b16 %v494
      %v863 = vunpack.c.h.b16 %v494
      %v864 = vunpack.c.l.b16 %v495
      %v865 = vunpack.c.h.b16 %v495
      %v866 = vunpack.c.l.b16 %v496
      %v867 = vunpack.c.h.b16 %v496
      %v868 = vunpack.c.l.b16 %v497
      %v869 = vunpack.c.h.b16 %v497
      %v870 = vunpack.c.l.b16 %v498
      %v871 = vunpack.c.h.b16 %v498
      %v872 = vunpack.c.l.b16 %v499
      %v873 = vunpack.c.h.b16 %v499
      %v874 = vunpack.c.l.b16 %v500
      %v875 = vunpack.c.h.b16 %v500
      %v876 = vunpack.c.l.b16 %v501
      %v877 = vunpack.c.h.b16 %v501
      %v878 = vunpack.c.l.b16 %v502
      %v879 = vunpack.c.h.b16 %v502
      %v880 = vunpack.c.l.b16 %v503
      %v881 = vunpack.c.h.b16 %v503
      %v882 = vunpack.c.l.b16 %v504
      %v883 = vunpack.c.h.b16 %v504
      %v884 = vunpack.c.l.b16 %v505
      %v885 = vunpack.c.h.b16 %v505
      %v886 = vunpack.c.l.b16 %v506
      %v887 = vunpack.c.h.b16 %v506
      %v888 = vunpack.c.l.b16 %v507
      %v889 = vunpack.c.h.b16 %v507
      %v890 = vunpack.c.l.b16 %v508
      %v891 = vunpack.c.h.b16 %v508
      %v892 = vunpack.c.l.b16 %v509
      %v893 = vunpack.c.h.b16 %v509
      %v894 = vunpack.c.l.b16 %v510
      %v895 = vunpack.c.h.b16 %v510
      %v896 = vunpack.c.l.b16 %v511
      %v897 = vunpack.c.h.b16 %v511
      %v898 = vunpack.c.l.b16 %v512
      %v899 = vunpack.c.h.b16 %v512
      %v900 = vunpack.c.l.b16 %v513
      %v901 = vunpack.c.h.b16 %v513
      %v902 = vunpack.c.l.b16 %v514
      %v903 = vunpack.c.h.b16 %v514
      %v904 = vunpack.c.l.b16 %v515
      %v905 = vunpack.c.h.b16 %v515
      %v906 = vunpack.c.l.b16 %v516
      %v907 = vunpack.c.h.b16 %v516
      %v908 = vpack.c.b16 %v660, %v652
      %v909 = vpack.c.b16 %v661, %v653
      %v910 = vpack.c.b16 %v662, %v654
      %v911 = vpack.c.b16 %v663, %v655
      %v912 = vpack.c.b16 %v664, %v656
      %v913 = vpack.c.b16 %v665, %v657
      %v914 = vpack.c.b16 %v666, %v658
      %v915 = vpack.c.b16 %v667, %v659
      %v916 = vpack.c.b16 %v676, %v668
      %v917 = vpack.c.b16 %v677, %v669
      %v918 = vpack.c.b16 %v678, %v670
      %v919 = vpack.c.b16 %v679, %v671
      %v920 = vpack.c.b16 %v680, %v672
      %v921 = vpack.c.b16 %v681, %v673
      %v922 = vpack.c.b16 %v682, %v674
      %v923 = vpack.c.b16 %v683, %v675
      %v924 = vpack.c.b16 %v692, %v684
      %v925 = vpack.c.b16 %v693, %v685
      %v926 = vpack.c.b16 %v694, %v686
      %v927 = vpack.c.b16 %v695, %v687
      %v928 = vpack.c.b16 %v696, %v688
      %v929 = vpack.c.b16 %v697, %v689
      %v930 = vpack.c.b16 %v698, %v690
      %v931 = vpack.c.b16 %v699, %v691
      %v932 = vpack.c.b16 %v708, %v700
      %v933 = vpack.c.b16 %v709, %v701
      %v934 = vpack.c.b16 %v710, %v702
      %v935 = vpack.c.b16 %v711, %v703
      %v936 = vpack.c.b16 %v712, %v704
      %v937 = vpack.c.b16 %v713, %v705
      %v938 = vpack.c.b16 %v714, %v706
      %v939 = vpack.c.b16 %v715, %v707
      %v940 = vpack.c.b16 %v724, %v716
      %v941 = vpack.c.b16 %v725, %v717
      %v942 = vpack.c.b16 %v726, %v718
      %v943 = vpack.c.b16 %v727, %v719
      %v944 = vpack.c.b16 %v728, %v720
      %v945 = vpack.c.b16 %v729, %v721
      %v946 = vpack.c.b16 %v730, %v722
      %v947 = vpack.c.b16 %v731, %v723
      %v948 = vpack.c.b16 %v740, %v732
      %v949 = vpack.c.b16 %v741, %v733
      %v950 = vpack.c.b16 %v742, %v734
      %v951 = vpack.c.b16 %v743, %v735
      %v952 = vpack.c.b16 %v744, %v736
      %v953 = vpack.c.b16 %v745, %v737
      %v954 = vpack.c.b16 %v746, %v738
      %v955 = vpack.c.b16 %v747, %v739
      %v956 = vpack.c.b16 %v756, %v748
      %v957 = vpack.c.b16 %v757, %v749
      %v958 = vpack.c.b16 %v758, %v750
      %v959 = vpack.c.b16 %v759, %v751
      %v960 = vpack.c.b16 %v760, %v752
      %v961 = vpack.c.b16 %v761, %v753
      %v962 = vpack.c.b16 %v762, %v754
      %v963 = vpack.c.b16 %v763, %v755
      %v964 = vpack.c.b16 %v772, %v764
      %v965 = vpack.c.b16 %v773, %v765
      %v966 = vpack.c.b16 %v774, %v766
      %v967 = vpack.c.b16 %v775, %v767
      %v968 = vpack.c.b16 %v776, %v768
      %v969 = vpack.c.b16 %v777, %v769
      %v970 = vpack.c.b16 %v778, %v770
      %v971 = vpack.c.b16 %v779, %v771
      %v972 = vpack.c.b16 %v788, %v780
      %v973 = vpack.c.b16 %v789, %v781
      %v974 = vpack.c.b16 %v790, %v782
      %v975 = vpack.c.b16 %v791, %v783
      %v976 = vpack.c.b16 %v792, %v784
      %v977 = vpack.c.b16 %v793, %v785
      %v978 = vpack.c.b16 %v794, %v786
      %v979 = vpack.c.b16 %v795, %v787
      %v980 = vpack.c.b16 %v804, %v796
      %v981 = vpack.c.b16 %v805, %v797
      %v982 = vpack.c.b16 %v806, %v798
      %v983 = vpack.c.b16 %v807, %v799
      %v984 = vpack.c.b16 %v808, %v800
      %v985 = vpack.c.b16 %v809, %v801
      %v986 = vpack.c.b16 %v810, %v802
      %v987 = vpack.c.b16 %v811, %v803
      %v988 = vpack.c.b16 %v820, %v812
      %v989 = vpack.c.b16 %v821, %v813
      %v990 = vpack.c.b16 %v822, %v814
      %v991 = vpack.c.b16 %v823, %v815
      %v992 = vpack.c.b16 %v824, %v816
      %v993 = vpack.c.b16 %v825, %v817
      %v994 = vpack.c.b16 %v826, %v818
      %v995 = vpack.c.b16 %v827, %v819
      %v996 = vpack.c.b16 %v836, %v828
      %v997 = vpack.c.b16 %v837, %v829
      %v998 = vpack.c.b16 %v838, %v830
      %v999 = vpack.c.b16 %v839, %v831
      %v1000 = vpack.c.b16 %v840, %v832
      %v1001 = vpack.c.b16 %v841, %v833
      %v1002 = vpack.c.b16 %v842, %v834
      %v1003 = vpack.c.b16 %v843, %v835
      %v1004 = vpack.c.b16 %v852, %v844
      %v1005 = vpack.c.b16 %v853, %v845
      %v1006 = vpack.c.b16 %v854, %v846
      %v1007 = vpack.c.b16 %v855, %v847
      %v1008 = vpack.c.b16 %v856, %v848
      %v1009 = vpack.c.b16 %v857, %v849
      %v1010 = vpack.c.b16 %v858, %v850
      %v1011 = vpack.c.b16 %v859, %v851
      %v1012 = vpack.c.b16 %v868, %v860
      %v1013 = vpack.c.b16 %v869, %v861
      %v1014 = vpack.c.b16 %v870, %v862
      %v1015 = vpack.c.b16 %v871, %v863
      %v1016 = vpack.c.b16 %v872, %v864
      %v1017 = vpack.c.b16 %v873, %v865
      %v1018 = vpack.c.b16 %v874, %v866
      %v1019 = vpack.c.b16 %v875, %v867
      %v1020 = vpack.c.b16 %v884, %v876
      %v1021 = vpack.c.b16 %v885, %v877
      %v1022 = vpack.c.b16 %v886, %v878
      %v1023 = vpack.c.b16 %v887, %v879
      %v1024 = vpack.c.b16 %v888, %v880
      %v1025 = vpack.c.b16 %v889, %v881
      %v1026 = vpack.c.b16 %v890, %v882
      %v1027 = vpack.c.b16 %v891, %v883
      %v1028 = vpack.c.b16 %v900, %v892
      %v1029 = vpack.c.b16 %v901, %v893
      %v1030 = vpack.c.b16 %v902, %v894
      %v1031 = vpack.c.b16 %v903, %v895
      %v1032 = vpack.c.b16 %v904, %v896
      %v1033 = vpack.c.b16 %v905, %v897
      %v1034 = vpack.c.b16 %v906, %v898
      %v1035 = vpack.c.b16 %v907, %v899
      %1164 = vmatprep.subr.bf16.mxu0 %v909
      %1165 = vmatpush1.bf16.msra.mxu0 %v908
      %1166 = vmatprep.subr.bf16.mxu0 %v917
      %1167 = vmatpush1.bf16.msra.mxu0 %v916
      %1168 = vmatprep.subr.bf16.mxu0 %v925
      %1169 = vmatpush1.bf16.msra.mxu0 %v924
      %1170 = vmatprep.subr.bf16.mxu0 %v933
      %1171 = vmatpush1.bf16.msra.mxu0 %v932
      %1172 = vmatprep.subr.bf16.mxu0 %v941
      %1173 = vmatpush1.bf16.msra.mxu0 %v940
      %1174 = vmatprep.subr.bf16.mxu0 %v949
      %1175 = vmatpush1.bf16.msra.mxu0 %v948
      %1176 = vmatprep.subr.bf16.mxu0 %v957
      %1177 = vmatpush1.bf16.msra.mxu0 %v956
      %1178 = vmatprep.subr.bf16.mxu0 %v965
      %1179 = vmatpush1.bf16.msra.mxu0 %v964
      %1180 = vmatprep.subr.bf16.mxu0 %v973
      %1181 = vmatpush1.bf16.msra.mxu0 %v972
      %1182 = vmatprep.subr.bf16.mxu0 %v981
      %1183 = vmatpush1.bf16.msra.mxu0 %v980
      %1184 = vmatprep.subr.bf16.mxu0 %v989
      %1185 = vmatpush1.bf16.msra.mxu0 %v988
      %1186 = vmatprep.subr.bf16.mxu0 %v997
      %1187 = vmatpush1.bf16.msra.mxu0 %v996
      %1188 = vmatprep.subr.bf16.mxu0 %v1005
      %1189 = vmatpush1.bf16.msra.mxu0 %v1004
      %1190 = vmatprep.subr.bf16.mxu0 %v1013
      %1191 = vmatpush1.bf16.msra.mxu0 %v1012
      %1192 = vmatprep.subr.bf16.mxu0 %v1021
      %1193 = vmatpush1.bf16.msra.mxu0 %v1020
      %1194 = vmatprep.subr.bf16.mxu0 %v1029
      %1195 = vmatpush1.bf16.msra.mxu0 %v1028
      %1196 = vmatprep.mubr.bf16.mxu0 %v521
      %1197 = vmatmul.mubr.bf16.gmra.mrb[0].mxu0 %v520
      %v1198 = vpop.f32.mrb[0].mxu0
      %v1199 = vadd.f32 0.0, %v1198
      %v1200 = vpop.f32.mrb[0].mxu0
      %v1201 = vadd.f32 0.0, %v1200
      %v1202 = vpop.f32.mrb[0].mxu0
      %v1203 = vpop.f32.mrb[0].mxu0
      %1204 = vdwg.mxu0
      %1205 = vmatprep.subr.bf16.mxu0 %v911
      %1206 = vmatpush1.bf16.msra.mxu0 %v910
      %1207 = vmatprep.subr.bf16.mxu0 %v919
      %1208 = vmatpush1.bf16.msra.mxu0 %v918
      %1209 = vmatprep.subr.bf16.mxu0 %v927
      %1210 = vmatpush1.bf16.msra.mxu0 %v926
      %1211 = vmatprep.subr.bf16.mxu0 %v935
      %1212 = vmatpush1.bf16.msra.mxu0 %v934
      %1213 = vmatprep.subr.bf16.mxu0 %v943
      %1214 = vmatpush1.bf16.msra.mxu0 %v942
      %1215 = vmatprep.subr.bf16.mxu0 %v951
      %1216 = vmatpush1.bf16.msra.mxu0 %v950
      %1217 = vmatprep.subr.bf16.mxu0 %v959
      %1218 = vmatpush1.bf16.msra.mxu0 %v958
      %1219 = vmatprep.subr.bf16.mxu0 %v967
      %1220 = vmatpush1.bf16.msra.mxu0 %v966
      %1221 = vmatprep.subr.bf16.mxu0 %v975
      %1222 = vmatpush1.bf16.msra.mxu0 %v974
      %1223 = vmatprep.subr.bf16.mxu0 %v983
      %1224 = vmatpush1.bf16.msra.mxu0 %v982
      %1225 = vmatprep.subr.bf16.mxu0 %v991
      %1226 = vmatpush1.bf16.msra.mxu0 %v990
      %1227 = vmatprep.subr.bf16.mxu0 %v999
      %1228 = vmatpush1.bf16.msra.mxu0 %v998
      %1229 = vmatprep.subr.bf16.mxu0 %v1007
      %1230 = vmatpush1.bf16.msra.mxu0 %v1006
      %1231 = vmatprep.subr.bf16.mxu0 %v1015
      %1232 = vmatpush1.bf16.msra.mxu0 %v1014
      %1233 = vmatprep.subr.bf16.mxu0 %v1023
      %1234 = vmatpush1.bf16.msra.mxu0 %v1022
      %1235 = vmatprep.subr.bf16.mxu0 %v1031
      %1236 = vmatpush1.bf16.msra.mxu0 %v1030
      %1237 = vmatprep.mubr.bf16.mxu0 %v521
      %1238 = vmatmul.mubr.bf16.gmra.mrb[0].mxu0 %v520
      %v1239 = vpop.f32.mrb[0].mxu0
      %v1240 = vadd.f32 0.0, %v1239
      %v1241 = vpop.f32.mrb[0].mxu0
      %v1242 = vadd.f32 0.0, %v1241
      %v1243 = vpop.f32.mrb[0].mxu0
      %v1244 = vpop.f32.mrb[0].mxu0
      %1245 = vdwg.mxu0
      %1246 = vmatprep.subr.bf16.mxu0 %v913
      %1247 = vmatpush1.bf16.msra.mxu0 %v912
      %1248 = vmatprep.subr.bf16.mxu0 %v921
      %1249 = vmatpush1.bf16.msra.mxu0 %v920
      %1250 = vmatprep.subr.bf16.mxu0 %v929
      %1251 = vmatpush1.bf16.msra.mxu0 %v928
      %1252 = vmatprep.subr.bf16.mxu0 %v937
      %1253 = vmatpush1.bf16.msra.mxu0 %v936
      %1254 = vmatprep.subr.bf16.mxu0 %v945
      %1255 = vmatpush1.bf16.msra.mxu0 %v944
      %1256 = vmatprep.subr.bf16.mxu0 %v953
      %1257 = vmatpush1.bf16.msra.mxu0 %v952
      %1258 = vmatprep.subr.bf16.mxu0 %v961
      %1259 = vmatpush1.bf16.msra.mxu0 %v960
      %1260 = vmatprep.subr.bf16.mxu0 %v969
      %1261 = vmatpush1.bf16.msra.mxu0 %v968
      %1262 = vmatprep.subr.bf16.mxu0 %v977
      %1263 = vmatpush1.bf16.msra.mxu0 %v976
      %1264 = vmatprep.subr.bf16.mxu0 %v985
      %1265 = vmatpush1.bf16.msra.mxu0 %v984
      %1266 = vmatprep.subr.bf16.mxu0 %v993
      %1267 = vmatpush1.bf16.msra.mxu0 %v992
      %1268 = vmatprep.subr.bf16.mxu0 %v1001
      %1269 = vmatpush1.bf16.msra.mxu0 %v1000
      %1270 = vmatprep.subr.bf16.mxu0 %v1009
      %1271 = vmatpush1.bf16.msra.mxu0 %v1008
      %1272 = vmatprep.subr.bf16.mxu0 %v1017
      %1273 = vmatpush1.bf16.msra.mxu0 %v1016
      %1274 = vmatprep.subr.bf16.mxu0 %v1025
      %1275 = vmatpush1.bf16.msra.mxu0 %v1024
      %1276 = vmatprep.subr.bf16.mxu0 %v1033
      %1277 = vmatpush1.bf16.msra.mxu0 %v1032
      %1278 = vmatprep.mubr.bf16.mxu0 %v521
      %1279 = vmatmul.mubr.bf16.gmra.mrb[0].mxu0 %v520
      %v1280 = vpop.f32.mrb[0].mxu0
      %v1281 = vadd.f32 0.0, %v1280
      %v1282 = vpop.f32.mrb[0].mxu0
      %v1283 = vadd.f32 0.0, %v1282
      %v1284 = vpop.f32.mrb[0].mxu0
      %v1285 = vpop.f32.mrb[0].mxu0
      %1286 = vdwg.mxu0
      %1287 = vmatprep.subr.bf16.mxu0 %v915
      %1288 = vmatpush1.bf16.msra.mxu0 %v914
      %1289 = vmatprep.subr.bf16.mxu0 %v923
      %1290 = vmatpush1.bf16.msra.mxu0 %v922
      %1291 = vmatprep.subr.bf16.mxu0 %v931
      %1292 = vmatpush1.bf16.msra.mxu0 %v930
      %1293 = vmatprep.subr.bf16.mxu0 %v939
      %1294 = vmatpush1.bf16.msra.mxu0 %v938
      %1295 = vmatprep.subr.bf16.mxu0 %v947
      %1296 = vmatpush1.bf16.msra.mxu0 %v946
      %1297 = vmatprep.subr.bf16.mxu0 %v955
      %1298 = vmatpush1.bf16.msra.mxu0 %v954
      %1299 = vmatprep.subr.bf16.mxu0 %v963
      %1300 = vmatpush1.bf16.msra.mxu0 %v962
      %1301 = vmatprep.subr.bf16.mxu0 %v971
      %1302 = vmatpush1.bf16.msra.mxu0 %v970
      %1303 = vmatprep.subr.bf16.mxu0 %v979
      %1304 = vmatpush1.bf16.msra.mxu0 %v978
      %1305 = vmatprep.subr.bf16.mxu0 %v987
      %1306 = vmatpush1.bf16.msra.mxu0 %v986
      %1307 = vmatprep.subr.bf16.mxu0 %v995
      %1308 = vmatpush1.bf16.msra.mxu0 %v994
      %1309 = vmatprep.subr.bf16.mxu0 %v1003
      %1310 = vmatpush1.bf16.msra.mxu0 %v1002
      %1311 = vmatprep.subr.bf16.mxu0 %v1011
      %1312 = vmatpush1.bf16.msra.mxu0 %v1010
      %1313 = vmatprep.subr.bf16.mxu0 %v1019
      %1314 = vmatpush1.bf16.msra.mxu0 %v1018
      %1315 = vmatprep.subr.bf16.mxu0 %v1027
      %1316 = vmatpush1.bf16.msra.mxu0 %v1026
      %1317 = vmatprep.subr.bf16.mxu0 %v1035
      %1318 = vmatpush1.bf16.msra.mxu0 %v1034
      %1319 = vmatprep.mubr.bf16.mxu0 %v521
      %1320 = vmatmul.mubr.bf16.gmra.mrb[0].mxu0 %v520
      %v1321 = vpop.f32.mrb[0].mxu0
      %v1322 = vadd.f32 0.0, %v1321
      %v1323 = vpop.f32.mrb[0].mxu0
      %v1324 = vadd.f32 0.0, %v1323
      %v1325 = vpop.f32.mrb[0].mxu0
      %v1326 = vpop.f32.mrb[0].mxu0
      %1327 = vdwg.mxu0
      %v1328 = vpack.c.bf16 %v1199, %v1199
      %v1329 = vpack.c.bf16 %v1201, %v1201
      %v1330 = vpack.c.bf16 %v1240, %v1240
      %v1331 = vpack.c.bf16 %v1242, %v1242
      %v1332 = vpack.c.bf16 %v1281, %v1281
      %v1333 = vpack.c.bf16 %v1283, %v1283
      %v1334 = vpack.c.bf16 %v1322, %v1322
      %v1335 = vpack.c.bf16 %v1324, %v1324
      %v1336 = vld [vmem:[%s2] sm:$0x1]
      %v1337 = vld [vmem:[%s3] sm:$0x3]
      %1339 = vset.pattern.permute.xlu0 0
      %1340 = vperm.xlu0 %1339, %v1337
      %v1341 = vpop.permute.xlu0 %1340
      %vm1343 = vcmask 64512
      %v1345 = vsel %vm1343, %v1336, 0
      %vm1347 = vcmask 1043456
      %v1349 = vsel %vm1347, %v1328, 0
      %v1352 = vsel %vm1347, %v1329, 0
      %v1355 = vsel %vm1347, %v1330, 0
      %v1358 = vsel %vm1347, %v1331, 0
      %v1361 = vsel %vm1347, %v1332, 0
      %v1364 = vsel %vm1347, %v1333, 0
      %v1367 = vsel %vm1347, %v1334, 0
      %v1370 = vsel %vm1347, %v1335, 0
      %1372 = vmatprep.subr.bf16.mxu0 %v1352
      %1373 = vmatpush1.bf16.msra.mxu0 %v1349
      %1374 = vmatprep.subr.bf16.mxu0 0
      %1375 = vmatpush1.bf16.msra.mxu0 0
      %1376 = vmatprep.subr.bf16.mxu0 0
      %1377 = vmatpush1.bf16.msra.mxu0 0
      %1378 = vmatprep.subr.bf16.mxu0 0
      %1379 = vmatpush1.bf16.msra.mxu0 0
      %1380 = vmatprep.subr.bf16.mxu0 0
      %1381 = vmatpush1.bf16.msra.mxu0 0
      %1382 = vmatprep.subr.bf16.mxu0 0
      %1383 = vmatpush1.bf16.msra.mxu0 0
      %1384 = vmatprep.subr.bf16.mxu0 0
      %1385 = vmatpush1.bf16.msra.mxu0 0
      %1386 = vmatprep.subr.bf16.mxu0 0
      %1387 = vmatpush1.bf16.msra.mxu0 0
      %1388 = vmatprep.subr.bf16.mxu0 0
      %1389 = vmatpush1.bf16.msra.mxu0 0
      %1390 = vmatprep.subr.bf16.mxu0 0
      %1391 = vmatpush1.bf16.msra.mxu0 0
      %1392 = vmatprep.subr.bf16.mxu0 0
      %1393 = vmatpush1.bf16.msra.mxu0 0
      %1394 = vmatprep.subr.bf16.mxu0 0
      %1395 = vmatpush1.bf16.msra.mxu0 0
      %1396 = vmatprep.subr.bf16.mxu0 0
      %1397 = vmatpush1.bf16.msra.mxu0 0
      %1398 = vmatprep.subr.bf16.mxu0 0
      %1399 = vmatpush1.bf16.msra.mxu0 0
      %1400 = vmatprep.subr.bf16.mxu0 0
      %1401 = vmatpush1.bf16.msra.mxu0 0
      %1402 = vmatprep.subr.bf16.mxu0 0
      %1403 = vmatpush1.bf16.msra.mxu0 0
      %1404 = vmatprep.mubr.bf16.mxu0 0
      %1405 = vmatmul.mubr.bf16.gmra.mrb[0].mxu0 %v1345
      %v1406 = vpop.f32.mrb[0].mxu0
      %v1407 = vadd.f32 %v1341, %v1406
      %v1408 = vpop.f32.mrb[0].mxu0
      %v1409 = vadd.f32 %v1341, %v1408
      %v1410 = vpop.f32.mrb[0].mxu0
      %v1411 = vpop.f32.mrb[0].mxu0
      %1412 = vdwg.mxu0
      %1413 = vmatprep.subr.bf16.mxu0 %v1358
      %1414 = vmatpush1.bf16.msra.mxu0 %v1355
      %1415 = vmatprep.subr.bf16.mxu0 0
      %1416 = vmatpush1.bf16.msra.mxu0 0
      %1417 = vmatprep.subr.bf16.mxu0 0
      %1418 = vmatpush1.bf16.msra.mxu0 0
      %1419 = vmatprep.subr.bf16.mxu0 0
      %1420 = vmatpush1.bf16.msra.mxu0 0
      %1421 = vmatprep.subr.bf16.mxu0 0
      %1422 = vmatpush1.bf16.msra.mxu0 0
      %1423 = vmatprep.subr.bf16.mxu0 0
      %1424 = vmatpush1.bf16.msra.mxu0 0
      %1425 = vmatprep.subr.bf16.mxu0 0
      %1426 = vmatpush1.bf16.msra.mxu0 0
      %1427 = vmatprep.subr.bf16.mxu0 0
      %1428 = vmatpush1.bf16.msra.mxu0 0
      %1429 = vmatprep.subr.bf16.mxu0 0
      %1430 = vmatpush1.bf16.msra.mxu0 0
      %1431 = vmatprep.subr.bf16.mxu0 0
      %1432 = vmatpush1.bf16.msra.mxu0 0
      %1433 = vmatprep.subr.bf16.mxu0 0
      %1434 = vmatpush1.bf16.msra.mxu0 0
      %1435 = vmatprep.subr.bf16.mxu0 0
      %1436 = vmatpush1.bf16.msra.mxu0 0
      %1437 = vmatprep.subr.bf16.mxu0 0
      %1438 = vmatpush1.bf16.msra.mxu0 0
      %1439 = vmatprep.subr.bf16.mxu0 0
      %1440 = vmatpush1.bf16.msra.mxu0 0
      %1441 = vmatprep.subr.bf16.mxu0 0
      %1442 = vmatpush1.bf16.msra.mxu0 0
      %1443 = vmatprep.subr.bf16.mxu0 0
      %1444 = vmatpush1.bf16.msra.mxu0 0
      %1445 = vmatprep.mubr.bf16.mxu0 0
      %1446 = vmatmul.mubr.bf16.gmra.mrb[0].mxu0 %v1345
      %v1447 = vpop.f32.mrb[0].mxu0
      %v1448 = vadd.f32 %v1341, %v1447
      %v1449 = vpop.f32.mrb[0].mxu0
      %v1450 = vadd.f32 %v1341, %v1449
      %v1451 = vpop.f32.mrb[0].mxu0
      %v1452 = vpop.f32.mrb[0].mxu0
      %1453 = vdwg.mxu0
      %1454 = vmatprep.subr.bf16.mxu0 %v1364
      %1455 = vmatpush1.bf16.msra.mxu0 %v1361
      %1456 = vmatprep.subr.bf16.mxu0 0
      %1457 = vmatpush1.bf16.msra.mxu0 0
      %1458 = vmatprep.subr.bf16.mxu0 0
      %1459 = vmatpush1.bf16.msra.mxu0 0
      %1460 = vmatprep.subr.bf16.mxu0 0
      %1461 = vmatpush1.bf16.msra.mxu0 0
      %1462 = vmatprep.subr.bf16.mxu0 0
      %1463 = vmatpush1.bf16.msra.mxu0 0
      %1464 = vmatprep.subr.bf16.mxu0 0
      %1465 = vmatpush1.bf16.msra.mxu0 0
      %1466 = vmatprep.subr.bf16.mxu0 0
      %1467 = vmatpush1.bf16.msra.mxu0 0
      %1468 = vmatprep.subr.bf16.mxu0 0
      %1469 = vmatpush1.bf16.msra.mxu0 0
      %1470 = vmatprep.subr.bf16.mxu0 0
      %1471 = vmatpush1.bf16.msra.mxu0 0
      %1472 = vmatprep.subr.bf16.mxu0 0
      %1473 = vmatpush1.bf16.msra.mxu0 0
      %1474 = vmatprep.subr.bf16.mxu0 0
      %1475 = vmatpush1.bf16.msra.mxu0 0
      %1476 = vmatprep.subr.bf16.mxu0 0
      %1477 = vmatpush1.bf16.msra.mxu0 0
      %1478 = vmatprep.subr.bf16.mxu0 0
      %1479 = vmatpush1.bf16.msra.mxu0 0
      %1480 = vmatprep.subr.bf16.mxu0 0
      %1481 = vmatpush1.bf16.msra.mxu0 0
      %1482 = vmatprep.subr.bf16.mxu0 0
      %1483 = vmatpush1.bf16.msra.mxu0 0
      %1484 = vmatprep.subr.bf16.mxu0 0
      %1485 = vmatpush1.bf16.msra.mxu0 0
      %1486 = vmatprep.mubr.bf16.mxu0 0
      %1487 = vmatmul.mubr.bf16.gmra.mrb[0].mxu0 %v1345
      %v1488 = vpop.f32.mrb[0].mxu0
      %v1489 = vadd.f32 %v1341, %v1488
      %v1490 = vpop.f32.mrb[0].mxu0
      %v1491 = vadd.f32 %v1341, %v1490
      %v1492 = vpop.f32.mrb[0].mxu0
      %v1493 = vpop.f32.mrb[0].mxu0
      %1494 = vdwg.mxu0
      %1495 = vmatprep.subr.bf16.mxu0 %v1370
      %1496 = vmatpush1.bf16.msra.mxu0 %v1367
      %1497 = vmatprep.subr.bf16.mxu0 0
      %1498 = vmatpush1.bf16.msra.mxu0 0
      %1499 = vmatprep.subr.bf16.mxu0 0
      %1500 = vmatpush1.bf16.msra.mxu0 0
      %1501 = vmatprep.subr.bf16.mxu0 0
      %1502 = vmatpush1.bf16.msra.mxu0 0
      %1503 = vmatprep.subr.bf16.mxu0 0
      %1504 = vmatpush1.bf16.msra.mxu0 0
      %1505 = vmatprep.subr.bf16.mxu0 0
      %1506 = vmatpush1.bf16.msra.mxu0 0
      %1507 = vmatprep.subr.bf16.mxu0 0
      %1508 = vmatpush1.bf16.msra.mxu0 0
      %1509 = vmatprep.subr.bf16.mxu0 0
      %1510 = vmatpush1.bf16.msra.mxu0 0
      %1511 = vmatprep.subr.bf16.mxu0 0
      %1512 = vmatpush1.bf16.msra.mxu0 0
      %1513 = vmatprep.subr.bf16.mxu0 0
      %1514 = vmatpush1.bf16.msra.mxu0 0
      %1515 = vmatprep.subr.bf16.mxu0 0
      %1516 = vmatpush1.bf16.msra.mxu0 0
      %1517 = vmatprep.subr.bf16.mxu0 0
      %1518 = vmatpush1.bf16.msra.mxu0 0
      %1519 = vmatprep.subr.bf16.mxu0 0
      %1520 = vmatpush1.bf16.msra.mxu0 0
      %1521 = vmatprep.subr.bf16.mxu0 0
      %1522 = vmatpush1.bf16.msra.mxu0 0
      %1523 = vmatprep.subr.bf16.mxu0 0
      %1524 = vmatpush1.bf16.msra.mxu0 0
      %1525 = vmatprep.subr.bf16.mxu0 0
      %1526 = vmatpush1.bf16.msra.mxu0 0
      %1527 = vmatprep.mubr.bf16.mxu0 0
      %1528 = vmatmul.mubr.bf16.gmra.mrb[0].mxu0 %v1345
      %v1529 = vpop.f32.mrb[0].mxu0
      %v1530 = vadd.f32 %v1341, %v1529
      %v1531 = vpop.f32.mrb[0].mxu0
      %v1532 = vadd.f32 %v1341, %v1531
      %v1533 = vpop.f32.mrb[0].mxu0
      %v1534 = vpop.f32.mrb[0].mxu0
      %1535 = vdwg.mxu0
      %vm1536 = vcmask 1041408
      %v1537 = vsel %vm1536, %v1407, 0.0
      %v1538 = vsel %vm1536, %v1409, 0.0
      %v1539 = vadd.f32 %v1537, %v1538
      %v1540 = vsel %vm1536, %v1448, 0.0
      %v1541 = vadd.f32 %v1539, %v1540
      %v1542 = vsel %vm1536, %v1450, 0.0
      %v1543 = vadd.f32 %v1541, %v1542
      %v1544 = vsel %vm1536, %v1489, 0.0
      %v1545 = vadd.f32 %v1543, %v1544
      %v1546 = vsel %vm1536, %v1491, 0.0
      %v1547 = vadd.f32 %v1545, %v1546
      %v1548 = vsel %vm1536, %v1530, 0.0
      %v1549 = vadd.f32 %v1547, %v1548
      %v1550 = vsel %vm1536, %v1532, 0.0
      %v1551 = vadd.f32 %v1549, %v1550
      %1552 = vadd.xlane.f32.xlu0 %v1551
      %v1553 = vpop.xlane.xlu0 %1552
      %v1554 = vmul.f32 %v1407, %v1407
      %v1555 = vmul.f32 %v1409, %v1409
      %v1556 = vmul.f32 %v1448, %v1448
      %v1557 = vmul.f32 %v1450, %v1450
      %v1558 = vmul.f32 %v1489, %v1489
      %v1559 = vmul.f32 %v1491, %v1491
      %v1560 = vmul.f32 %v1530, %v1530
      %v1561 = vmul.f32 %v1532, %v1532
      %v1562 = vsel %vm1536, %v1554, 0.0
      %v1563 = vsel %vm1536, %v1555, 0.0
      %v1564 = vadd.f32 %v1562, %v1563
      %v1565 = vsel %vm1536, %v1556, 0.0
      %v1566 = vadd.f32 %v1564, %v1565
      %v1567 = vsel %vm1536, %v1557, 0.0
      %v1568 = vadd.f32 %v1566, %v1567
      %v1569 = vsel %vm1536, %v1558, 0.0
      %v1570 = vadd.f32 %v1568, %v1569
      %v1571 = vsel %vm1536, %v1559, 0.0
      %v1572 = vadd.f32 %v1570, %v1571
      %v1573 = vsel %vm1536, %v1560, 0.0
      %v1574 = vadd.f32 %v1572, %v1573
      %v1575 = vsel %vm1536, %v1561, 0.0
      %v1576 = vadd.f32 %v1574, %v1575
      %1577 = vadd.xlane.f32.xlu0 %v1576
      %v1578 = vpop.xlane.xlu0 %1577
      %v1579 = vmul.f32 %v1553, 0.0009765625
      %v1580 = vmul.f32 %v1578, 0.0009765625
      %v1581 = vmul.f32 %v1579, %v1579
      %v1582 = vsub.f32 %v1580, %v1581
      %v1583 = vmax.f32 %v1582, 0.0
      %v1584 = vsub.f32 %v1407, %v1579
      %v1585 = vsub.f32 %v1409, %v1579
      %v1586 = vsub.f32 %v1448, %v1579
      %v1587 = vsub.f32 %v1450, %v1579
      %v1588 = vsub.f32 %v1489, %v1579
      %v1589 = vsub.f32 %v1491, %v1579
      %v1590 = vsub.f32 %v1530, %v1579
      %v1591 = vsub.f32 %v1532, %v1579
      %v1592 = vadd.f32 %v1583, 1e-05
      %v1593 = vrsqrt.pop %v1592
      %v1594 = vmul.f32 %v1584, %v1593
      %v1595 = vmul.f32 %v1585, %v1593
      %v1596 = vmul.f32 %v1586, %v1593
      %v1597 = vmul.f32 %v1587, %v1593
      %v1598 = vmul.f32 %v1588, %v1593
      %v1599 = vmul.f32 %v1589, %v1593
      %v1600 = vmul.f32 %v1590, %v1593
      %v1601 = vmul.f32 %v1591, %v1593
      %v1602 = vmax.f32 %v1594, 0.0
      %v1603 = vmax.f32 %v1595, 0.0
      %v1604 = vmax.f32 %v1596, 0.0
      %v1605 = vmax.f32 %v1597, 0.0
      %v1606 = vmax.f32 %v1598, 0.0
      %v1607 = vmax.f32 %v1599, 0.0
      %v1608 = vmax.f32 %v1600, 0.0
      %v1609 = vmax.f32 %v1601, 0.0
      %v1610 = vld [vmem:[%s4] sm:$0x3]
      %v1611 = vlaneseq
      %v1612 = vand.u32 %v1611, 127
      %v1613 = vadd.s32 %v1612, 128
      %v1614 = vadd.s32 %v1612, 256
      %v1615 = vadd.s32 %v1612, 384
      %v1616 = vadd.s32 %v1612, 512
      %v1617 = vadd.s32 %v1612, 640
      %v1618 = vadd.s32 %v1612, 768
      %v1619 = vadd.s32 %v1612, 896
      %vm1620 = vcmp.lt.s32.totalorder %v1612, 0
      %v1621 = vsub.s32 0, %v1612
      %v1622 = vsel %vm1620, %v1621, %v1612
      %v1623 = vshrl.u32 %v1622, 5
      %v1624 = vand.u32 %v1622, 31
      %v1625 = vsub.s32 0, %v1624
      %v1626 = vsel %vm1620, %v1625, %v1624
      %vm1627 = vcmp.lt.s32.totalorder %v1613, 0
      %v1628 = vsub.s32 0, %v1613
      %v1629 = vsel %vm1627, %v1628, %v1613
      %v1630 = vshrl.u32 %v1629, 5
      %v1631 = vand.u32 %v1629, 31
      %v1632 = vsub.s32 0, %v1631
      %v1633 = vsel %vm1627, %v1632, %v1631
      %vm1634 = vcmp.lt.s32.totalorder %v1614, 0
      %v1635 = vsub.s32 0, %v1614
      %v1636 = vsel %vm1634, %v1635, %v1614
      %v1637 = vshrl.u32 %v1636, 5
      %v1638 = vand.u32 %v1636, 31
      %v1639 = vsub.s32 0, %v1638
      %v1640 = vsel %vm1634, %v1639, %v1638
      %vm1641 = vcmp.lt.s32.totalorder %v1615, 0
      %v1642 = vsub.s32 0, %v1615
      %v1643 = vsel %vm1641, %v1642, %v1615
      %v1644 = vshrl.u32 %v1643, 5
      %v1645 = vand.u32 %v1643, 31
      %v1646 = vsub.s32 0, %v1645
      %v1647 = vsel %vm1641, %v1646, %v1645
      %vm1648 = vcmp.lt.s32.totalorder %v1616, 0
      %v1649 = vsub.s32 0, %v1616
      %v1650 = vsel %vm1648, %v1649, %v1616
      %v1651 = vshrl.u32 %v1650, 5
      %v1652 = vand.u32 %v1650, 31
      %v1653 = vsub.s32 0, %v1652
      %v1654 = vsel %vm1648, %v1653, %v1652
      %vm1655 = vcmp.lt.s32.totalorder %v1617, 0
      %v1656 = vsub.s32 0, %v1617
      %v1657 = vsel %vm1655, %v1656, %v1617
      %v1658 = vshrl.u32 %v1657, 5
      %v1659 = vand.u32 %v1657, 31
      %v1660 = vsub.s32 0, %v1659
      %v1661 = vsel %vm1655, %v1660, %v1659
      %vm1662 = vcmp.lt.s32.totalorder %v1618, 0
      %v1663 = vsub.s32 0, %v1618
      %v1664 = vsel %vm1662, %v1663, %v1618
      %v1665 = vshrl.u32 %v1664, 5
      %v1666 = vand.u32 %v1664, 31
      %v1667 = vsub.s32 0, %v1666
      %v1668 = vsel %vm1662, %v1667, %v1666
      %vm1669 = vcmp.lt.s32.totalorder %v1619, 0
      %v1670 = vsub.s32 0, %v1619
      %v1671 = vsel %vm1669, %v1670, %v1619
      %v1672 = vshrl.u32 %v1671, 5
      %v1673 = vand.u32 %v1671, 31
      %v1674 = vsub.s32 0, %v1673
      %v1675 = vsel %vm1669, %v1674, %v1673
      %vm1676 = vcmp.ne.s32.totalorder %v1626, 0
      %vm1677 = vcmp.ne.s32.totalorder %v1633, 0
      %vm1678 = vcmp.ne.s32.totalorder %v1640, 0
      %vm1679 = vcmp.ne.s32.totalorder %v1647, 0
      %vm1680 = vcmp.ne.s32.totalorder %v1654, 0
      %vm1681 = vcmp.ne.s32.totalorder %v1661, 0
      %vm1682 = vcmp.ne.s32.totalorder %v1668, 0
      %vm1683 = vcmp.ne.s32.totalorder %v1675, 0
      %vm1684 = vcmp.lt.s32.totalorder %v1626, 0
      %vm1685 = vcmp.lt.s32.totalorder %v1633, 0
      %vm1686 = vcmp.lt.s32.totalorder %v1640, 0
      %vm1687 = vcmp.lt.s32.totalorder %v1647, 0
      %vm1688 = vcmp.lt.s32.totalorder %v1654, 0
      %vm1689 = vcmp.lt.s32.totalorder %v1661, 0
      %vm1690 = vcmp.lt.s32.totalorder %v1668, 0
      %vm1691 = vcmp.lt.s32.totalorder %v1675, 0
      %vm1692 = vmand %vm1684, %vm1676
      %vm1693 = vmand %vm1685, %vm1677
      %vm1694 = vmand %vm1686, %vm1678
      %vm1695 = vmand %vm1687, %vm1679
      %vm1696 = vmand %vm1688, %vm1680
      %vm1697 = vmand %vm1689, %vm1681
      %vm1698 = vmand %vm1690, %vm1682
      %vm1699 = vmand %vm1691, %vm1683
      %v1700 = vadd.s32 %v1626, 32
      %v1701 = vadd.s32 %v1633, 32
      %v1702 = vadd.s32 %v1640, 32
      %v1703 = vadd.s32 %v1647, 32
      %v1704 = vadd.s32 %v1654, 32
      %v1705 = vadd.s32 %v1661, 32
      %v1706 = vadd.s32 %v1668, 32
      %v1707 = vadd.s32 %v1675, 32
      %v1708 = vsel %vm1692, %v1700, %v1626
      %v1709 = vsel %vm1693, %v1701, %v1633
      %v1710 = vsel %vm1694, %v1702, %v1640
      %v1711 = vsel %vm1695, %v1703, %v1647
      %v1712 = vsel %vm1696, %v1704, %v1654
      %v1713 = vsel %vm1697, %v1705, %v1661
      %v1714 = vsel %vm1698, %v1706, %v1668
      %v1715 = vsel %vm1699, %v1707, %v1675
      %vm1716 = vcmp.ge.s32.totalorder %v1708, 1
      %vm1717 = vcmp.ge.s32.totalorder %v1709, 1
      %vm1718 = vcmp.ge.s32.totalorder %v1710, 1
      %vm1719 = vcmp.ge.s32.totalorder %v1711, 1
      %vm1720 = vcmp.ge.s32.totalorder %v1712, 1
      %vm1721 = vcmp.ge.s32.totalorder %v1713, 1
      %vm1722 = vcmp.ge.s32.totalorder %v1714, 1
      %vm1723 = vcmp.ge.s32.totalorder %v1715, 1
      %1724 = vrot.lane.b32.xlu0 %v1602, 1
      %v1725 = vpop.permute.xlu0 %1724
      %1726 = vrot.lane.b32.xlu0 %v1603, 1
      %v1727 = vpop.permute.xlu0 %1726
      %1728 = vrot.lane.b32.xlu0 %v1604, 1
      %v1729 = vpop.permute.xlu0 %1728
      %1730 = vrot.lane.b32.xlu0 %v1605, 1
      %v1731 = vpop.permute.xlu0 %1730
      %1732 = vrot.lane.b32.xlu0 %v1606, 1
      %v1733 = vpop.permute.xlu0 %1732
      %1734 = vrot.lane.b32.xlu0 %v1607, 1
      %v1735 = vpop.permute.xlu0 %1734
      %1736 = vrot.lane.b32.xlu0 %v1608, 1
      %v1737 = vpop.permute.xlu0 %1736
      %1738 = vrot.lane.b32.xlu0 %v1609, 1
      %v1739 = vpop.permute.xlu0 %1738
      %vm1740 = vcmp.lt.s32.totalorder %v1612, 1
      %v1741 = vsel %vm1740, %v1737, %v1739
      %v1742 = vsel %vm1740, %v1735, %v1737
      %v1743 = vsel %vm1740, %v1733, %v1735
      %v1744 = vsel %vm1740, %v1731, %v1733
      %v1745 = vsel %vm1740, %v1729, %v1731
      %v1746 = vsel %vm1740, %v1727, %v1729
      %v1747 = vsel %vm1740, %v1725, %v1727
      %v1748 = vsel %vm1740, %v1739, %v1725
      %v1749 = vsel %vm1716, 1, 0
      %v1750 = vsel %vm1717, 1, 0
      %v1751 = vsel %vm1718, 1, 0
      %v1752 = vsel %vm1719, 1, 0
      %v1753 = vsel %vm1720, 1, 0
      %v1754 = vsel %vm1721, 1, 0
      %v1755 = vsel %vm1722, 1, 0
      %v1756 = vsel %vm1723, 1, 0
      %vm1757 = vcmp.eq.s32.totalorder %v1749, 1
      %vm1758 = vcmp.eq.s32.totalorder %v1750, 1
      %vm1759 = vcmp.eq.s32.totalorder %v1751, 1
      %vm1760 = vcmp.eq.s32.totalorder %v1752, 1
      %vm1761 = vcmp.eq.s32.totalorder %v1753, 1
      %vm1762 = vcmp.eq.s32.totalorder %v1754, 1
      %vm1763 = vcmp.eq.s32.totalorder %v1755, 1
      %vm1764 = vcmp.eq.s32.totalorder %v1756, 1
      %v1765 = vsel %vm1757, %v1748, 0.0
      %v1766 = vsel %vm1758, %v1747, 0.0
      %v1767 = vsel %vm1759, %v1746, 0.0
      %v1768 = vsel %vm1760, %v1745, 0.0
      %v1769 = vsel %vm1761, %v1744, 0.0
      %v1770 = vsel %vm1762, %v1743, 0.0
      %v1771 = vsel %vm1763, %v1742, 0.0
      %v1772 = vsel %vm1764, %v1741, 0.0
      %vm1773 = vcmp.le.s32.totalorder %v1708, 30
      %vm1774 = vcmp.le.s32.totalorder %v1709, 30
      %vm1775 = vcmp.le.s32.totalorder %v1710, 30
      %vm1776 = vcmp.le.s32.totalorder %v1711, 30
      %vm1777 = vcmp.le.s32.totalorder %v1712, 30
      %vm1778 = vcmp.le.s32.totalorder %v1713, 30
      %vm1779 = vcmp.le.s32.totalorder %v1714, 30
      %vm1780 = vcmp.le.s32.totalorder %v1715, 30
      %1781 = vrot.lane.b32.xlu0 %v1602, 127
      %v1782 = vpop.permute.xlu0 %1781
      %1783 = vrot.lane.b32.xlu0 %v1603, 127
      %v1784 = vpop.permute.xlu0 %1783
      %1785 = vrot.lane.b32.xlu0 %v1604, 127
      %v1786 = vpop.permute.xlu0 %1785
      %1787 = vrot.lane.b32.xlu0 %v1605, 127
      %v1788 = vpop.permute.xlu0 %1787
      %1789 = vrot.lane.b32.xlu0 %v1606, 127
      %v1790 = vpop.permute.xlu0 %1789
      %1791 = vrot.lane.b32.xlu0 %v1607, 127
      %v1792 = vpop.permute.xlu0 %1791
      %1793 = vrot.lane.b32.xlu0 %v1608, 127
      %v1794 = vpop.permute.xlu0 %1793
      %1795 = vrot.lane.b32.xlu0 %v1609, 127
      %v1796 = vpop.permute.xlu0 %1795
      %vm1797 = vcmp.lt.s32.totalorder %v1612, 127
      %v1798 = vsel %vm1797, %v1794, %v1796
      %v1799 = vsel %vm1797, %v1792, %v1794
      %v1800 = vsel %vm1797, %v1790, %v1792
      %v1801 = vsel %vm1797, %v1788, %v1790
      %v1802 = vsel %vm1797, %v1786, %v1788
      %v1803 = vsel %vm1797, %v1784, %v1786
      %v1804 = vsel %vm1797, %v1782, %v1784
      %v1805 = vsel %vm1797, %v1796, %v1782
      %v1806 = vsel %vm1773, 1, 0
      %v1807 = vsel %vm1774, 1, 0
      %v1808 = vsel %vm1775, 1, 0
      %v1809 = vsel %vm1776, 1, 0
      %v1810 = vsel %vm1777, 1, 0
      %v1811 = vsel %vm1778, 1, 0
      %v1812 = vsel %vm1779, 1, 0
      %v1813 = vsel %vm1780, 1, 0
      %vm1814 = vcmp.eq.s32.totalorder %v1806, 1
      %vm1815 = vcmp.eq.s32.totalorder %v1807, 1
      %vm1816 = vcmp.eq.s32.totalorder %v1808, 1
      %vm1817 = vcmp.eq.s32.totalorder %v1809, 1
      %vm1818 = vcmp.eq.s32.totalorder %v1810, 1
      %vm1819 = vcmp.eq.s32.totalorder %v1811, 1
      %vm1820 = vcmp.eq.s32.totalorder %v1812, 1
      %vm1821 = vcmp.eq.s32.totalorder %v1813, 1
      %v1822 = vsel %vm1814, %v1804, 0.0
      %v1823 = vsel %vm1815, %v1803, 0.0
      %v1824 = vsel %vm1816, %v1802, 0.0
      %v1825 = vsel %vm1817, %v1801, 0.0
      %v1826 = vsel %vm1818, %v1800, 0.0
      %v1827 = vsel %vm1819, %v1799, 0.0
      %v1828 = vsel %vm1820, %v1798, 0.0
      %v1829 = vsel %vm1821, %v1805, 0.0
      %1831 = vset.pattern.permute.xlu0 0
      %1832 = vperm.xlu0 %1831, %v1610
      %v1833 = vpop.permute.xlu0 %1832
      %v1835 = vmul.f32 %v1833, %v1765
      %v1836 = vmul.f32 %v1833, %v1766
      %v1837 = vmul.f32 %v1833, %v1767
      %v1838 = vmul.f32 %v1833, %v1768
      %v1839 = vmul.f32 %v1833, %v1769
      %v1840 = vmul.f32 %v1833, %v1770
      %v1841 = vmul.f32 %v1833, %v1771
      %v1842 = vmul.f32 %v1833, %v1772
      %1843 = vset.pattern.permute.xlu0 1
      %1844 = vperm.xlu0 %1843, %v1610
      %v1845 = vpop.permute.xlu0 %1844
      %v1847 = vmul.f32 %v1845, %v1602
      %v1848 = vmul.f32 %v1845, %v1603
      %v1849 = vmul.f32 %v1845, %v1604
      %v1850 = vmul.f32 %v1845, %v1605
      %v1851 = vmul.f32 %v1845, %v1606
      %v1852 = vmul.f32 %v1845, %v1607
      %v1853 = vmul.f32 %v1845, %v1608
      %v1854 = vmul.f32 %v1845, %v1609
      %v1855 = vadd.f32 %v1835, %v1847
      %v1856 = vadd.f32 %v1836, %v1848
      %v1857 = vadd.f32 %v1837, %v1849
      %v1858 = vadd.f32 %v1838, %v1850
      %v1859 = vadd.f32 %v1839, %v1851
      %v1860 = vadd.f32 %v1840, %v1852
      %v1861 = vadd.f32 %v1841, %v1853
      %v1862 = vadd.f32 %v1842, %v1854
      %1863 = vset.pattern.permute.xlu0 2
      %1864 = vperm.xlu0 %1863, %v1610
      %v1865 = vpop.permute.xlu0 %1864
      %v1867 = vmul.f32 %v1865, %v1822
      %v1868 = vmul.f32 %v1865, %v1823
      %v1869 = vmul.f32 %v1865, %v1824
      %v1870 = vmul.f32 %v1865, %v1825
      %v1871 = vmul.f32 %v1865, %v1826
      %v1872 = vmul.f32 %v1865, %v1827
      %v1873 = vmul.f32 %v1865, %v1828
      %v1874 = vmul.f32 %v1865, %v1829
      %v1875 = vadd.f32 %v1855, %v1867
      %v1876 = vadd.f32 %v1856, %v1868
      %v1877 = vadd.f32 %v1857, %v1869
      %v1878 = vadd.f32 %v1858, %v1870
      %v1879 = vadd.f32 %v1859, %v1871
      %v1880 = vadd.f32 %v1860, %v1872
      %v1881 = vadd.f32 %v1861, %v1873
      %v1882 = vadd.f32 %v1862, %v1874
      %1883 = vset.pattern.permute.xlu0 3
      %1884 = vperm.xlu0 %1883, %v1610
      %v1885 = vpop.permute.xlu0 %1884
      %v1887 = vmul.f32 %v1885, %v1765
      %v1888 = vmul.f32 %v1885, %v1766
      %v1889 = vmul.f32 %v1885, %v1767
      %v1890 = vmul.f32 %v1885, %v1768
      %v1891 = vmul.f32 %v1885, %v1769
      %v1892 = vmul.f32 %v1885, %v1770
      %v1893 = vmul.f32 %v1885, %v1771
      %v1894 = vmul.f32 %v1885, %v1772
      %1895 = vset.pattern.permute.xlu0 4
      %1896 = vperm.xlu0 %1895, %v1610
      %v1897 = vpop.permute.xlu0 %1896
      %v1899 = vmul.f32 %v1897, %v1602
      %v1900 = vmul.f32 %v1897, %v1603
      %v1901 = vmul.f32 %v1897, %v1604
      %v1902 = vmul.f32 %v1897, %v1605
      %v1903 = vmul.f32 %v1897, %v1606
      %v1904 = vmul.f32 %v1897, %v1607
      %v1905 = vmul.f32 %v1897, %v1608
      %v1906 = vmul.f32 %v1897, %v1609
      %v1907 = vadd.f32 %v1887, %v1899
      %v1908 = vadd.f32 %v1888, %v1900
      %v1909 = vadd.f32 %v1889, %v1901
      %v1910 = vadd.f32 %v1890, %v1902
      %v1911 = vadd.f32 %v1891, %v1903
      %v1912 = vadd.f32 %v1892, %v1904
      %v1913 = vadd.f32 %v1893, %v1905
      %v1914 = vadd.f32 %v1894, %v1906
      %1915 = vset.pattern.permute.xlu0 5
      %1916 = vperm.xlu0 %1915, %v1610
      %v1917 = vpop.permute.xlu0 %1916
      %v1919 = vmul.f32 %v1917, %v1822
      %v1920 = vmul.f32 %v1917, %v1823
      %v1921 = vmul.f32 %v1917, %v1824
      %v1922 = vmul.f32 %v1917, %v1825
      %v1923 = vmul.f32 %v1917, %v1826
      %v1924 = vmul.f32 %v1917, %v1827
      %v1925 = vmul.f32 %v1917, %v1828
      %v1926 = vmul.f32 %v1917, %v1829
      %v1927 = vadd.f32 %v1907, %v1919
      %v1928 = vadd.f32 %v1908, %v1920
      %v1929 = vadd.f32 %v1909, %v1921
      %v1930 = vadd.f32 %v1910, %v1922
      %v1931 = vadd.f32 %v1911, %v1923
      %v1932 = vadd.f32 %v1912, %v1924
      %v1933 = vadd.f32 %v1913, %v1925
      %v1934 = vadd.f32 %v1914, %v1926
      %1935 = vset.pattern.permute.xlu0 6
      %1936 = vperm.xlu0 %1935, %v1610
      %v1937 = vpop.permute.xlu0 %1936
      %v1939 = vmul.f32 %v1937, %v1765
      %v1940 = vmul.f32 %v1937, %v1766
      %v1941 = vmul.f32 %v1937, %v1767
      %v1942 = vmul.f32 %v1937, %v1768
      %v1943 = vmul.f32 %v1937, %v1769
      %v1944 = vmul.f32 %v1937, %v1770
      %v1945 = vmul.f32 %v1937, %v1771
      %v1946 = vmul.f32 %v1937, %v1772
      %1947 = vset.pattern.permute.xlu0 7
      %1948 = vperm.xlu0 %1947, %v1610
      %v1949 = vpop.permute.xlu0 %1948
      %v1951 = vmul.f32 %v1949, %v1602
      %v1952 = vmul.f32 %v1949, %v1603
      %v1953 = vmul.f32 %v1949, %v1604
      %v1954 = vmul.f32 %v1949, %v1605
      %v1955 = vmul.f32 %v1949, %v1606
      %v1956 = vmul.f32 %v1949, %v1607
      %v1957 = vmul.f32 %v1949, %v1608
      %v1958 = vmul.f32 %v1949, %v1609
      %v1959 = vadd.f32 %v1939, %v1951
      %v1960 = vadd.f32 %v1940, %v1952
      %v1961 = vadd.f32 %v1941, %v1953
      %v1962 = vadd.f32 %v1942, %v1954
      %v1963 = vadd.f32 %v1943, %v1955
      %v1964 = vadd.f32 %v1944, %v1956
      %v1965 = vadd.f32 %v1945, %v1957
      %v1966 = vadd.f32 %v1946, %v1958
      %1967 = vset.pattern.permute.xlu0 8
      %1968 = vperm.xlu0 %1967, %v1610
      %v1969 = vpop.permute.xlu0 %1968
      %v1971 = vmul.f32 %v1969, %v1822
      %v1972 = vmul.f32 %v1969, %v1823
      %v1973 = vmul.f32 %v1969, %v1824
      %v1974 = vmul.f32 %v1969, %v1825
      %v1975 = vmul.f32 %v1969, %v1826
      %v1976 = vmul.f32 %v1969, %v1827
      %v1977 = vmul.f32 %v1969, %v1828
      %v1978 = vmul.f32 %v1969, %v1829
      %v1979 = vadd.f32 %v1959, %v1971
      %v1980 = vadd.f32 %v1960, %v1972
      %v1981 = vadd.f32 %v1961, %v1973
      %v1982 = vadd.f32 %v1962, %v1974
      %v1983 = vadd.f32 %v1963, %v1975
      %v1984 = vadd.f32 %v1964, %v1976
      %v1985 = vadd.f32 %v1965, %v1977
      %v1986 = vadd.f32 %v1966, %v1978
      %vm1987 = vcmp.ge.s32.totalorder %v1612, 32
      %vm1988 = vcmp.ge.s32.totalorder %v1613, 32
      %vm1989 = vcmp.ge.s32.totalorder %v1614, 32
      %vm1990 = vcmp.ge.s32.totalorder %v1615, 32
      %vm1991 = vcmp.ge.s32.totalorder %v1616, 32
      %vm1992 = vcmp.ge.s32.totalorder %v1617, 32
      %vm1993 = vcmp.ge.s32.totalorder %v1618, 32
      %vm1994 = vcmp.ge.s32.totalorder %v1619, 32
      %1995 = vrot.lane.b32.xlu0 %v1875, 32
      %v1996 = vpop.permute.xlu0 %1995
      %1997 = vrot.lane.b32.xlu0 %v1876, 32
      %v1998 = vpop.permute.xlu0 %1997
      %1999 = vrot.lane.b32.xlu0 %v1877, 32
      %v2000 = vpop.permute.xlu0 %1999
      %2001 = vrot.lane.b32.xlu0 %v1878, 32
      %v2002 = vpop.permute.xlu0 %2001
      %2003 = vrot.lane.b32.xlu0 %v1879, 32
      %v2004 = vpop.permute.xlu0 %2003
      %2005 = vrot.lane.b32.xlu0 %v1880, 32
      %v2006 = vpop.permute.xlu0 %2005
      %2007 = vrot.lane.b32.xlu0 %v1881, 32
      %v2008 = vpop.permute.xlu0 %2007
      %2009 = vrot.lane.b32.xlu0 %v1882, 32
      %v2010 = vpop.permute.xlu0 %2009
      %vm2011 = vcmp.lt.s32.totalorder %v1612, 32
      %v2012 = vsel %vm2011, %v2008, %v2010
      %v2013 = vsel %vm2011, %v2006, %v2008
      %v2014 = vsel %vm2011, %v2004, %v2006
      %v2015 = vsel %vm2011, %v2002, %v2004
      %v2016 = vsel %vm2011, %v2000, %v2002
      %v2017 = vsel %vm2011, %v1998, %v2000
      %v2018 = vsel %vm2011, %v1996, %v1998
      %v2019 = vsel %vm2011, %v2010, %v1996
      %v2020 = vsel %vm1987, 1, 0
      %v2021 = vsel %vm1988, 1, 0
      %v2022 = vsel %vm1989, 1, 0
      %v2023 = vsel %vm1990, 1, 0
      %v2024 = vsel %vm1991, 1, 0
      %v2025 = vsel %vm1992, 1, 0
      %v2026 = vsel %vm1993, 1, 0
      %v2027 = vsel %vm1994, 1, 0
      %vm2028 = vcmp.eq.s32.totalorder %v2020, 1
      %vm2029 = vcmp.eq.s32.totalorder %v2021, 1
      %vm2030 = vcmp.eq.s32.totalorder %v2022, 1
      %vm2031 = vcmp.eq.s32.totalorder %v2023, 1
      %vm2032 = vcmp.eq.s32.totalorder %v2024, 1
      %vm2033 = vcmp.eq.s32.totalorder %v2025, 1
      %vm2034 = vcmp.eq.s32.totalorder %v2026, 1
      %vm2035 = vcmp.eq.s32.totalorder %v2027, 1
      %v2036 = vsel %vm2028, %v2019, 0.0
      %v2037 = vsel %vm2029, %v2018, 0.0
      %v2038 = vsel %vm2030, %v2017, 0.0
      %v2039 = vsel %vm2031, %v2016, 0.0
      %v2040 = vsel %vm2032, %v2015, 0.0
      %v2041 = vsel %vm2033, %v2014, 0.0
      %v2042 = vsel %vm2034, %v2013, 0.0
      %v2043 = vsel %vm2035, %v2012, 0.0
      %vm2044 = vcmp.lt.s32.totalorder %v1612, 992
      %vm2045 = vcmp.lt.s32.totalorder %v1613, 992
      %vm2046 = vcmp.lt.s32.totalorder %v1614, 992
      %vm2047 = vcmp.lt.s32.totalorder %v1615, 992
      %vm2048 = vcmp.lt.s32.totalorder %v1616, 992
      %vm2049 = vcmp.lt.s32.totalorder %v1617, 992
      %vm2050 = vcmp.lt.s32.totalorder %v1618, 992
      %vm2051 = vcmp.lt.s32.totalorder %v1619, 992
      %2052 = vrot.lane.b32.xlu0 %v1979, 96
      %v2053 = vpop.permute.xlu0 %2052
      %2054 = vrot.lane.b32.xlu0 %v1980, 96
      %v2055 = vpop.permute.xlu0 %2054
      %2056 = vrot.lane.b32.xlu0 %v1981, 96
      %v2057 = vpop.permute.xlu0 %2056
      %2058 = vrot.lane.b32.xlu0 %v1982, 96
      %v2059 = vpop.permute.xlu0 %2058
      %2060 = vrot.lane.b32.xlu0 %v1983, 96
      %v2061 = vpop.permute.xlu0 %2060
      %2062 = vrot.lane.b32.xlu0 %v1984, 96
      %v2063 = vpop.permute.xlu0 %2062
      %2064 = vrot.lane.b32.xlu0 %v1985, 96
      %v2065 = vpop.permute.xlu0 %2064
      %2066 = vrot.lane.b32.xlu0 %v1986, 96
      %v2067 = vpop.permute.xlu0 %2066
      %vm2068 = vcmp.lt.s32.totalorder %v1612, 96
      %v2069 = vsel %vm2068, %v2065, %v2067
      %v2070 = vsel %vm2068, %v2063, %v2065
      %v2071 = vsel %vm2068, %v2061, %v2063
      %v2072 = vsel %vm2068, %v2059, %v2061
      %v2073 = vsel %vm2068, %v2057, %v2059
      %v2074 = vsel %vm2068, %v2055, %v2057
      %v2075 = vsel %vm2068, %v2053, %v2055
      %v2076 = vsel %vm2068, %v2067, %v2053
      %v2077 = vsel %vm2044, 1, 0
      %v2078 = vsel %vm2045, 1, 0
      %v2079 = vsel %vm2046, 1, 0
      %v2080 = vsel %vm2047, 1, 0
      %v2081 = vsel %vm2048, 1, 0
      %v2082 = vsel %vm2049, 1, 0
      %v2083 = vsel %vm2050, 1, 0
      %v2084 = vsel %vm2051, 1, 0
      %vm2085 = vcmp.eq.s32.totalorder %v2077, 1
      %vm2086 = vcmp.eq.s32.totalorder %v2078, 1
      %vm2087 = vcmp.eq.s32.totalorder %v2079, 1
      %vm2088 = vcmp.eq.s32.totalorder %v2080, 1
      %vm2089 = vcmp.eq.s32.totalorder %v2081, 1
      %vm2090 = vcmp.eq.s32.totalorder %v2082, 1
      %vm2091 = vcmp.eq.s32.totalorder %v2083, 1
      %vm2092 = vcmp.eq.s32.totalorder %v2084, 1
      %v2093 = vsel %vm2085, %v2075, 0.0
      %v2094 = vsel %vm2086, %v2074, 0.0
      %v2095 = vsel %vm2087, %v2073, 0.0
      %v2096 = vsel %vm2088, %v2072, 0.0
      %v2097 = vsel %vm2089, %v2071, 0.0
      %v2098 = vsel %vm2090, %v2070, 0.0
      %v2099 = vsel %vm2091, %v2069, 0.0
      %v2100 = vsel %vm2092, %v2076, 0.0
      %v2101 = vadd.f32 %v2036, %v1927
      %v2102 = vadd.f32 %v2037, %v1928
      %v2103 = vadd.f32 %v2038, %v1929
      %v2104 = vadd.f32 %v2039, %v1930
      %v2105 = vadd.f32 %v2040, %v1931
      %v2106 = vadd.f32 %v2041, %v1932
      %v2107 = vadd.f32 %v2042, %v1933
      %v2108 = vadd.f32 %v2043, %v1934
      %v2109 = vadd.f32 %v2101, %v2093
      %v2110 = vadd.f32 %v2102, %v2094
      %v2111 = vadd.f32 %v2103, %v2095
      %v2112 = vadd.f32 %v2104, %v2096
      %v2113 = vadd.f32 %v2105, %v2097
      %v2114 = vadd.f32 %v2106, %v2098
      %v2115 = vadd.f32 %v2107, %v2099
      %v2116 = vadd.f32 %v2108, %v2100
      %v2117 = vld [vmem:[%s5] sm:$0x1]
      %v2118 = vpack.c.bf16 %v2109, %v2109
      %v2119 = vpack.c.bf16 %v2110, %v2110
      %v2120 = vpack.c.bf16 %v2111, %v2111
      %v2121 = vpack.c.bf16 %v2112, %v2112
      %v2122 = vpack.c.bf16 %v2113, %v2113
      %v2123 = vpack.c.bf16 %v2114, %v2114
      %v2124 = vpack.c.bf16 %v2115, %v2115
      %v2125 = vpack.c.bf16 %v2116, %v2116
      %v2126 = vld [vmem:[%s6] sm:$0x3]
      %2128 = vset.pattern.permute.xlu0 0
      %2129 = vperm.xlu0 %2128, %v2126
      %v2130 = vpop.permute.xlu0 %2129
      %vm2132 = vcmask 15360
      %v2134 = vsel %vm2132, %v2117, 0
      %vm2136 = vcmask 1040384
      %v2138 = vsel %vm2136, %v2118, 0
      %v2141 = vsel %vm2136, %v2119, 0
      %v2144 = vsel %vm2136, %v2120, 0
      %v2147 = vsel %vm2136, %v2121, 0
      %v2150 = vsel %vm2136, %v2122, 0
      %v2153 = vsel %vm2136, %v2123, 0
      %v2156 = vsel %vm2136, %v2124, 0
      %v2159 = vsel %vm2136, %v2125, 0
      %2161 = vmatprep.subr.bf16.mxu0 %v2141
      %2162 = vmatpush1.bf16.msra.mxu0 %v2138
      %2163 = vmatprep.subr.bf16.mxu0 0
      %2164 = vmatpush1.bf16.msra.mxu0 0
      %2165 = vmatprep.subr.bf16.mxu0 0
      %2166 = vmatpush1.bf16.msra.mxu0 0
      %2167 = vmatprep.subr.bf16.mxu0 0
      %2168 = vmatpush1.bf16.msra.mxu0 0
      %2169 = vmatprep.subr.bf16.mxu0 0
      %2170 = vmatpush1.bf16.msra.mxu0 0
      %2171 = vmatprep.subr.bf16.mxu0 0
      %2172 = vmatpush1.bf16.msra.mxu0 0
      %2173 = vmatprep.subr.bf16.mxu0 0
      %2174 = vmatpush1.bf16.msra.mxu0 0
      %2175 = vmatprep.subr.bf16.mxu0 0
      %2176 = vmatpush1.bf16.msra.mxu0 0
      %2177 = vmatprep.subr.bf16.mxu0 0
      %2178 = vmatpush1.bf16.msra.mxu0 0
      %2179 = vmatprep.subr.bf16.mxu0 0
      %2180 = vmatpush1.bf16.msra.mxu0 0
      %2181 = vmatprep.subr.bf16.mxu0 0
      %2182 = vmatpush1.bf16.msra.mxu0 0
      %2183 = vmatprep.subr.bf16.mxu0 0
      %2184 = vmatpush1.bf16.msra.mxu0 0
      %2185 = vmatprep.subr.bf16.mxu0 0
      %2186 = vmatpush1.bf16.msra.mxu0 0
      %2187 = vmatprep.subr.bf16.mxu0 0
      %2188 = vmatpush1.bf16.msra.mxu0 0
      %2189 = vmatprep.subr.bf16.mxu0 0
      %2190 = vmatpush1.bf16.msra.mxu0 0
      %2191 = vmatprep.subr.bf16.mxu0 0
      %2192 = vmatpush1.bf16.msra.mxu0 0
      %2193 = vmatprep.mubr.bf16.mxu0 0
      %2194 = vmatmul.mubr.bf16.gmra.mrb[0].mxu0 %v2134
      %v2195 = vpop.f32.mrb[0].mxu0
      %v2196 = vadd.f32 %v2130, %v2195
      %v2197 = vpop.f32.mrb[0].mxu0
      %v2198 = vadd.f32 %v2130, %v2197
      %v2199 = vpop.f32.mrb[0].mxu0
      %v2200 = vpop.f32.mrb[0].mxu0
      %2201 = vdwg.mxu0
      %2202 = vmatprep.subr.bf16.mxu0 %v2147
      %2203 = vmatpush1.bf16.msra.mxu0 %v2144
      %2204 = vmatprep.subr.bf16.mxu0 0
      %2205 = vmatpush1.bf16.msra.mxu0 0
      %2206 = vmatprep.subr.bf16.mxu0 0
      %2207 = vmatpush1.bf16.msra.mxu0 0
      %2208 = vmatprep.subr.bf16.mxu0 0
      %2209 = vmatpush1.bf16.msra.mxu0 0
      %2210 = vmatprep.subr.bf16.mxu0 0
      %2211 = vmatpush1.bf16.msra.mxu0 0
      %2212 = vmatprep.subr.bf16.mxu0 0
      %2213 = vmatpush1.bf16.msra.mxu0 0
      %2214 = vmatprep.subr.bf16.mxu0 0
      %2215 = vmatpush1.bf16.msra.mxu0 0
      %2216 = vmatprep.subr.bf16.mxu0 0
      %2217 = vmatpush1.bf16.msra.mxu0 0
      %2218 = vmatprep.subr.bf16.mxu0 0
      %2219 = vmatpush1.bf16.msra.mxu0 0
      %2220 = vmatprep.subr.bf16.mxu0 0
      %2221 = vmatpush1.bf16.msra.mxu0 0
      %2222 = vmatprep.subr.bf16.mxu0 0
      %2223 = vmatpush1.bf16.msra.mxu0 0
      %2224 = vmatprep.subr.bf16.mxu0 0
      %2225 = vmatpush1.bf16.msra.mxu0 0
      %2226 = vmatprep.subr.bf16.mxu0 0
      %2227 = vmatpush1.bf16.msra.mxu0 0
      %2228 = vmatprep.subr.bf16.mxu0 0
      %2229 = vmatpush1.bf16.msra.mxu0 0
      %2230 = vmatprep.subr.bf16.mxu0 0
      %2231 = vmatpush1.bf16.msra.mxu0 0
      %2232 = vmatprep.subr.bf16.mxu0 0
      %2233 = vmatpush1.bf16.msra.mxu0 0
      %2234 = vmatprep.mubr.bf16.mxu0 0
      %2235 = vmatmul.mubr.bf16.gmra.mrb[0].mxu0 %v2134
      %v2236 = vpop.f32.mrb[0].mxu0
      %v2237 = vadd.f32 %v2130, %v2236
      %v2238 = vpop.f32.mrb[0].mxu0
      %v2239 = vadd.f32 %v2130, %v2238
      %v2240 = vpop.f32.mrb[0].mxu0
      %v2241 = vpop.f32.mrb[0].mxu0
      %2242 = vdwg.mxu0
      %2243 = vmatprep.subr.bf16.mxu0 %v2153
      %2244 = vmatpush1.bf16.msra.mxu0 %v2150
      %2245 = vmatprep.subr.bf16.mxu0 0
      %2246 = vmatpush1.bf16.msra.mxu0 0
      %2247 = vmatprep.subr.bf16.mxu0 0
      %2248 = vmatpush1.bf16.msra.mxu0 0
      %2249 = vmatprep.subr.bf16.mxu0 0
      %2250 = vmatpush1.bf16.msra.mxu0 0
      %2251 = vmatprep.subr.bf16.mxu0 0
      %2252 = vmatpush1.bf16.msra.mxu0 0
      %2253 = vmatprep.subr.bf16.mxu0 0
      %2254 = vmatpush1.bf16.msra.mxu0 0
      %2255 = vmatprep.subr.bf16.mxu0 0
      %2256 = vmatpush1.bf16.msra.mxu0 0
      %2257 = vmatprep.subr.bf16.mxu0 0
      %2258 = vmatpush1.bf16.msra.mxu0 0
      %2259 = vmatprep.subr.bf16.mxu0 0
      %2260 = vmatpush1.bf16.msra.mxu0 0
      %2261 = vmatprep.subr.bf16.mxu0 0
      %2262 = vmatpush1.bf16.msra.mxu0 0
      %2263 = vmatprep.subr.bf16.mxu0 0
      %2264 = vmatpush1.bf16.msra.mxu0 0
      %2265 = vmatprep.subr.bf16.mxu0 0
      %2266 = vmatpush1.bf16.msra.mxu0 0
      %2267 = vmatprep.subr.bf16.mxu0 0
      %2268 = vmatpush1.bf16.msra.mxu0 0
      %2269 = vmatprep.subr.bf16.mxu0 0
      %2270 = vmatpush1.bf16.msra.mxu0 0
      %2271 = vmatprep.subr.bf16.mxu0 0
      %2272 = vmatpush1.bf16.msra.mxu0 0
      %2273 = vmatprep.subr.bf16.mxu0 0
      %2274 = vmatpush1.bf16.msra.mxu0 0
      %2275 = vmatprep.mubr.bf16.mxu0 0
      %2276 = vmatmul.mubr.bf16.gmra.mrb[0].mxu0 %v2134
      %v2277 = vpop.f32.mrb[0].mxu0
      %v2278 = vadd.f32 %v2130, %v2277
      %v2279 = vpop.f32.mrb[0].mxu0
      %v2280 = vadd.f32 %v2130, %v2279
      %v2281 = vpop.f32.mrb[0].mxu0
      %v2282 = vpop.f32.mrb[0].mxu0
      %2283 = vdwg.mxu0
      %2284 = vmatprep.subr.bf16.mxu0 %v2159
      %2285 = vmatpush1.bf16.msra.mxu0 %v2156
      %2286 = vmatprep.subr.bf16.mxu0 0
      %2287 = vmatpush1.bf16.msra.mxu0 0
      %2288 = vmatprep.subr.bf16.mxu0 0
      %2289 = vmatpush1.bf16.msra.mxu0 0
      %2290 = vmatprep.subr.bf16.mxu0 0
      %2291 = vmatpush1.bf16.msra.mxu0 0
      %2292 = vmatprep.subr.bf16.mxu0 0
      %2293 = vmatpush1.bf16.msra.mxu0 0
      %2294 = vmatprep.subr.bf16.mxu0 0
      %2295 = vmatpush1.bf16.msra.mxu0 0
      %2296 = vmatprep.subr.bf16.mxu0 0
      %2297 = vmatpush1.bf16.msra.mxu0 0
      %2298 = vmatprep.subr.bf16.mxu0 0
      %2299 = vmatpush1.bf16.msra.mxu0 0
      %2300 = vmatprep.subr.bf16.mxu0 0
      %2301 = vmatpush1.bf16.msra.mxu0 0
      %2302 = vmatprep.subr.bf16.mxu0 0
      %2303 = vmatpush1.bf16.msra.mxu0 0
      %2304 = vmatprep.subr.bf16.mxu0 0
      %2305 = vmatpush1.bf16.msra.mxu0 0
      %2306 = vmatprep.subr.bf16.mxu0 0
      %2307 = vmatpush1.bf16.msra.mxu0 0
      %2308 = vmatprep.subr.bf16.mxu0 0
      %2309 = vmatpush1.bf16.msra.mxu0 0
      %2310 = vmatprep.subr.bf16.mxu0 0
      %2311 = vmatpush1.bf16.msra.mxu0 0
      %2312 = vmatprep.subr.bf16.mxu0 0
      %2313 = vmatpush1.bf16.msra.mxu0 0
      %2314 = vmatprep.subr.bf16.mxu0 0
      %2315 = vmatpush1.bf16.msra.mxu0 0
      %2316 = vmatprep.mubr.bf16.mxu0 0
      %2317 = vmatmul.mubr.bf16.gmra.mrb[0].mxu0 %v2134
      %v2318 = vpop.f32.mrb[0].mxu0
      %v2319 = vadd.f32 %v2130, %v2318
      %v2320 = vpop.f32.mrb[0].mxu0
      %v2321 = vadd.f32 %v2130, %v2320
      %v2322 = vpop.f32.mrb[0].mxu0
      %v2323 = vpop.f32.mrb[0].mxu0
      %2324 = vdwg.mxu0
      %v2325 = vsel %vm1536, %v2196, 0.0
      %v2326 = vsel %vm1536, %v2198, 0.0
      %v2327 = vadd.f32 %v2325, %v2326
      %v2328 = vsel %vm1536, %v2237, 0.0
      %v2329 = vadd.f32 %v2327, %v2328
      %v2330 = vsel %vm1536, %v2239, 0.0
      %v2331 = vadd.f32 %v2329, %v2330
      %v2332 = vsel %vm1536, %v2278, 0.0
      %v2333 = vadd.f32 %v2331, %v2332
      %v2334 = vsel %vm1536, %v2280, 0.0
      %v2335 = vadd.f32 %v2333, %v2334
      %v2336 = vsel %vm1536, %v2319, 0.0
      %v2337 = vadd.f32 %v2335, %v2336
      %v2338 = vsel %vm1536, %v2321, 0.0
      %v2339 = vadd.f32 %v2337, %v2338
      %2340 = vadd.xlane.f32.xlu0 %v2339
      %v2341 = vpop.xlane.xlu0 %2340
      %v2342 = vmul.f32 %v2196, %v2196
      %v2343 = vmul.f32 %v2198, %v2198
      %v2344 = vmul.f32 %v2237, %v2237
      %v2345 = vmul.f32 %v2239, %v2239
      %v2346 = vmul.f32 %v2278, %v2278
      %v2347 = vmul.f32 %v2280, %v2280
      %v2348 = vmul.f32 %v2319, %v2319
      %v2349 = vmul.f32 %v2321, %v2321
      %v2350 = vsel %vm1536, %v2342, 0.0
      %v2351 = vsel %vm1536, %v2343, 0.0
      %v2352 = vadd.f32 %v2350, %v2351
      %v2353 = vsel %vm1536, %v2344, 0.0
      %v2354 = vadd.f32 %v2352, %v2353
      %v2355 = vsel %vm1536, %v2345, 0.0
      %v2356 = vadd.f32 %v2354, %v2355
      %v2357 = vsel %vm1536, %v2346, 0.0
      %v2358 = vadd.f32 %v2356, %v2357
      %v2359 = vsel %vm1536, %v2347, 0.0
      %v2360 = vadd.f32 %v2358, %v2359
      %v2361 = vsel %vm1536, %v2348, 0.0
      %v2362 = vadd.f32 %v2360, %v2361
      %v2363 = vsel %vm1536, %v2349, 0.0
      %v2364 = vadd.f32 %v2362, %v2363
      %2365 = vadd.xlane.f32.xlu0 %v2364
      %v2366 = vpop.xlane.xlu0 %2365
      %v2367 = vmul.f32 %v2341, 0.0009765625
      %v2368 = vmul.f32 %v2366, 0.0009765625
      %v2369 = vmul.f32 %v2367, %v2367
      %v2370 = vsub.f32 %v2368, %v2369
      %v2371 = vmax.f32 %v2370, 0.0
      %v2372 = vsub.f32 %v2196, %v2367
      %v2373 = vsub.f32 %v2198, %v2367
      %v2374 = vsub.f32 %v2237, %v2367
      %v2375 = vsub.f32 %v2239, %v2367
      %v2376 = vsub.f32 %v2278, %v2367
      %v2377 = vsub.f32 %v2280, %v2367
      %v2378 = vsub.f32 %v2319, %v2367
      %v2379 = vsub.f32 %v2321, %v2367
      %v2380 = vadd.f32 %v2371, 1e-05
      %v2381 = vrsqrt.pop %v2380
      %v2382 = vmul.f32 %v2372, %v2381
      %v2383 = vmul.f32 %v2373, %v2381
      %v2384 = vmul.f32 %v2374, %v2381
      %v2385 = vmul.f32 %v2375, %v2381
      %v2386 = vmul.f32 %v2376, %v2381
      %v2387 = vmul.f32 %v2377, %v2381
      %v2388 = vmul.f32 %v2378, %v2381
      %v2389 = vmul.f32 %v2379, %v2381
      %v2390 = vmax.f32 %v2382, 0.0
      %v2391 = vmax.f32 %v2383, 0.0
      %v2392 = vmax.f32 %v2384, 0.0
      %v2393 = vmax.f32 %v2385, 0.0
      %v2394 = vmax.f32 %v2386, 0.0
      %v2395 = vmax.f32 %v2387, 0.0
      %v2396 = vmax.f32 %v2388, 0.0
      %v2397 = vmax.f32 %v2389, 0.0
      %v2398 = vld [vmem:[%s7] sm:$0x3]
      %v2399 = vpack.c.bf16 %v2390, %v2390
      %v2400 = vpack.c.bf16 %v2391, %v2391
      %v2401 = vpack.c.bf16 %v2392, %v2392
      %v2402 = vpack.c.bf16 %v2393, %v2393
      %v2403 = vpack.c.bf16 %v2394, %v2394
      %v2404 = vpack.c.bf16 %v2395, %v2395
      %v2405 = vpack.c.bf16 %v2396, %v2396
      %v2406 = vpack.c.bf16 %v2397, %v2397
      %v2407 = vld [vmem:[%s8] sm:$0xf]
      %2409 = vset.pattern.permute.xlu0 0
      %2410 = vperm.xlu0 %2409, %v2407
      %v2411 = vpop.permute.xlu0 %2410
      %v2414 = vsel %vm2132, %v2398, 0
      %v2417 = vsel %vm2136, %v2399, 0
      %v2420 = vsel %vm2136, %v2400, 0
      %v2423 = vsel %vm2136, %v2401, 0
      %v2426 = vsel %vm2136, %v2402, 0
      %v2429 = vsel %vm2136, %v2403, 0
      %v2432 = vsel %vm2136, %v2404, 0
      %v2435 = vsel %vm2136, %v2405, 0
      %v2438 = vsel %vm2136, %v2406, 0
      %2440 = vmatprep.subr.bf16.mxu0 %v2420
      %2441 = vmatpush1.bf16.msra.mxu0 %v2417
      %2442 = vmatprep.subr.bf16.mxu0 0
      %2443 = vmatpush1.bf16.msra.mxu0 0
      %2444 = vmatprep.subr.bf16.mxu0 0
      %2445 = vmatpush1.bf16.msra.mxu0 0
      %2446 = vmatprep.subr.bf16.mxu0 0
      %2447 = vmatpush1.bf16.msra.mxu0 0
      %2448 = vmatprep.subr.bf16.mxu0 0
      %2449 = vmatpush1.bf16.msra.mxu0 0
      %2450 = vmatprep.subr.bf16.mxu0 0
      %2451 = vmatpush1.bf16.msra.mxu0 0
      %2452 = vmatprep.subr.bf16.mxu0 0
      %2453 = vmatpush1.bf16.msra.mxu0 0
      %2454 = vmatprep.subr.bf16.mxu0 0
      %2455 = vmatpush1.bf16.msra.mxu0 0
      %2456 = vmatprep.subr.bf16.mxu0 0
      %2457 = vmatpush1.bf16.msra.mxu0 0
      %2458 = vmatprep.subr.bf16.mxu0 0
      %2459 = vmatpush1.bf16.msra.mxu0 0
      %2460 = vmatprep.subr.bf16.mxu0 0
      %2461 = vmatpush1.bf16.msra.mxu0 0
      %2462 = vmatprep.subr.bf16.mxu0 0
      %2463 = vmatpush1.bf16.msra.mxu0 0
      %2464 = vmatprep.subr.bf16.mxu0 0
      %2465 = vmatpush1.bf16.msra.mxu0 0
      %2466 = vmatprep.subr.bf16.mxu0 0
      %2467 = vmatpush1.bf16.msra.mxu0 0
      %2468 = vmatprep.subr.bf16.mxu0 0
      %2469 = vmatpush1.bf16.msra.mxu0 0
      %2470 = vmatprep.subr.bf16.mxu0 0
      %2471 = vmatpush1.bf16.msra.mxu0 0
      %2472 = vmatprep.mubr.bf16.mxu0 0
      %2473 = vmatmul.mubr.bf16.gmra.mrb[0].mxu0 %v2414
      %v2474 = vpop.f32.mrb[0].mxu0
      %v2475 = vadd.f32 %v2411, %v2474
      %v2476 = vpop.f32.mrb[0].mxu0
      %v2477 = vadd.f32 %v2411, %v2476
      %v2478 = vpop.f32.mrb[0].mxu0
      %v2479 = vpop.f32.mrb[0].mxu0
      %2480 = vdwg.mxu0
      %2481 = vmatprep.subr.bf16.mxu0 %v2426
      %2482 = vmatpush1.bf16.msra.mxu0 %v2423
      %2483 = vmatprep.subr.bf16.mxu0 0
      %2484 = vmatpush1.bf16.msra.mxu0 0
      %2485 = vmatprep.subr.bf16.mxu0 0
      %2486 = vmatpush1.bf16.msra.mxu0 0
      %2487 = vmatprep.subr.bf16.mxu0 0
      %2488 = vmatpush1.bf16.msra.mxu0 0
      %2489 = vmatprep.subr.bf16.mxu0 0
      %2490 = vmatpush1.bf16.msra.mxu0 0
      %2491 = vmatprep.subr.bf16.mxu0 0
      %2492 = vmatpush1.bf16.msra.mxu0 0
      %2493 = vmatprep.subr.bf16.mxu0 0
      %2494 = vmatpush1.bf16.msra.mxu0 0
      %2495 = vmatprep.subr.bf16.mxu0 0
      %2496 = vmatpush1.bf16.msra.mxu0 0
      %2497 = vmatprep.subr.bf16.mxu0 0
      %2498 = vmatpush1.bf16.msra.mxu0 0
      %2499 = vmatprep.subr.bf16.mxu0 0
      %2500 = vmatpush1.bf16.msra.mxu0 0
      %2501 = vmatprep.subr.bf16.mxu0 0
      %2502 = vmatpush1.bf16.msra.mxu0 0
      %2503 = vmatprep.subr.bf16.mxu0 0
      %2504 = vmatpush1.bf16.msra.mxu0 0
      %2505 = vmatprep.subr.bf16.mxu0 0
      %2506 = vmatpush1.bf16.msra.mxu0 0
      %2507 = vmatprep.subr.bf16.mxu0 0
      %2508 = vmatpush1.bf16.msra.mxu0 0
      %2509 = vmatprep.subr.bf16.mxu0 0
      %2510 = vmatpush1.bf16.msra.mxu0 0
      %2511 = vmatprep.subr.bf16.mxu0 0
      %2512 = vmatpush1.bf16.msra.mxu0 0
      %2513 = vmatprep.mubr.bf16.mxu0 0
      %2514 = vmatmul.mubr.bf16.gmra.mrb[0].mxu0 %v2414
      %v2515 = vpop.f32.mrb[0].mxu0
      %v2516 = vadd.f32 %v2411, %v2515
      %v2517 = vpop.f32.mrb[0].mxu0
      %v2518 = vadd.f32 %v2411, %v2517
      %v2519 = vpop.f32.mrb[0].mxu0
      %v2520 = vpop.f32.mrb[0].mxu0
      %2521 = vdwg.mxu0
      %2522 = vmatprep.subr.bf16.mxu0 %v2432
      %2523 = vmatpush1.bf16.msra.mxu0 %v2429
      %2524 = vmatprep.subr.bf16.mxu0 0
      %2525 = vmatpush1.bf16.msra.mxu0 0
      %2526 = vmatprep.subr.bf16.mxu0 0
      %2527 = vmatpush1.bf16.msra.mxu0 0
      %2528 = vmatprep.subr.bf16.mxu0 0
      %2529 = vmatpush1.bf16.msra.mxu0 0
      %2530 = vmatprep.subr.bf16.mxu0 0
      %2531 = vmatpush1.bf16.msra.mxu0 0
      %2532 = vmatprep.subr.bf16.mxu0 0
      %2533 = vmatpush1.bf16.msra.mxu0 0
      %2534 = vmatprep.subr.bf16.mxu0 0
      %2535 = vmatpush1.bf16.msra.mxu0 0
      %2536 = vmatprep.subr.bf16.mxu0 0
      %2537 = vmatpush1.bf16.msra.mxu0 0
      %2538 = vmatprep.subr.bf16.mxu0 0
      %2539 = vmatpush1.bf16.msra.mxu0 0
      %2540 = vmatprep.subr.bf16.mxu0 0
      %2541 = vmatpush1.bf16.msra.mxu0 0
      %2542 = vmatprep.subr.bf16.mxu0 0
      %2543 = vmatpush1.bf16.msra.mxu0 0
      %2544 = vmatprep.subr.bf16.mxu0 0
      %2545 = vmatpush1.bf16.msra.mxu0 0
      %2546 = vmatprep.subr.bf16.mxu0 0
      %2547 = vmatpush1.bf16.msra.mxu0 0
      %2548 = vmatprep.subr.bf16.mxu0 0
      %2549 = vmatpush1.bf16.msra.mxu0 0
      %2550 = vmatprep.subr.bf16.mxu0 0
      %2551 = vmatpush1.bf16.msra.mxu0 0
      %2552 = vmatprep.subr.bf16.mxu0 0
      %2553 = vmatpush1.bf16.msra.mxu0 0
      %2554 = vmatprep.mubr.bf16.mxu0 0
      %2555 = vmatmul.mubr.bf16.gmra.mrb[0].mxu0 %v2414
      %v2556 = vpop.f32.mrb[0].mxu0
      %v2557 = vadd.f32 %v2411, %v2556
      %v2558 = vpop.f32.mrb[0].mxu0
      %v2559 = vadd.f32 %v2411, %v2558
      %v2560 = vpop.f32.mrb[0].mxu0
      %v2561 = vpop.f32.mrb[0].mxu0
      %2562 = vdwg.mxu0
      %2563 = vmatprep.subr.bf16.mxu0 %v2438
      %2564 = vmatpush1.bf16.msra.mxu0 %v2435
      %2565 = vmatprep.subr.bf16.mxu0 0
      %2566 = vmatpush1.bf16.msra.mxu0 0
      %2567 = vmatprep.subr.bf16.mxu0 0
      %2568 = vmatpush1.bf16.msra.mxu0 0
      %2569 = vmatprep.subr.bf16.mxu0 0
      %2570 = vmatpush1.bf16.msra.mxu0 0
      %2571 = vmatprep.subr.bf16.mxu0 0
      %2572 = vmatpush1.bf16.msra.mxu0 0
      %2573 = vmatprep.subr.bf16.mxu0 0
      %2574 = vmatpush1.bf16.msra.mxu0 0
      %2575 = vmatprep.subr.bf16.mxu0 0
      %2576 = vmatpush1.bf16.msra.mxu0 0
      %2577 = vmatprep.subr.bf16.mxu0 0
      %2578 = vmatpush1.bf16.msra.mxu0 0
      %2579 = vmatprep.subr.bf16.mxu0 0
      %2580 = vmatpush1.bf16.msra.mxu0 0
      %2581 = vmatprep.subr.bf16.mxu0 0
      %2582 = vmatpush1.bf16.msra.mxu0 0
      %2583 = vmatprep.subr.bf16.mxu0 0
      %2584 = vmatpush1.bf16.msra.mxu0 0
      %2585 = vmatprep.subr.bf16.mxu0 0
      %2586 = vmatpush1.bf16.msra.mxu0 0
      %2587 = vmatprep.subr.bf16.mxu0 0
      %2588 = vmatpush1.bf16.msra.mxu0 0
      %2589 = vmatprep.subr.bf16.mxu0 0
      %2590 = vmatpush1.bf16.msra.mxu0 0
      %2591 = vmatprep.subr.bf16.mxu0 0
      %2592 = vmatpush1.bf16.msra.mxu0 0
      %2593 = vmatprep.subr.bf16.mxu0 0
      %2594 = vmatpush1.bf16.msra.mxu0 0
      %2595 = vmatprep.mubr.bf16.mxu0 0
      %2596 = vmatmul.mubr.bf16.gmra.mrb[0].mxu0 %v2414
      %v2597 = vpop.f32.mrb[0].mxu0
      %v2598 = vadd.f32 %v2411, %v2597
      %v2599 = vpop.f32.mrb[0].mxu0
      %v2600 = vadd.f32 %v2411, %v2599
      %v2601 = vpop.f32.mrb[0].mxu0
      %v2602 = vpop.f32.mrb[0].mxu0
      %2603 = vdwg.mxu0
      %v2604 = vsel %vm1347, %v2475, 0.0
      %v2605 = vsel %vm1347, %v2477, 0.0
      %v2606 = vadd.f32 %v2604, %v2605
      %v2607 = vsel %vm1347, %v2516, 0.0
      %v2608 = vadd.f32 %v2606, %v2607
      %v2609 = vsel %vm1347, %v2518, 0.0
      %v2610 = vadd.f32 %v2608, %v2609
      %v2611 = vsel %vm1347, %v2557, 0.0
      %v2612 = vadd.f32 %v2610, %v2611
      %v2613 = vsel %vm1347, %v2559, 0.0
      %v2614 = vadd.f32 %v2612, %v2613
      %v2615 = vsel %vm1347, %v2598, 0.0
      %v2616 = vadd.f32 %v2614, %v2615
      %v2617 = vsel %vm1347, %v2600, 0.0
      %v2618 = vadd.f32 %v2616, %v2617
      %2619 = vadd.xlane.f32.xlu0 %v2618
      %v2620 = vpop.xlane.xlu0 %2619
      %v2621 = vmul.f32 %v2475, %v2475
      %v2622 = vmul.f32 %v2477, %v2477
      %v2623 = vmul.f32 %v2516, %v2516
      %v2624 = vmul.f32 %v2518, %v2518
      %v2625 = vmul.f32 %v2557, %v2557
      %v2626 = vmul.f32 %v2559, %v2559
      %v2627 = vmul.f32 %v2598, %v2598
      %v2628 = vmul.f32 %v2600, %v2600
      %v2629 = vsel %vm1347, %v2621, 0.0
      %v2630 = vsel %vm1347, %v2622, 0.0
      %v2631 = vadd.f32 %v2629, %v2630
      %v2632 = vsel %vm1347, %v2623, 0.0
      %v2633 = vadd.f32 %v2631, %v2632
      %v2634 = vsel %vm1347, %v2624, 0.0
      %v2635 = vadd.f32 %v2633, %v2634
      %v2636 = vsel %vm1347, %v2625, 0.0
      %v2637 = vadd.f32 %v2635, %v2636
      %v2638 = vsel %vm1347, %v2626, 0.0
      %v2639 = vadd.f32 %v2637, %v2638
      %v2640 = vsel %vm1347, %v2627, 0.0
      %v2641 = vadd.f32 %v2639, %v2640
      %v2642 = vsel %vm1347, %v2628, 0.0
      %v2643 = vadd.f32 %v2641, %v2642
      %2644 = vadd.xlane.f32.xlu0 %v2643
      %v2645 = vpop.xlane.xlu0 %2644
      %v2646 = vmul.f32 %v2620, 0.0009765625
      %v2647 = vmul.f32 %v2645, 0.0009765625
      %v2648 = vmul.f32 %v2646, %v2646
      %v2649 = vsub.f32 %v2647, %v2648
      %v2650 = vmax.f32 %v2649, 0.0
      %v2651 = vsub.f32 %v2475, %v2646
      %v2652 = vsub.f32 %v2477, %v2646
      %v2653 = vsub.f32 %v2516, %v2646
      %v2654 = vsub.f32 %v2518, %v2646
      %v2655 = vsub.f32 %v2557, %v2646
      %v2656 = vsub.f32 %v2559, %v2646
      %v2657 = vsub.f32 %v2598, %v2646
      %v2658 = vsub.f32 %v2600, %v2646
      %v2659 = vadd.f32 %v2650, 1e-05
      %v2660 = vrsqrt.pop %v2659
      %v2661 = vmul.f32 %v2651, %v2660
      %v2662 = vmul.f32 %v2652, %v2660
      %v2663 = vmul.f32 %v2653, %v2660
      %v2664 = vmul.f32 %v2654, %v2660
      %v2665 = vmul.f32 %v2655, %v2660
      %v2666 = vmul.f32 %v2656, %v2660
      %v2667 = vmul.f32 %v2657, %v2660
      %v2668 = vmul.f32 %v2658, %v2660
      %v2669 = vmax.f32 %v2661, 0.0
      %v2670 = vmax.f32 %v2662, 0.0
      %v2671 = vmax.f32 %v2663, 0.0
      %v2672 = vmax.f32 %v2664, 0.0
      %v2673 = vmax.f32 %v2665, 0.0
      %v2674 = vmax.f32 %v2666, 0.0
      %v2675 = vmax.f32 %v2667, 0.0
      %v2676 = vmax.f32 %v2668, 0.0
      %v2677 = vld [vmem:[%s9] sm:$0x3]
      %v2678 = vld [vmem:[%s10] sm:$0xf]
      %2680 = vset.pattern.permute.xlu0 0
      %2681 = vperm.xlu0 %2680, %v2678
      %v2682 = vpop.permute.xlu0 %2681
      %v2685 = vsel %vm1343, %v2677, 0
      %2687 = vmatprep.subr.bf16.mxu0 %v1352
      %2688 = vmatpush1.bf16.msra.mxu0 %v1349
      %2689 = vmatprep.subr.bf16.mxu0 0
      %2690 = vmatpush1.bf16.msra.mxu0 0
      %2691 = vmatprep.subr.bf16.mxu0 0
      %2692 = vmatpush1.bf16.msra.mxu0 0
      %2693 = vmatprep.subr.bf16.mxu0 0
      %2694 = vmatpush1.bf16.msra.mxu0 0
      %2695 = vmatprep.subr.bf16.mxu0 0
      %2696 = vmatpush1.bf16.msra.mxu0 0
      %2697 = vmatprep.subr.bf16.mxu0 0
      %2698 = vmatpush1.bf16.msra.mxu0 0
      %2699 = vmatprep.subr.bf16.mxu0 0
      %2700 = vmatpush1.bf16.msra.mxu0 0
      %2701 = vmatprep.subr.bf16.mxu0 0
      %2702 = vmatpush1.bf16.msra.mxu0 0
      %2703 = vmatprep.subr.bf16.mxu0 0
      %2704 = vmatpush1.bf16.msra.mxu0 0
      %2705 = vmatprep.subr.bf16.mxu0 0
      %2706 = vmatpush1.bf16.msra.mxu0 0
      %2707 = vmatprep.subr.bf16.mxu0 0
      %2708 = vmatpush1.bf16.msra.mxu0 0
      %2709 = vmatprep.subr.bf16.mxu0 0
      %2710 = vmatpush1.bf16.msra.mxu0 0
      %2711 = vmatprep.subr.bf16.mxu0 0
      %2712 = vmatpush1.bf16.msra.mxu0 0
      %2713 = vmatprep.subr.bf16.mxu0 0
      %2714 = vmatpush1.bf16.msra.mxu0 0
      %2715 = vmatprep.subr.bf16.mxu0 0
      %2716 = vmatpush1.bf16.msra.mxu0 0
      %2717 = vmatprep.subr.bf16.mxu0 0
      %2718 = vmatpush1.bf16.msra.mxu0 0
      %2719 = vmatprep.mubr.bf16.mxu0 0
      %2720 = vmatmul.mubr.bf16.gmra.mrb[0].mxu0 %v2685
      %v2721 = vpop.f32.mrb[0].mxu0
      %v2722 = vadd.f32 %v2682, %v2721
      %v2723 = vpop.f32.mrb[0].mxu0
      %v2724 = vadd.f32 %v2682, %v2723
      %v2725 = vpop.f32.mrb[0].mxu0
      %v2726 = vpop.f32.mrb[0].mxu0
      %2727 = vdwg.mxu0
      %2728 = vmatprep.subr.bf16.mxu0 %v1358
      %2729 = vmatpush1.bf16.msra.mxu0 %v1355
      %2730 = vmatprep.subr.bf16.mxu0 0
      %2731 = vmatpush1.bf16.msra.mxu0 0
      %2732 = vmatprep.subr.bf16.mxu0 0
      %2733 = vmatpush1.bf16.msra.mxu0 0
      %2734 = vmatprep.subr.bf16.mxu0 0
      %2735 = vmatpush1.bf16.msra.mxu0 0
      %2736 = vmatprep.subr.bf16.mxu0 0
      %2737 = vmatpush1.bf16.msra.mxu0 0
      %2738 = vmatprep.subr.bf16.mxu0 0
      %2739 = vmatpush1.bf16.msra.mxu0 0
      %2740 = vmatprep.subr.bf16.mxu0 0
      %2741 = vmatpush1.bf16.msra.mxu0 0
      %2742 = vmatprep.subr.bf16.mxu0 0
      %2743 = vmatpush1.bf16.msra.mxu0 0
      %2744 = vmatprep.subr.bf16.mxu0 0
      %2745 = vmatpush1.bf16.msra.mxu0 0
      %2746 = vmatprep.subr.bf16.mxu0 0
      %2747 = vmatpush1.bf16.msra.mxu0 0
      %2748 = vmatprep.subr.bf16.mxu0 0
      %2749 = vmatpush1.bf16.msra.mxu0 0
      %2750 = vmatprep.subr.bf16.mxu0 0
      %2751 = vmatpush1.bf16.msra.mxu0 0
      %2752 = vmatprep.subr.bf16.mxu0 0
      %2753 = vmatpush1.bf16.msra.mxu0 0
      %2754 = vmatprep.subr.bf16.mxu0 0
      %2755 = vmatpush1.bf16.msra.mxu0 0
      %2756 = vmatprep.subr.bf16.mxu0 0
      %2757 = vmatpush1.bf16.msra.mxu0 0
      %2758 = vmatprep.subr.bf16.mxu0 0
      %2759 = vmatpush1.bf16.msra.mxu0 0
      %2760 = vmatprep.mubr.bf16.mxu0 0
      %2761 = vmatmul.mubr.bf16.gmra.mrb[0].mxu0 %v2685
      %v2762 = vpop.f32.mrb[0].mxu0
      %v2763 = vadd.f32 %v2682, %v2762
      %v2764 = vpop.f32.mrb[0].mxu0
      %v2765 = vadd.f32 %v2682, %v2764
      %v2766 = vpop.f32.mrb[0].mxu0
      %v2767 = vpop.f32.mrb[0].mxu0
      %2768 = vdwg.mxu0
      %2769 = vmatprep.subr.bf16.mxu0 %v1364
      %2770 = vmatpush1.bf16.msra.mxu0 %v1361
      %2771 = vmatprep.subr.bf16.mxu0 0
      %2772 = vmatpush1.bf16.msra.mxu0 0
      %2773 = vmatprep.subr.bf16.mxu0 0
      %2774 = vmatpush1.bf16.msra.mxu0 0
      %2775 = vmatprep.subr.bf16.mxu0 0
      %2776 = vmatpush1.bf16.msra.mxu0 0
      %2777 = vmatprep.subr.bf16.mxu0 0
      %2778 = vmatpush1.bf16.msra.mxu0 0
      %2779 = vmatprep.subr.bf16.mxu0 0
      %2780 = vmatpush1.bf16.msra.mxu0 0
      %2781 = vmatprep.subr.bf16.mxu0 0
      %2782 = vmatpush1.bf16.msra.mxu0 0
      %2783 = vmatprep.subr.bf16.mxu0 0
      %2784 = vmatpush1.bf16.msra.mxu0 0
      %2785 = vmatprep.subr.bf16.mxu0 0
      %2786 = vmatpush1.bf16.msra.mxu0 0
      %2787 = vmatprep.subr.bf16.mxu0 0
      %2788 = vmatpush1.bf16.msra.mxu0 0
      %2789 = vmatprep.subr.bf16.mxu0 0
      %2790 = vmatpush1.bf16.msra.mxu0 0
      %2791 = vmatprep.subr.bf16.mxu0 0
      %2792 = vmatpush1.bf16.msra.mxu0 0
      %2793 = vmatprep.subr.bf16.mxu0 0
      %2794 = vmatpush1.bf16.msra.mxu0 0
      %2795 = vmatprep.subr.bf16.mxu0 0
      %2796 = vmatpush1.bf16.msra.mxu0 0
      %2797 = vmatprep.subr.bf16.mxu0 0
      %2798 = vmatpush1.bf16.msra.mxu0 0
      %2799 = vmatprep.subr.bf16.mxu0 0
      %2800 = vmatpush1.bf16.msra.mxu0 0
      %2801 = vmatprep.mubr.bf16.mxu0 0
      %2802 = vmatmul.mubr.bf16.gmra.mrb[0].mxu0 %v2685
      %v2803 = vpop.f32.mrb[0].mxu0
      %v2804 = vadd.f32 %v2682, %v2803
      %v2805 = vpop.f32.mrb[0].mxu0
      %v2806 = vadd.f32 %v2682, %v2805
      %v2807 = vpop.f32.mrb[0].mxu0
      %v2808 = vpop.f32.mrb[0].mxu0
      %2809 = vdwg.mxu0
      %2810 = vmatprep.subr.bf16.mxu0 %v1370
      %2811 = vmatpush1.bf16.msra.mxu0 %v1367
      %2812 = vmatprep.subr.bf16.mxu0 0
      %2813 = vmatpush1.bf16.msra.mxu0 0
      %2814 = vmatprep.subr.bf16.mxu0 0
      %2815 = vmatpush1.bf16.msra.mxu0 0
      %2816 = vmatprep.subr.bf16.mxu0 0
      %2817 = vmatpush1.bf16.msra.mxu0 0
      %2818 = vmatprep.subr.bf16.mxu0 0
      %2819 = vmatpush1.bf16.msra.mxu0 0
      %2820 = vmatprep.subr.bf16.mxu0 0
      %2821 = vmatpush1.bf16.msra.mxu0 0
      %2822 = vmatprep.subr.bf16.mxu0 0
      %2823 = vmatpush1.bf16.msra.mxu0 0
      %2824 = vmatprep.subr.bf16.mxu0 0
      %2825 = vmatpush1.bf16.msra.mxu0 0
      %2826 = vmatprep.subr.bf16.mxu0 0
      %2827 = vmatpush1.bf16.msra.mxu0 0
      %2828 = vmatprep.subr.bf16.mxu0 0
      %2829 = vmatpush1.bf16.msra.mxu0 0
      %2830 = vmatprep.subr.bf16.mxu0 0
      %2831 = vmatpush1.bf16.msra.mxu0 0
      %2832 = vmatprep.subr.bf16.mxu0 0
      %2833 = vmatpush1.bf16.msra.mxu0 0
      %2834 = vmatprep.subr.bf16.mxu0 0
      %2835 = vmatpush1.bf16.msra.mxu0 0
      %2836 = vmatprep.subr.bf16.mxu0 0
      %2837 = vmatpush1.bf16.msra.mxu0 0
      %2838 = vmatprep.subr.bf16.mxu0 0
      %2839 = vmatpush1.bf16.msra.mxu0 0
      %2840 = vmatprep.subr.bf16.mxu0 0
      %2841 = vmatpush1.bf16.msra.mxu0 0
      %2842 = vmatprep.mubr.bf16.mxu0 0
      %2843 = vmatmul.mubr.bf16.gmra.mrb[0].mxu0 %v2685
      %v2844 = vpop.f32.mrb[0].mxu0
      %v2845 = vadd.f32 %v2682, %v2844
      %v2846 = vpop.f32.mrb[0].mxu0
      %v2847 = vadd.f32 %v2682, %v2846
      %v2848 = vpop.f32.mrb[0].mxu0
      %v2849 = vpop.f32.mrb[0].mxu0
      %2850 = vdwg.mxu0
      %v2851 = vsel %vm1347, %v2722, 0.0
      %v2852 = vsel %vm1347, %v2724, 0.0
      %v2853 = vadd.f32 %v2851, %v2852
      %v2854 = vsel %vm1347, %v2763, 0.0
      %v2855 = vadd.f32 %v2853, %v2854
      %v2856 = vsel %vm1347, %v2765, 0.0
      %v2857 = vadd.f32 %v2855, %v2856
      %v2858 = vsel %vm1347, %v2804, 0.0
      %v2859 = vadd.f32 %v2857, %v2858
      %v2860 = vsel %vm1347, %v2806, 0.0
      %v2861 = vadd.f32 %v2859, %v2860
      %v2862 = vsel %vm1347, %v2845, 0.0
      %v2863 = vadd.f32 %v2861, %v2862
      %v2864 = vsel %vm1347, %v2847, 0.0
      %v2865 = vadd.f32 %v2863, %v2864
      %2866 = vadd.xlane.f32.xlu0 %v2865
      %v2867 = vpop.xlane.xlu0 %2866
      %v2868 = vmul.f32 %v2722, %v2722
      %v2869 = vmul.f32 %v2724, %v2724
      %v2870 = vmul.f32 %v2763, %v2763
      %v2871 = vmul.f32 %v2765, %v2765
      %v2872 = vmul.f32 %v2804, %v2804
      %v2873 = vmul.f32 %v2806, %v2806
      %v2874 = vmul.f32 %v2845, %v2845
      %v2875 = vmul.f32 %v2847, %v2847
      %v2876 = vsel %vm1347, %v2868, 0.0
      %v2877 = vsel %vm1347, %v2869, 0.0
      %v2878 = vadd.f32 %v2876, %v2877
      %v2879 = vsel %vm1347, %v2870, 0.0
      %v2880 = vadd.f32 %v2878, %v2879
      %v2881 = vsel %vm1347, %v2871, 0.0
      %v2882 = vadd.f32 %v2880, %v2881
      %v2883 = vsel %vm1347, %v2872, 0.0
      %v2884 = vadd.f32 %v2882, %v2883
      %v2885 = vsel %vm1347, %v2873, 0.0
      %v2886 = vadd.f32 %v2884, %v2885
      %v2887 = vsel %vm1347, %v2874, 0.0
      %v2888 = vadd.f32 %v2886, %v2887
      %v2889 = vsel %vm1347, %v2875, 0.0
      %v2890 = vadd.f32 %v2888, %v2889
      %2891 = vadd.xlane.f32.xlu0 %v2890
      %v2892 = vpop.xlane.xlu0 %2891
      %v2893 = vmul.f32 %v2867, 0.0009765625
      %v2894 = vmul.f32 %v2892, 0.0009765625
      %v2895 = vmul.f32 %v2893, %v2893
      %v2896 = vsub.f32 %v2894, %v2895
      %v2897 = vmax.f32 %v2896, 0.0
      %v2898 = vsub.f32 %v2722, %v2893
      %v2899 = vsub.f32 %v2724, %v2893
      %v2900 = vsub.f32 %v2763, %v2893
      %v2901 = vsub.f32 %v2765, %v2893
      %v2902 = vsub.f32 %v2804, %v2893
      %v2903 = vsub.f32 %v2806, %v2893
      %v2904 = vsub.f32 %v2845, %v2893
      %v2905 = vsub.f32 %v2847, %v2893
      %v2906 = vadd.f32 %v2897, 1e-05
      %v2907 = vrsqrt.pop %v2906
      %v2908 = vmul.f32 %v2898, %v2907
      %v2909 = vmul.f32 %v2899, %v2907
      %v2910 = vmul.f32 %v2900, %v2907
      %v2911 = vmul.f32 %v2901, %v2907
      %v2912 = vmul.f32 %v2902, %v2907
      %v2913 = vmul.f32 %v2903, %v2907
      %v2914 = vmul.f32 %v2904, %v2907
      %v2915 = vmul.f32 %v2905, %v2907
      %v2916 = vmax.f32 %v2908, 0.0
      %v2917 = vmax.f32 %v2909, 0.0
      %v2918 = vmax.f32 %v2910, 0.0
      %v2919 = vmax.f32 %v2911, 0.0
      %v2920 = vmax.f32 %v2912, 0.0
      %v2921 = vmax.f32 %v2913, 0.0
      %v2922 = vmax.f32 %v2914, 0.0
      %v2923 = vmax.f32 %v2915, 0.0
      %v2924 = vadd.f32 %v2669, %v2916
      %v2925 = vadd.f32 %v2670, %v2917
      %v2926 = vadd.f32 %v2671, %v2918
      %v2927 = vadd.f32 %v2672, %v2919
      %v2928 = vadd.f32 %v2673, %v2920
      %v2929 = vadd.f32 %v2674, %v2921
      %v2930 = vadd.f32 %v2675, %v2922
      %v2931 = vadd.f32 %v2676, %v2923
      %v2940 = vcombine.low %v2924, %v2925
      %v2941 = vcombine.low %v2926, %v2927
      %v2942 = vcombine.low %v2928, %v2929
      %v2943 = vcombine.low %v2930, %v2931
      %2948 = vst [vmem:[%s386] sm:$0xff] %v2940
      %2949 = vst [vmem:[%s386 + $0x8] sm:$0xff] %v2941
      %2950 = vst [vmem:[%s386 + $0x10] sm:$0xff] %v2942
      %2951 = vst [vmem:[%s386 + $0x18] sm:$0xff] %v2943
      %p2952 = scmp.lt.s32.totalorder %s22, 1
      %s2953 = scalar_select %p2952, %s22, 1
      %s2954 = smul.addr %s2953, 8
      %s2955 = smul.addr %s2954, 4
      %s2956 = scalar_lea.vmem %s11, %s2955
      // Predicated region
      $region65: #{up_forward.1} parent=63 // pred_check
        %p2957 = pneg %p276
      $region66: #{up_forward.1} parent=63 // pred_check_branch
        %2959 = sbr.rel (%p2957) target = $region68
      $region67: #{up_forward.1} parent=63 // pred_region
        _
      $region68: #{up_forward.1} parent=63 // pred_fallthru
        _
    $region64: #{up_forward.1} parent=5 // pred_fallthru
      _
    %p2960 = scmp.le.s32.totalorder 2, %s17
    // Predicated region
    $region69: #{up_forward.1} parent=5 // pred_check
      %p2961 = pneg %p2960
    $region70: #{up_forward.1} parent=5 // pred_check_branch
      %2963 = sbr.rel (%p2961) target = $region72
    $region71: #{up_forward.1} parent=5 // pred_region
      %s2964 = ssub.s32 %s17, 2
      // Predicated region
      $region73: #{up_forward.1} parent=71 // pred_check
        %p2965 = pneg %p282
      $region74: #{up_forward.1} parent=71 // pred_check_branch
        %2967 = sbr.rel (%p2965) target = $region76
      $region75: #{up_forward.1} parent=71 // pred_region
        %p2968 = scmp.lt.s32.totalorder %s23, 1
        %s2969 = scalar_select %p2968, %s23, 1
        %s2970 = smul.addr %s2969, 8
        %s2971 = smul.addr %s2970, 4
        %s2972 = scalar_lea.vmem %s11, %s2971
      $region76: #{up_forward.1} parent=71 // pred_fallthru
        _
    $region72: #{up_forward.1} parent=5 // pred_fallthru
      _
  $region6: #{up_forward.1} parent=0 // loop_footer
    %s21 = sadd.s32 1, %s17
  $region7: #{up_forward.1} parent=0 // loop_footer_branch
    %16 = sbr.rel target = $region3
  $region8: #{up_forward.1} parent=0 // loop_exit
    _

</llo_original>
